<compile_context>
chip_gen: v7x
topology: tpu7x:2x2x1
jax: 0.10.0
libtpu: 0.0.40
codegen_flags: <defaults>
</compile_context>

<pallas_src>
import functools

import jax
import jax.numpy as jnp
from jax import lax
from jax.experimental import pallas as pl
from jax.experimental.pallas import tpu as pltpu


# ----------------------------------------------------------------------------
# small helpers
# ----------------------------------------------------------------------------
def _rup(x, m):
    return (x + m - 1) // m * m


def _pad_last(a, n):
    pad = n - a.shape[-1]
    if pad == 0:
        return a
    return jnp.pad(a, [(0, 0)] * (a.ndim - 1) + [(0, pad)])


def _pad2(a, r, c):
    return jnp.pad(a, ((0, r - a.shape[0]), (0, c - a.shape[1])))


def _fold_bn(bn, eps=1e-5):
    scale = bn["gamma"] / jnp.sqrt(bn["var"] + eps)
    bias = bn["beta"] - bn["mean"] * scale
    return scale, bias


def _vmem_budget():
    """Per-chip VMEM sizing: (per-step footprint budget, vmem_limit_bytes)."""
    try:
        cap = int(pltpu.get_tpu_info().vmem_capacity_bytes)
    except Exception:  # pragma: no cover - conservative fallback
        cap = 64 * 1024 * 1024                     # v7x-sized (64 MiB per TC)
    if cap >= 100 * 1024 * 1024:                   # v5e / v6e: 128 MiB physical
        return 56 * 1024 * 1024, 100 * 1024 * 1024
    return 22 * 1024 * 1024, 40 * 1024 * 1024      # v7x: 64 MiB physical


def _pick_gb(nd, H, W, dil, cp, c4p, budget):
    """Largest divisor of nd whose per-step VMEM footprint fits `budget`,
    while keeping >= 2 grid steps (needed for DMA/compute overlap and so the
    'parallel' axis can actually use both v7x TensorCores)."""
    hp, wp = H + 2 * dil, W + 2 * dil

    def fits(gb):
        m = gb * H * W
        io = 2 * 2 * m * c4p * 2                          # x + out, 2x-buffered bf16
        scratch = gb * hp * wp * cp * 2 + m * 9 * cp * 2  # halo + im2col slab
        weights = 2 * (c4p * cp + 9 * cp * cp + cp * c4p) * 2
        # conservative in-kernel temporaries: y1/acc f32, h2 bf16, o3/out/res f32
        temps = m * (2 * cp * 4 + cp * 2 + 3 * c4p * 4)
        return io + scratch + weights + temps <= budget

    best = 1
    for gb in range(1, nd + 1):
        if nd % gb:
            continue
        if nd >= 2 and nd // gb < 2:      # keep at least 2 grid steps
            continue
        if fits(gb):
            best = gb
    return best


# ----------------------------------------------------------------------------
# Fused kernel:
#   conv1(1x1x1)+bn1+relu -> VMEM halo scratch
#   conv2(1,3,3) as single big-K matmul over an in-VMEM im2col slab +bn2+relu
#   conv3(1x1x1)+bn3 + identity residual + relu -> bf16 output
# ----------------------------------------------------------------------------
def _bottleneck_kernel(x_ref, w1_ref, s1_ref, b1_ref, w2_ref, s2_ref, b2_ref,
                       w3_ref, s3_ref, b3_ref, o_ref, h1_ref, slab_ref,
                       *, H, W, dil):
    gb = x_ref.shape[0]
    c4p = x_ref.shape[3]
    cp = h1_ref.shape[3]
    m = gb * H * W

    xv = x_ref[...]                                 # read once: conv1 + residual

    # Zero only the dil-wide halo strips.  Re-done every step: the scratch
    # persists across grid steps and is per-core under megacore sharding.
    zrow = jnp.zeros((gb, dil, h1_ref.shape[2], cp), h1_ref.dtype)
    zcol = jnp.zeros((gb, H, dil, cp), h1_ref.dtype)
    h1_ref[:, :dil, :, :] = zrow
    h1_ref[:, dil + H:, :, :] = zrow
    h1_ref[:, dil:dil + H, :dil, :] = zcol
    h1_ref[:, dil:dil + H, dil + W:, :] = zcol

    # conv1 (1x1x1) + bn1 + relu -> bf16 interior of the halo scratch.
    y1 = jnp.dot(xv.reshape(m, c4p), w1_ref[...],
                 preferred_element_type=jnp.float32)
    y1 = jnp.maximum(y1 * s1_ref[...] + b1_ref[...], 0.0)
    h1_ref[:, dil:dil + H, dil:dil + W, :] = (
        y1.reshape(gb, H, W, cp).astype(h1_ref.dtype))

    # conv2 (1,3,3): lay the 9 shifted taps side by side (lane-aligned column
    # blocks) in an in-VMEM bf16 im2col slab and run ONE big-K matmul
    # (K = 9*cp) so accumulation happens inside the MXU.
    for kh in range(3):
        for kw in range(3):
            t = kh * 3 + kw
            tap = h1_ref[:, kh * dil:kh * dil + H, kw * dil:kw * dil + W, :]
            slab_ref[:, t * cp:(t + 1) * cp] = tap.reshape(m, cp)
    acc = jnp.dot(slab_ref[...], w2_ref[...],
                  preferred_element_type=jnp.float32)           # (m, cp) f32

    # bn2 + relu (f32) -> bf16, conv3 (1x1x1), bn3 + identity residual + relu.
    h2 = jnp.maximum(acc * s2_ref[...] + b2_ref[...], 0.0).astype(jnp.bfloat16)
    o3 = jnp.dot(h2, w3_ref[...], preferred_element_type=jnp.float32)
    out = o3 * s3_ref[...] + b3_ref[...] + xv.reshape(m, c4p).astype(jnp.float32)
    o_ref[...] = jnp.maximum(out, 0.0).reshape(gb, H, W, c4p).astype(o_ref.dtype)


# ----------------------------------------------------------------------------
# Bottleneck forward (stride=1, identity residual, eval-mode BatchNorm)
# ----------------------------------------------------------------------------
def bottleneck_forward(x_ncdhw, params, stride=1, dilation=(1, 1)):
    if stride != 1:
        # TODO(synk): stride>1 / downsample path not implemented (the PyTorch
        # module only uses stride>1 together with a downsample layer).
        raise NotImplementedError("only stride=1 / identity residual")
    dil = int(dilation[1])

    x = jnp.transpose(x_ncdhw, (0, 2, 3, 4, 1))                 # NCDHW -> NDHWC
    n, d_, H, W, cin = x.shape
    nd = n * d_
    planes = params["w1"].shape[0]
    c4 = 4 * planes
    assert cin == c4, "identity residual requires inplanes == 4*planes"

    cp = _rup(planes, 128)
    c4p = _rup(c4, 128)
    hp, wp = H + 2 * dil, W + 2 * dil

    budget, vmem_limit = _vmem_budget()
    gb = _pick_gb(nd, H, W, dil, cp, c4p, budget)
    grid = (nd // gb,)

    # TODO(synk): the NCDHW->NDHWC transpose + channel pad + bf16 cast are left
    # to XLA (they fuse into a single copy); ideally the caller would provide
    # NDHWC bf16 activations directly.
    # TODO(synk): for planes not a multiple of 128 the lane padding carries
    # zero FLOPs/bytes; packing spatial width into the lane dim would remove
    # it but breaks the clean channel-contraction matmuls.
    xp = _pad_last(x.reshape(nd, H, W, cin), c4p).astype(jnp.bfloat16)

    # Fold eval-mode BatchNorm into per-channel scale/bias; pad with zeros so
    # padded channels stay exactly 0 through every stage.
    s1, b1 = _fold_bn(params["bn1"])
    s2, b2 = _fold_bn(params["bn2"])
    s3, b3 = _fold_bn(params["bn3"])
    w1 = _pad2(params["w1"].reshape(planes, cin).T, c4p, cp).astype(jnp.bfloat16)
    w2 = jnp.transpose(params["w2"][:, :, 0], (2, 3, 1, 0)).reshape(9, planes, planes)
    w2 = jnp.pad(w2, ((0, 0), (0, cp - planes), (0, cp - planes)))
    w2 = w2.reshape(9 * cp, cp).astype(jnp.bfloat16)            # big-K packed
    w3 = _pad2(params["w3"].reshape(c4, planes).T, cp, c4p).astype(jnp.bfloat16)
    s1p = _pad_last(s1.reshape(1, planes), cp).astype(jnp.float32)
    b1p = _pad_last(b1.reshape(1, planes), cp).astype(jnp.float32)
    s2p = _pad_last(s2.reshape(1, planes), cp).astype(jnp.float32)
    b2p = _pad_last(b2.reshape(1, planes), cp).astype(jnp.float32)
    s3p = _pad_last(s3.reshape(1, c4), c4p).astype(jnp.float32)
    b3p = _pad_last(b3.reshape(1, c4), c4p).astype(jnp.float32)

    m_rows = nd * H * W
    weight_bytes = (c4p * cp + 9 * cp * cp + cp * c4p) * 2

    out = pl.pallas_call(
        functools.partial(_bottleneck_kernel, H=H, W=W, dil=dil),
        out_shape=jax.ShapeDtypeStruct((nd, H, W, c4p), jnp.bfloat16),
        grid=grid,
        in_specs=[
            pl.BlockSpec((gb, H, W, c4p), lambda i: (i, 0, 0, 0)),   # x / residual
            pl.BlockSpec((c4p, cp), lambda i: (0, 0)),               # w1
            pl.BlockSpec((1, cp), lambda i: (0, 0)),                 # s1
            pl.BlockSpec((1, cp), lambda i: (0, 0)),                 # b1
            pl.BlockSpec((9 * cp, cp), lambda i: (0, 0)),            # w2 (big-K)
            pl.BlockSpec((1, cp), lambda i: (0, 0)),                 # s2
            pl.BlockSpec((1, cp), lambda i: (0, 0)),                 # b2
            pl.BlockSpec((cp, c4p), lambda i: (0, 0)),               # w3
            pl.BlockSpec((1, c4p), lambda i: (0, 0)),                # s3
            pl.BlockSpec((1, c4p), lambda i: (0, 0)),                # b3
        ],
        out_specs=pl.BlockSpec((gb, H, W, c4p), lambda i: (i, 0, 0, 0)),
        scratch_shapes=[
            pltpu.VMEM((gb, hp, wp, cp), jnp.bfloat16),      # conv1 halo scratch
            pltpu.VMEM((gb * H * W, 9 * cp), jnp.bfloat16),  # conv2 im2col slab
        ],
        compiler_params=pltpu.CompilerParams(
            dimension_semantics=("parallel",),
            vmem_limit_bytes=vmem_limit),
        cost_estimate=pl.CostEstimate(
            flops=2 * m_rows * (c4p * cp + 9 * cp * cp + cp * c4p),
            transcendentals=0,
            bytes_accessed=(m_rows * c4p * 2      # x in (also the residual)
                            + m_rows * c4p * 2    # bf16 out
                            + weight_bytes)),
    )(xp, w1, s1p, b1p, w2, s2p, b2p, w3, s3p, b3p)

    out = out[..., :c4].reshape(n, d_, H, W, c4)
    return jnp.transpose(out, (0, 4, 1, 2, 3)).astype(x_ncdhw.dtype)   # NCDHW


# ----------------------------------------------------------------------------
# Pure-JAX f32 reference (lax.conv_general_dilated) for validation
# ----------------------------------------------------------------------------
def _ref_forward(x, p, stride=1, dilation=(1, 1), eps=1e-5):
    dn = ("NCDHW", "OIDHW", "NCDHW")

    def bn(y, b):
        shp = (1, -1, 1, 1, 1)
        return ((y - b["mean"].reshape(shp))
                / jnp.sqrt(b["var"].reshape(shp) + eps)
                * b["gamma"].reshape(shp) + b["beta"].reshape(shp))

    out = lax.conv_general_dilated(x, p["w1"], (1, 1, 1), "VALID",
                                   dimension_numbers=dn)
    out = jax.nn.relu(bn(out, p["bn1"]))
    d = dilation[1]
    out = lax.conv_general_dilated(out, p["w2"], (1, stride, stride),
                                   [(0, 0), (d, d), (d, d)],
                                   rhs_dilation=(1, d, d),
                                   dimension_numbers=dn)
    out = jax.nn.relu(bn(out, p["bn2"]))
    out = lax.conv_general_dilated(out, p["w3"], (1, 1, 1), "VALID",
                                   dimension_numbers=dn)
    out = bn(out, p["bn3"])
    return jax.nn.relu(out + x)


# ----------------------------------------------------------------------------
# Main
# ----------------------------------------------------------------------------
if __name__ == "__main__":
    # inplanes == planes * expansion so the identity residual applies.
    batch, inplanes, planes = 2, 16, 4
    depth, hw = 4, 8
    stride, dilation = 1, (1, 1)

    key = jax.random.PRNGKey(0)
    ks = jax.random.split(key, 16)

    def bn_params(k, c):
        k1, k2, k3, k4 = jax.random.split(k, 4)
        return {
            "gamma": 1.0 + 0.1 * jax.random.normal(k1, (c,), jnp.float32),
            "beta": 0.1 * jax.random.normal(k2, (c,), jnp.float32),
            "mean": 0.1 * jax.random.normal(k3, (c,), jnp.float32),
            "var": 0.5 + jnp.abs(jax.random.normal(k4, (c,), jnp.float32)) * 0.1,
        }

    params = {
        "w1": 0.1 * jax.random.normal(ks[0], (planes, inplanes, 1, 1, 1), jnp.float32),
        "bn1": bn_params(ks[1], planes),
        "w2": 0.1 * jax.random.normal(ks[2], (planes, planes, 1, 3, 3), jnp.float32),
        "bn2": bn_params(ks[3], planes),
        "w3": 0.1 * jax.random.normal(ks[4], (planes * 4, planes, 1, 1, 1), jnp.float32),
        "bn3": bn_params(ks[5], planes * 4),
    }

    x = jax.random.normal(ks[6], (batch, inplanes, depth, hw, hw), jnp.float32)

    fwd = jax.jit(functools.partial(bottleneck_forward,
                                    stride=stride, dilation=dilation))
    out = jax.block_until_ready(fwd(x, params))

    ref = _ref_forward(x, params, stride=stride, dilation=dilation)
    assert out.shape == ref.shape == (batch, inplanes, depth, hw, hw)
    err = float(jnp.max(jnp.abs(out - ref)))
    # bf16 MXU operands, bf16 intermediates AND bf16 output vs f32 reference.
    assert jnp.allclose(out, ref, rtol=5e-2, atol=5e-2), err

    print("KERNEL_OK")
</pallas_src>

<mosaic_0001>
module attributes {stable_mosaic.version = 11 : i64} {
  func.func @_bottleneck_kernel(%arg0: i32, %arg1: memref<4x8x8x128xbf16, #tpu.memory_space<vmem>>, %arg2: memref<128x128xbf16, #tpu.memory_space<vmem>>, %arg3: memref<1x128xf32, #tpu.memory_space<vmem>>, %arg4: memref<1x128xf32, #tpu.memory_space<vmem>>, %arg5: memref<1152x128xbf16, #tpu.memory_space<vmem>>, %arg6: memref<1x128xf32, #tpu.memory_space<vmem>>, %arg7: memref<1x128xf32, #tpu.memory_space<vmem>>, %arg8: memref<128x128xbf16, #tpu.memory_space<vmem>>, %arg9: memref<1x128xf32, #tpu.memory_space<vmem>>, %arg10: memref<1x128xf32, #tpu.memory_space<vmem>>, %arg11: memref<4x8x8x128xbf16, #tpu.memory_space<vmem>>, %arg12: memref<4x10x10x128xbf16, #tpu.memory_space<vmem>>, %arg13: memref<256x1152xbf16, #tpu.memory_space<vmem>>) attributes {dimension_semantics = [#tpu.dimension_semantics<parallel>], iteration_bounds = array<i64: 2>, scalar_prefetch = 0 : i64, scratch_operands = 2 : i64, tpu.core_type = #tpu.core_type<tc>, window_params = [{transform_indices = @transform_0, window_bounds = array<i64: 4, 8, 8, 128>}, {pipeline_mode = #tpu.pipeline_mode<synchronous>, transform_indices = @transform_1, window_bounds = array<i64: 128, 128>}, {pipeline_mode = #tpu.pipeline_mode<synchronous>, transform_indices = @transform_2, window_bounds = array<i64: 1, 128>}, {pipeline_mode = #tpu.pipeline_mode<synchronous>, transform_indices = @transform_3, window_bounds = array<i64: 1, 128>}, {pipeline_mode = #tpu.pipeline_mode<synchronous>, transform_indices = @transform_4, window_bounds = array<i64: 1152, 128>}, {pipeline_mode = #tpu.pipeline_mode<synchronous>, transform_indices = @transform_5, window_bounds = array<i64: 1, 128>}, {pipeline_mode = #tpu.pipeline_mode<synchronous>, transform_indices = @transform_6, window_bounds = array<i64: 1, 128>}, {pipeline_mode = #tpu.pipeline_mode<synchronous>, transform_indices = @transform_7, window_bounds = array<i64: 128, 128>}, {pipeline_mode = #tpu.pipeline_mode<synchronous>, transform_indices = @transform_8, window_bounds = array<i64: 1, 128>}, {pipeline_mode = #tpu.pipeline_mode<synchronous>, transform_indices = @transform_9, window_bounds = array<i64: 1, 128>}, {transform_indices = @transform_10, window_bounds = array<i64: 4, 8, 8, 128>}]} {
    %c0 = arith.constant 0 : index
    %c0_0 = arith.constant 0 : index
    %c0_1 = arith.constant 0 : index
    %c0_2 = arith.constant 0 : index
    %0 = vector.load %arg1[%c0, %c0_0, %c0_1, %c0_2] : memref<4x8x8x128xbf16, #tpu.memory_space<vmem>>, vector<4x8x8x128xbf16>
    %cst = arith.constant 0.000000e+00 : bf16
    %1 = vector.broadcast %cst : bf16 to vector<4x1x10x128xbf16>
    %cst_3 = arith.constant 0.000000e+00 : bf16
    %2 = vector.broadcast %cst_3 : bf16 to vector<4x8x1x128xbf16>
    %c0_4 = arith.constant 0 : index
    %c0_5 = arith.constant 0 : index
    %c0_6 = arith.constant 0 : index
    %c0_7 = arith.constant 0 : index
    %3 = vector.load %arg12[%c0_4, %c0_5, %c0_6, %c0_7] : memref<4x10x10x128xbf16, #tpu.memory_space<vmem>>, vector<4x1x10x128xbf16>
    tpu.vector_store %arg12[%c0_4, %c0_5, %c0_6, %c0_7], %1 {strides = array<i32>} : memref<4x10x10x128xbf16, #tpu.memory_space<vmem>>, vector<4x1x10x128xbf16>,
    %c0_8 = arith.constant 0 : index
    %c9 = arith.constant 9 : index
    %c0_9 = arith.constant 0 : index
    %c0_10 = arith.constant 0 : index
    %4 = vector.load %arg12[%c0_8, %c9, %c0_9, %c0_10] : memref<4x10x10x128xbf16, #tpu.memory_space<vmem>>, vector<4x1x10x128xbf16>
    tpu.vector_store %arg12[%c0_8, %c9, %c0_9, %c0_10], %1 {strides = array<i32>} : memref<4x10x10x128xbf16, #tpu.memory_space<vmem>>, vector<4x1x10x128xbf16>,
    %c0_11 = arith.constant 0 : index
    %c1 = arith.constant 1 : index
    %c0_12 = arith.constant 0 : index
    %c0_13 = arith.constant 0 : index
    %5 = vector.load %arg12[%c0_11, %c1, %c0_12, %c0_13] : memref<4x10x10x128xbf16, #tpu.memory_space<vmem>>, vector<4x8x1x128xbf16>
    tpu.vector_store %arg12[%c0_11, %c1, %c0_12, %c0_13], %2 {strides = array<i32>} : memref<4x10x10x128xbf16, #tpu.memory_space<vmem>>, vector<4x8x1x128xbf16>,
    %c0_14 = arith.constant 0 : index
    %c1_15 = arith.constant 1 : index
    %c9_16 = arith.constant 9 : index
    %c0_17 = arith.constant 0 : index
    %6 = vector.load %arg12[%c0_14, %c1_15, %c9_16, %c0_17] : memref<4x10x10x128xbf16, #tpu.memory_space<vmem>>, vector<4x8x1x128xbf16>
    tpu.vector_store %arg12[%c0_14, %c1_15, %c9_16, %c0_17], %2 {strides = array<i32>} : memref<4x10x10x128xbf16, #tpu.memory_space<vmem>>, vector<4x8x1x128xbf16>,
    %7 = vector.shape_cast %0 : vector<4x8x8x128xbf16> to vector<256x128xbf16>
    %c0_18 = arith.constant 0 : index
    %c0_19 = arith.constant 0 : index
    %8 = vector.load %arg2[%c0_18, %c0_19] : memref<128x128xbf16, #tpu.memory_space<vmem>>, vector<128x128xbf16>
    %cst_20 = arith.constant dense<0.000000e+00> : vector<256x128xf32>
    %9 = tpu.matmul %7, %8, %cst_20 {dimension_numbers = #tpu.dot_dimension_numbers<[1], [0], [0], [1], [0, 0, 1, 1], [], []>} : vector<256x128xbf16>, vector<128x128xbf16>, vector<256x128xf32> -> vector<256x128xf32>
    %c0_21 = arith.constant 0 : index
    %c0_22 = arith.constant 0 : index
    %10 = vector.load %arg3[%c0_21, %c0_22] : memref<1x128xf32, #tpu.memory_space<vmem>>, vector<1x128xf32>
    %11 = vector.broadcast %10 : vector<1x128xf32> to vector<256x128xf32>
    %12 = arith.mulf %9, %11 : vector<256x128xf32>
    %c0_23 = arith.constant 0 : index
    %c0_24 = arith.constant 0 : index
    %13 = vector.load %arg4[%c0_23, %c0_24] : memref<1x128xf32, #tpu.memory_space<vmem>>, vector<1x128xf32>
    %14 = vector.broadcast %13 : vector<1x128xf32> to vector<256x128xf32>
    %15 = arith.addf %12, %14 : vector<256x128xf32>
    %cst_25 = arith.constant 0.000000e+00 : f32
    %16 = vector.broadcast %cst_25 : f32 to vector<256x128xf32>
    %17 = arith.maximumf %15, %16 : vector<256x128xf32>
    %18 = vector.shape_cast %17 : vector<256x128xf32> to vector<4x8x8x128xf32>
    %19 = arith.truncf %18 : vector<4x8x8x128xf32> to vector<4x8x8x128xbf16>
    %c0_26 = arith.constant 0 : index
    %c1_27 = arith.constant 1 : index
    %c1_28 = arith.constant 1 : index
    %c0_29 = arith.constant 0 : index
    %20 = vector.load %arg12[%c0_26, %c1_27, %c1_28, %c0_29] : memref<4x10x10x128xbf16, #tpu.memory_space<vmem>>, vector<4x8x8x128xbf16>
    tpu.vector_store %arg12[%c0_26, %c1_27, %c1_28, %c0_29], %19 {strides = array<i32>} : memref<4x10x10x128xbf16, #tpu.memory_space<vmem>>, vector<4x8x8x128xbf16>,
    %c0_30 = arith.constant 0 : index
    %c0_31 = arith.constant 0 : index
    %c0_32 = arith.constant 0 : index
    %c0_33 = arith.constant 0 : index
    %21 = vector.load %arg12[%c0_30, %c0_31, %c0_32, %c0_33] : memref<4x10x10x128xbf16, #tpu.memory_space<vmem>>, vector<4x8x8x128xbf16>
    %22 = vector.shape_cast %21 : vector<4x8x8x128xbf16> to vector<256x128xbf16>
    %c0_34 = arith.constant 0 : index
    %c0_35 = arith.constant 0 : index
    %23 = vector.load %arg13[%c0_34, %c0_35] : memref<256x1152xbf16, #tpu.memory_space<vmem>>, vector<256x128xbf16>
    tpu.vector_store %arg13[%c0_34, %c0_35], %22 {strides = array<i32>} : memref<256x1152xbf16, #tpu.memory_space<vmem>>, vector<256x128xbf16>,
    %c0_36 = arith.constant 0 : index
    %c0_37 = arith.constant 0 : index
    %c1_38 = arith.constant 1 : index
    %c0_39 = arith.constant 0 : index
    %24 = vector.load %arg12[%c0_36, %c0_37, %c1_38, %c0_39] : memref<4x10x10x128xbf16, #tpu.memory_space<vmem>>, vector<4x8x8x128xbf16>
    %25 = vector.shape_cast %24 : vector<4x8x8x128xbf16> to vector<256x128xbf16>
    %c0_40 = arith.constant 0 : index
    %c128 = arith.constant 128 : index
    %26 = vector.load %arg13[%c0_40, %c128] : memref<256x1152xbf16, #tpu.memory_space<vmem>>, vector<256x128xbf16>
    tpu.vector_store %arg13[%c0_40, %c128], %25 {strides = array<i32>} : memref<256x1152xbf16, #tpu.memory_space<vmem>>, vector<256x128xbf16>,
    %c0_41 = arith.constant 0 : index
    %c0_42 = arith.constant 0 : index
    %c2 = arith.constant 2 : index
    %c0_43 = arith.constant 0 : index
    %27 = vector.load %arg12[%c0_41, %c0_42, %c2, %c0_43] : memref<4x10x10x128xbf16, #tpu.memory_space<vmem>>, vector<4x8x8x128xbf16>
    %28 = vector.shape_cast %27 : vector<4x8x8x128xbf16> to vector<256x128xbf16>
    %c0_44 = arith.constant 0 : index
    %c256 = arith.constant 256 : index
    %29 = vector.load %arg13[%c0_44, %c256] : memref<256x1152xbf16, #tpu.memory_space<vmem>>, vector<256x128xbf16>
    tpu.vector_store %arg13[%c0_44, %c256], %28 {strides = array<i32>} : memref<256x1152xbf16, #tpu.memory_space<vmem>>, vector<256x128xbf16>,
    %c0_45 = arith.constant 0 : index
    %c1_46 = arith.constant 1 : index
    %c0_47 = arith.constant 0 : index
    %c0_48 = arith.constant 0 : index
    %30 = vector.load %arg12[%c0_45, %c1_46, %c0_47, %c0_48] : memref<4x10x10x128xbf16, #tpu.memory_space<vmem>>, vector<4x8x8x128xbf16>
    %31 = vector.shape_cast %30 : vector<4x8x8x128xbf16> to vector<256x128xbf16>
    %c0_49 = arith.constant 0 : index
    %c384 = arith.constant 384 : index
    %32 = vector.load %arg13[%c0_49, %c384] : memref<256x1152xbf16, #tpu.memory_space<vmem>>, vector<256x128xbf16>
    tpu.vector_store %arg13[%c0_49, %c384], %31 {strides = array<i32>} : memref<256x1152xbf16, #tpu.memory_space<vmem>>, vector<256x128xbf16>,
    %c0_50 = arith.constant 0 : index
    %c1_51 = arith.constant 1 : index
    %c1_52 = arith.constant 1 : index
    %c0_53 = arith.constant 0 : index
    %33 = vector.load %arg12[%c0_50, %c1_51, %c1_52, %c0_53] : memref<4x10x10x128xbf16, #tpu.memory_space<vmem>>, vector<4x8x8x128xbf16>
    %34 = vector.shape_cast %33 : vector<4x8x8x128xbf16> to vector<256x128xbf16>
    %c0_54 = arith.constant 0 : index
    %c512 = arith.constant 512 : index
    %35 = vector.load %arg13[%c0_54, %c512] : memref<256x1152xbf16, #tpu.memory_space<vmem>>, vector<256x128xbf16>
    tpu.vector_store %arg13[%c0_54, %c512], %34 {strides = array<i32>} : memref<256x1152xbf16, #tpu.memory_space<vmem>>, vector<256x128xbf16>,
    %c0_55 = arith.constant 0 : index
    %c1_56 = arith.constant 1 : index
    %c2_57 = arith.constant 2 : index
    %c0_58 = arith.constant 0 : index
    %36 = vector.load %arg12[%c0_55, %c1_56, %c2_57, %c0_58] : memref<4x10x10x128xbf16, #tpu.memory_space<vmem>>, vector<4x8x8x128xbf16>
    %37 = vector.shape_cast %36 : vector<4x8x8x128xbf16> to vector<256x128xbf16>
    %c0_59 = arith.constant 0 : index
    %c640 = arith.constant 640 : index
    %38 = vector.load %arg13[%c0_59, %c640] : memref<256x1152xbf16, #tpu.memory_space<vmem>>, vector<256x128xbf16>
    tpu.vector_store %arg13[%c0_59, %c640], %37 {strides = array<i32>} : memref<256x1152xbf16, #tpu.memory_space<vmem>>, vector<256x128xbf16>,
    %c0_60 = arith.constant 0 : index
    %c2_61 = arith.constant 2 : index
    %c0_62 = arith.constant 0 : index
    %c0_63 = arith.constant 0 : index
    %39 = vector.load %arg12[%c0_60, %c2_61, %c0_62, %c0_63] : memref<4x10x10x128xbf16, #tpu.memory_space<vmem>>, vector<4x8x8x128xbf16>
    %40 = vector.shape_cast %39 : vector<4x8x8x128xbf16> to vector<256x128xbf16>
    %c0_64 = arith.constant 0 : index
    %c768 = arith.constant 768 : index
    %41 = vector.load %arg13[%c0_64, %c768] : memref<256x1152xbf16, #tpu.memory_space<vmem>>, vector<256x128xbf16>
    tpu.vector_store %arg13[%c0_64, %c768], %40 {strides = array<i32>} : memref<256x1152xbf16, #tpu.memory_space<vmem>>, vector<256x128xbf16>,
    %c0_65 = arith.constant 0 : index
    %c2_66 = arith.constant 2 : index
    %c1_67 = arith.constant 1 : index
    %c0_68 = arith.constant 0 : index
    %42 = vector.load %arg12[%c0_65, %c2_66, %c1_67, %c0_68] : memref<4x10x10x128xbf16, #tpu.memory_space<vmem>>, vector<4x8x8x128xbf16>
    %43 = vector.shape_cast %42 : vector<4x8x8x128xbf16> to vector<256x128xbf16>
    %c0_69 = arith.constant 0 : index
    %c896 = arith.constant 896 : index
    %44 = vector.load %arg13[%c0_69, %c896] : memref<256x1152xbf16, #tpu.memory_space<vmem>>, vector<256x128xbf16>
    tpu.vector_store %arg13[%c0_69, %c896], %43 {strides = array<i32>} : memref<256x1152xbf16, #tpu.memory_space<vmem>>, vector<256x128xbf16>,
    %c0_70 = arith.constant 0 : index
    %c2_71 = arith.constant 2 : index
    %c2_72 = arith.constant 2 : index
    %c0_73 = arith.constant 0 : index
    %45 = vector.load %arg12[%c0_70, %c2_71, %c2_72, %c0_73] : memref<4x10x10x128xbf16, #tpu.memory_space<vmem>>, vector<4x8x8x128xbf16>
    %46 = vector.shape_cast %45 : vector<4x8x8x128xbf16> to vector<256x128xbf16>
    %c0_74 = arith.constant 0 : index
    %c1024 = arith.constant 1024 : index
    %47 = vector.load %arg13[%c0_74, %c1024] : memref<256x1152xbf16, #tpu.memory_space<vmem>>, vector<256x128xbf16>
    tpu.vector_store %arg13[%c0_74, %c1024], %46 {strides = array<i32>} : memref<256x1152xbf16, #tpu.memory_space<vmem>>, vector<256x128xbf16>,
    %c0_75 = arith.constant 0 : index
    %c0_76 = arith.constant 0 : index
    %48 = vector.load %arg13[%c0_75, %c0_76] : memref<256x1152xbf16, #tpu.memory_space<vmem>>, vector<256x1152xbf16>
    %c0_77 = arith.constant 0 : index
    %c0_78 = arith.constant 0 : index
    %49 = vector.load %arg5[%c0_77, %c0_78] : memref<1152x128xbf16, #tpu.memory_space<vmem>>, vector<1152x128xbf16>
    %cst_79 = arith.constant dense<0.000000e+00> : vector<256x128xf32>
    %50 = tpu.matmul %48, %49, %cst_79 {dimension_numbers = #tpu.dot_dimension_numbers<[1], [0], [0], [1], [0, 0, 1, 1], [], []>} : vector<256x1152xbf16>, vector<1152x128xbf16>, vector<256x128xf32> -> vector<256x128xf32>
    %c0_80 = arith.constant 0 : index
    %c0_81 = arith.constant 0 : index
    %51 = vector.load %arg6[%c0_80, %c0_81] : memref<1x128xf32, #tpu.memory_space<vmem>>, vector<1x128xf32>
    %52 = vector.broadcast %51 : vector<1x128xf32> to vector<256x128xf32>
    %53 = arith.mulf %50, %52 : vector<256x128xf32>
    %c0_82 = arith.constant 0 : index
    %c0_83 = arith.constant 0 : index
    %54 = vector.load %arg7[%c0_82, %c0_83] : memref<1x128xf32, #tpu.memory_space<vmem>>, vector<1x128xf32>
    %55 = vector.broadcast %54 : vector<1x128xf32> to vector<256x128xf32>
    %56 = arith.addf %53, %55 : vector<256x128xf32>
    %cst_84 = arith.constant 0.000000e+00 : f32
    %57 = vector.broadcast %cst_84 : f32 to vector<256x128xf32>
    %58 = arith.maximumf %56, %57 : vector<256x128xf32>
    %59 = arith.truncf %58 : vector<256x128xf32> to vector<256x128xbf16>
    %c0_85 = arith.constant 0 : index
    %c0_86 = arith.constant 0 : index
    %60 = vector.load %arg8[%c0_85, %c0_86] : memref<128x128xbf16, #tpu.memory_space<vmem>>, vector<128x128xbf16>
    %cst_87 = arith.constant dense<0.000000e+00> : vector<256x128xf32>
    %61 = tpu.matmul %59, %60, %cst_87 {dimension_numbers = #tpu.dot_dimension_numbers<[1], [0], [0], [1], [0, 0, 1, 1], [], []>} : vector<256x128xbf16>, vector<128x128xbf16>, vector<256x128xf32> -> vector<256x128xf32>
    %c0_88 = arith.constant 0 : index
    %c0_89 = arith.constant 0 : index
    %62 = vector.load %arg9[%c0_88, %c0_89] : memref<1x128xf32, #tpu.memory_space<vmem>>, vector<1x128xf32>
    %63 = vector.broadcast %62 : vector<1x128xf32> to vector<256x128xf32>
    %64 = arith.mulf %61, %63 : vector<256x128xf32>
    %c0_90 = arith.constant 0 : index
    %c0_91 = arith.constant 0 : index
    %65 = vector.load %arg10[%c0_90, %c0_91] : memref<1x128xf32, #tpu.memory_space<vmem>>, vector<1x128xf32>
    %66 = vector.broadcast %65 : vector<1x128xf32> to vector<256x128xf32>
    %67 = arith.addf %64, %66 : vector<256x128xf32>
    %68 = vector.shape_cast %0 : vector<4x8x8x128xbf16> to vector<256x128xbf16>
    %69 = arith.extf %68 : vector<256x128xbf16> to vector<256x128xf32>
    %70 = arith.addf %67, %69 : vector<256x128xf32>
    %cst_92 = arith.constant 0.000000e+00 : f32
    %71 = vector.broadcast %cst_92 : f32 to vector<256x128xf32>
    %72 = arith.maximumf %70, %71 : vector<256x128xf32>
    %73 = vector.shape_cast %72 : vector<256x128xf32> to vector<4x8x8x128xf32>
    %74 = arith.truncf %73 : vector<4x8x8x128xf32> to vector<4x8x8x128xbf16>
    %c0_93 = arith.constant 0 : index
    %c0_94 = arith.constant 0 : index
    %c0_95 = arith.constant 0 : index
    %c0_96 = arith.constant 0 : index
    %75 = vector.load %arg11[%c0_93, %c0_94, %c0_95, %c0_96] : memref<4x8x8x128xbf16, #tpu.memory_space<vmem>>, vector<4x8x8x128xbf16>
    tpu.vector_store %arg11[%c0_93, %c0_94, %c0_95, %c0_96], %74 {strides = array<i32>} : memref<4x8x8x128xbf16, #tpu.memory_space<vmem>>, vector<4x8x8x128xbf16>,
    return
  }
  func.func @transform_0(%arg0: i32) -> (i32, i32, i32, i32) {
    %c0_i32 = arith.constant 0 : i32
    %c0_i32_0 = arith.constant 0 : i32
    %c0_i32_1 = arith.constant 0 : i32
    %c0_i32_2 = arith.constant 0 : i32
    return %arg0, %c0_i32, %c0_i32_0, %c0_i32_1 : i32, i32, i32, i32
  }
  func.func @transform_1(%arg0: i32) -> (i32, i32) {
    %c0_i32 = arith.constant 0 : i32
    %c0_i32_0 = arith.constant 0 : i32
    %c0_i32_1 = arith.constant 0 : i32
    return %c0_i32, %c0_i32_0 : i32, i32
  }
  func.func @transform_2(%arg0: i32) -> (i32, i32) {
    %c0_i32 = arith.constant 0 : i32
    %c0_i32_0 = arith.constant 0 : i32
    %c0_i32_1 = arith.constant 0 : i32
    return %c0_i32, %c0_i32_0 : i32, i32
  }
  func.func @transform_3(%arg0: i32) -> (i32, i32) {
    %c0_i32 = arith.constant 0 : i32
    %c0_i32_0 = arith.constant 0 : i32
    %c0_i32_1 = arith.constant 0 : i32
    return %c0_i32, %c0_i32_0 : i32, i32
  }
  func.func @transform_4(%arg0: i32) -> (i32, i32) {
    %c0_i32 = arith.constant 0 : i32
    %c0_i32_0 = arith.constant 0 : i32
    %c0_i32_1 = arith.constant 0 : i32
    return %c0_i32, %c0_i32_0 : i32, i32
  }
  func.func @transform_5(%arg0: i32) -> (i32, i32) {
    %c0_i32 = arith.constant 0 : i32
    %c0_i32_0 = arith.constant 0 : i32
    %c0_i32_1 = arith.constant 0 : i32
    return %c0_i32, %c0_i32_0 : i32, i32
  }
  func.func @transform_6(%arg0: i32) -> (i32, i32) {
    %c0_i32 = arith.constant 0 : i32
    %c0_i32_0 = arith.constant 0 : i32
    %c0_i32_1 = arith.constant 0 : i32
    return %c0_i32, %c0_i32_0 : i32, i32
  }
  func.func @transform_7(%arg0: i32) -> (i32, i32) {
    %c0_i32 = arith.constant 0 : i32
    %c0_i32_0 = arith.constant 0 : i32
    %c0_i32_1 = arith.constant 0 : i32
    return %c0_i32, %c0_i32_0 : i32, i32
  }
  func.func @transform_8(%arg0: i32) -> (i32, i32) {
    %c0_i32 = arith.constant 0 : i32
    %c0_i32_0 = arith.constant 0 : i32
    %c0_i32_1 = arith.constant 0 : i32
    return %c0_i32, %c0_i32_0 : i32, i32
  }
  func.func @transform_9(%arg0: i32) -> (i32, i32) {
    %c0_i32 = arith.constant 0 : i32
    %c0_i32_0 = arith.constant 0 : i32
    %c0_i32_1 = arith.constant 0 : i32
    return %c0_i32, %c0_i32_0 : i32, i32
  }
  func.func @transform_10(%arg0: i32) -> (i32, i32, i32, i32) {
    %c0_i32 = arith.constant 0 : i32
    %c0_i32_0 = arith.constant 0 : i32
    %c0_i32_1 = arith.constant 0 : i32
    %c0_i32_2 = arith.constant 0 : i32
    return %arg0, %c0_i32, %c0_i32_0, %c0_i32_1 : i32, i32, i32, i32
  }
}

</mosaic_0001>

<llo_original>
// kernel: bottleneck_forward.1
$region0: #{bottleneck_forward.1}
  #allocation0 [shape = 'u32[]', space=smem, size = 0x4, offset = 0x4, fixed_abs, tag = 'smem constant byte address 0x4 - core index']
  #allocation1 [shape = 'u32[144,128]{1,0:T(1,128)}', space=vmem, size = 0x12000, scoped, tag = 'internal scratch']
  #allocation2 [shape = 'bf16[4,10,10,128]{3,2,1,0:T(8,128)(2,1)}', space=vmem, size = 0x28000, scoped, tag = 'scratch operand']
  #allocation3 [shape = 'bf16[256,1152]{1,0:T(16,128)(2,1)}', space=vmem, size = 0x90000, scoped, tag = 'scratch operand']
  %s0 = inlined_call_operand.vmem [shape: bf16[8,8,8,128], index: 0, kind: input, shape index: {}]
  %s1 = inlined_call_operand.vmem [shape: bf16[128,128], index: 1, kind: input, shape index: {}]
  %s2 = inlined_call_operand.vmem [shape: f32[1,128], index: 2, kind: input, shape index: {}]
  %s3 = inlined_call_operand.vmem [shape: f32[1,128], index: 3, kind: input, shape index: {}]
  %s4 = inlined_call_operand.vmem [shape: bf16[1152,128], index: 4, kind: input, shape index: {}]
  %s5 = inlined_call_operand.vmem [shape: f32[1,128], index: 5, kind: input, shape index: {}]
  %s6 = inlined_call_operand.vmem [shape: f32[1,128], index: 6, kind: input, shape index: {}]
  %s7 = inlined_call_operand.vmem [shape: bf16[128,128], index: 7, kind: input, shape index: {}]
  %s8 = inlined_call_operand.vmem [shape: f32[1,128], index: 8, kind: input, shape index: {}]
  %s9 = inlined_call_operand.vmem [shape: f32[1,128], index: 9, kind: input, shape index: {}]
  %s10 = inlined_call_operand.vmem [shape: bf16[8,8,8,128], index: 10, kind: output, shape index: {}]
  %s11 = sld [smem:[#allocation0]]
  $region73: #{bottleneck_forward.1} parent=0
    _
  %s13 = ssub.s32 1, %s11
  %s14 = scalar_select 0, %s13, %s11
  loop: start=0, step=1, limit=4
  $region2: #{bottleneck_forward.1} parent=0 // loop_pre_header
    _
  $region3: #{bottleneck_forward.1} parent=0 // loop_header
    %s16 = sphi 0, %s20
    %p17 = scmp.ge.s32.totalorder %s16, 4
    %s26 = sphi 0, %s28
    %s29 = sphi 0, %s26
    %s30 = sphi 0, %s29
    %s46 = sphi 0, %s30
    %s50 = sphi 0, %s50
    %s52 = sphi 0, %s50
    %s53 = sphi 0, %s52
    %s67 = sphi 0, %s53
    %s71 = sphi 0, %s71
    %s73 = sphi 0, %s71
    %s74 = sphi 0, %s73
    %s88 = sphi 0, %s74
    %s92 = sphi 0, %s92
    %s94 = sphi 0, %s92
    %s95 = sphi 0, %s94
    %s109 = sphi 0, %s95
    %s113 = sphi 0, %s113
    %s115 = sphi 0, %s113
    %s116 = sphi 0, %s115
    %s130 = sphi 0, %s116
    %s134 = sphi 0, %s134
    %s136 = sphi 0, %s134
    %s137 = sphi 0, %s136
    %s151 = sphi 0, %s137
    %s155 = sphi 0, %s155
    %s157 = sphi 0, %s155
    %s158 = sphi 0, %s157
    %s172 = sphi 0, %s158
    %s176 = sphi 0, %s176
    %s178 = sphi 0, %s176
    %s179 = sphi 0, %s178
    %s193 = sphi 0, %s179
    %s197 = sphi 0, %s197
    %s199 = sphi 0, %s197
    %s200 = sphi 0, %s199
    %s214 = sphi 0, %s200
    %s218 = sphi 0, %s218
    %s220 = sphi 0, %s218
    %s221 = sphi 0, %s220
    %s235 = sphi 0, %s221
    %s241 = sphi 0, %s243
    %s244 = sphi 0, %s241
    %s245 = sphi 0, %s244
    %s261 = sphi 0, %s245
  $region4: #{bottleneck_forward.1} parent=0 // loop_header_branch
    %19 = sbr.rel (%p17) target = $region8
  $region5: #{bottleneck_forward.1} parent=0 // loop_body
    %s21 = ssub.s32 %s16, 1
    %s22 = ssub.s32 %s16, 2
    %s23 = sadd.s32 %s16, 1
    %s24 = ssub.s32 %s16, %s23
    %p25 = scmp.eq.s32.totalorder %s24, 0
    %s27 = sadd.s32 %s26, 1
    %s28 = scalar_select %p25, %s26, %s27
    %p31 = pneg %p25
    %p32 = scmp.eq.s32.totalorder %s16, 1
    %p33 = por %p31, %p32
    %p34 = scmp.ne.s32.totalorder %s26, %s29
    %p35 = scmp.eq.s32.totalorder %s16, 0
    %p36 = por %p34, %p35
    %p37 = scmp.ne.s32.totalorder %s26, %s29
    %p38 = scmp.eq.s32.totalorder %s21, 1
    %p39 = por %p37, %p38
    %p40 = scmp.ne.s32.totalorder %s29, %s30
    %p41 = scmp.eq.s32.totalorder %s21, 0
    %p42 = por %p40, %p41
    %p43 = scmp.ne.s32.totalorder %s29, %s30
    %p44 = scmp.eq.s32.totalorder %s22, 1
    %p45 = por %p43, %p44
    %p47 = scmp.ne.s32.totalorder %s30, %s46
    %p48 = scmp.eq.s32.totalorder %s22, 0
    %p49 = por %p47, %p48
    %s51 = sadd.s32 %s50, 1
    %p54 = scmp.eq.s32.totalorder %s16, 1
    %p55 = scmp.ne.s32.totalorder %s50, %s52
    %p56 = scmp.eq.s32.totalorder %s16, 0
    %p57 = por %p55, %p56
    %p58 = scmp.ne.s32.totalorder %s50, %s52
    %p59 = scmp.eq.s32.totalorder %s21, 1
    %p60 = por %p58, %p59
    %p61 = scmp.ne.s32.totalorder %s52, %s53
    %p62 = scmp.eq.s32.totalorder %s21, 0
    %p63 = por %p61, %p62
    %p64 = scmp.ne.s32.totalorder %s52, %s53
    %p65 = scmp.eq.s32.totalorder %s22, 1
    %p66 = por %p64, %p65
    %p68 = scmp.ne.s32.totalorder %s53, %s67
    %p69 = scmp.eq.s32.totalorder %s22, 0
    %p70 = por %p68, %p69
    %s72 = sadd.s32 %s71, 1
    %p75 = scmp.eq.s32.totalorder %s16, 1
    %p76 = scmp.ne.s32.totalorder %s71, %s73
    %p77 = scmp.eq.s32.totalorder %s16, 0
    %p78 = por %p76, %p77
    %p79 = scmp.ne.s32.totalorder %s71, %s73
    %p80 = scmp.eq.s32.totalorder %s21, 1
    %p81 = por %p79, %p80
    %p82 = scmp.ne.s32.totalorder %s73, %s74
    %p83 = scmp.eq.s32.totalorder %s21, 0
    %p84 = por %p82, %p83
    %p85 = scmp.ne.s32.totalorder %s73, %s74
    %p86 = scmp.eq.s32.totalorder %s22, 1
    %p87 = por %p85, %p86
    %p89 = scmp.ne.s32.totalorder %s74, %s88
    %p90 = scmp.eq.s32.totalorder %s22, 0
    %p91 = por %p89, %p90
    %s93 = sadd.s32 %s92, 1
    %p96 = scmp.eq.s32.totalorder %s16, 1
    %p97 = scmp.ne.s32.totalorder %s92, %s94
    %p98 = scmp.eq.s32.totalorder %s16, 0
    %p99 = por %p97, %p98
    %p100 = scmp.ne.s32.totalorder %s92, %s94
    %p101 = scmp.eq.s32.totalorder %s21, 1
    %p102 = por %p100, %p101
    %p103 = scmp.ne.s32.totalorder %s94, %s95
    %p104 = scmp.eq.s32.totalorder %s21, 0
    %p105 = por %p103, %p104
    %p106 = scmp.ne.s32.totalorder %s94, %s95
    %p107 = scmp.eq.s32.totalorder %s22, 1
    %p108 = por %p106, %p107
    %p110 = scmp.ne.s32.totalorder %s95, %s109
    %p111 = scmp.eq.s32.totalorder %s22, 0
    %p112 = por %p110, %p111
    %s114 = sadd.s32 %s113, 1
    %p117 = scmp.eq.s32.totalorder %s16, 1
    %p118 = scmp.ne.s32.totalorder %s113, %s115
    %p119 = scmp.eq.s32.totalorder %s16, 0
    %p120 = por %p118, %p119
    %p121 = scmp.ne.s32.totalorder %s113, %s115
    %p122 = scmp.eq.s32.totalorder %s21, 1
    %p123 = por %p121, %p122
    %p124 = scmp.ne.s32.totalorder %s115, %s116
    %p125 = scmp.eq.s32.totalorder %s21, 0
    %p126 = por %p124, %p125
    %p127 = scmp.ne.s32.totalorder %s115, %s116
    %p128 = scmp.eq.s32.totalorder %s22, 1
    %p129 = por %p127, %p128
    %p131 = scmp.ne.s32.totalorder %s116, %s130
    %p132 = scmp.eq.s32.totalorder %s22, 0
    %p133 = por %p131, %p132
    %s135 = sadd.s32 %s134, 1
    %p138 = scmp.eq.s32.totalorder %s16, 1
    %p139 = scmp.ne.s32.totalorder %s134, %s136
    %p140 = scmp.eq.s32.totalorder %s16, 0
    %p141 = por %p139, %p140
    %p142 = scmp.ne.s32.totalorder %s134, %s136
    %p143 = scmp.eq.s32.totalorder %s21, 1
    %p144 = por %p142, %p143
    %p145 = scmp.ne.s32.totalorder %s136, %s137
    %p146 = scmp.eq.s32.totalorder %s21, 0
    %p147 = por %p145, %p146
    %p148 = scmp.ne.s32.totalorder %s136, %s137
    %p149 = scmp.eq.s32.totalorder %s22, 1
    %p150 = por %p148, %p149
    %p152 = scmp.ne.s32.totalorder %s137, %s151
    %p153 = scmp.eq.s32.totalorder %s22, 0
    %p154 = por %p152, %p153
    %s156 = sadd.s32 %s155, 1
    %p159 = scmp.eq.s32.totalorder %s16, 1
    %p160 = scmp.ne.s32.totalorder %s155, %s157
    %p161 = scmp.eq.s32.totalorder %s16, 0
    %p162 = por %p160, %p161
    %p163 = scmp.ne.s32.totalorder %s155, %s157
    %p164 = scmp.eq.s32.totalorder %s21, 1
    %p165 = por %p163, %p164
    %p166 = scmp.ne.s32.totalorder %s157, %s158
    %p167 = scmp.eq.s32.totalorder %s21, 0
    %p168 = por %p166, %p167
    %p169 = scmp.ne.s32.totalorder %s157, %s158
    %p170 = scmp.eq.s32.totalorder %s22, 1
    %p171 = por %p169, %p170
    %p173 = scmp.ne.s32.totalorder %s158, %s172
    %p174 = scmp.eq.s32.totalorder %s22, 0
    %p175 = por %p173, %p174
    %s177 = sadd.s32 %s176, 1
    %p180 = scmp.eq.s32.totalorder %s16, 1
    %p181 = scmp.ne.s32.totalorder %s176, %s178
    %p182 = scmp.eq.s32.totalorder %s16, 0
    %p183 = por %p181, %p182
    %p184 = scmp.ne.s32.totalorder %s176, %s178
    %p185 = scmp.eq.s32.totalorder %s21, 1
    %p186 = por %p184, %p185
    %p187 = scmp.ne.s32.totalorder %s178, %s179
    %p188 = scmp.eq.s32.totalorder %s21, 0
    %p189 = por %p187, %p188
    %p190 = scmp.ne.s32.totalorder %s178, %s179
    %p191 = scmp.eq.s32.totalorder %s22, 1
    %p192 = por %p190, %p191
    %p194 = scmp.ne.s32.totalorder %s179, %s193
    %p195 = scmp.eq.s32.totalorder %s22, 0
    %p196 = por %p194, %p195
    %s198 = sadd.s32 %s197, 1
    %p201 = scmp.eq.s32.totalorder %s16, 1
    %p202 = scmp.ne.s32.totalorder %s197, %s199
    %p203 = scmp.eq.s32.totalorder %s16, 0
    %p204 = por %p202, %p203
    %p205 = scmp.ne.s32.totalorder %s197, %s199
    %p206 = scmp.eq.s32.totalorder %s21, 1
    %p207 = por %p205, %p206
    %p208 = scmp.ne.s32.totalorder %s199, %s200
    %p209 = scmp.eq.s32.totalorder %s21, 0
    %p210 = por %p208, %p209
    %p211 = scmp.ne.s32.totalorder %s199, %s200
    %p212 = scmp.eq.s32.totalorder %s22, 1
    %p213 = por %p211, %p212
    %p215 = scmp.ne.s32.totalorder %s200, %s214
    %p216 = scmp.eq.s32.totalorder %s22, 0
    %p217 = por %p215, %p216
    %s219 = sadd.s32 %s218, 1
    %p222 = scmp.eq.s32.totalorder %s16, 1
    %p223 = scmp.ne.s32.totalorder %s218, %s220
    %p224 = scmp.eq.s32.totalorder %s16, 0
    %p225 = por %p223, %p224
    %p226 = scmp.ne.s32.totalorder %s218, %s220
    %p227 = scmp.eq.s32.totalorder %s21, 1
    %p228 = por %p226, %p227
    %p229 = scmp.ne.s32.totalorder %s220, %s221
    %p230 = scmp.eq.s32.totalorder %s21, 0
    %p231 = por %p229, %p230
    %p232 = scmp.ne.s32.totalorder %s220, %s221
    %p233 = scmp.eq.s32.totalorder %s22, 1
    %p234 = por %p232, %p233
    %p236 = scmp.ne.s32.totalorder %s221, %s235
    %p237 = scmp.eq.s32.totalorder %s22, 0
    %p238 = por %p236, %p237
    %s239 = ssub.s32 %s16, %s23
    %p240 = scmp.eq.s32.totalorder %s239, 0
    %s242 = sadd.s32 %s241, 1
    %s243 = scalar_select %p240, %s241, %s242
    %p246 = pneg %p240
    %p247 = scmp.eq.s32.totalorder %s16, 1
    %p248 = por %p246, %p247
    %p249 = scmp.ne.s32.totalorder %s241, %s244
    %p250 = scmp.eq.s32.totalorder %s16, 0
    %p251 = por %p249, %p250
    %p252 = scmp.ne.s32.totalorder %s241, %s244
    %p253 = scmp.eq.s32.totalorder %s21, 1
    %p254 = por %p252, %p253
    %p255 = scmp.ne.s32.totalorder %s244, %s245
    %p256 = scmp.eq.s32.totalorder %s21, 0
    %p257 = por %p255, %p256
    %p258 = scmp.ne.s32.totalorder %s244, %s245
    %p259 = scmp.eq.s32.totalorder %s22, 1
    %p260 = por %p258, %p259
    %p262 = scmp.ne.s32.totalorder %s245, %s261
    %p263 = scmp.eq.s32.totalorder %s22, 0
    %p264 = por %p262, %p263
    %p265 = scmp.le.s32.totalorder 1, %s16
    %p266 = scmp.lt.s32.totalorder %s16, 3
    %p267 = pnand %p265, %p266
    %p268 = pneg %p267
    // Predicated region
    $region9: #{bottleneck_forward.1} parent=5 // pred_check
      _
    $region10: #{bottleneck_forward.1} parent=5 // pred_check_branch
      %270 = sbr.rel (%p267) target = $region12
    $region11: #{bottleneck_forward.1} parent=5 // pred_region
      %s271 = ssub.s32 %s16, 1
      // Predicated region
      $region13: #{bottleneck_forward.1} parent=11 // pred_check
        %p272 = pneg %p63
      $region14: #{bottleneck_forward.1} parent=11 // pred_check_branch
        %274 = sbr.rel (%p272) target = $region16
      $region15: #{bottleneck_forward.1} parent=11 // pred_region
        _
      $region16: #{bottleneck_forward.1} parent=11 // pred_fallthru
        _
      // Predicated region
      $region17: #{bottleneck_forward.1} parent=11 // pred_check
        %p275 = pneg %p84
      $region18: #{bottleneck_forward.1} parent=11 // pred_check_branch
        %277 = sbr.rel (%p275) target = $region20
      $region19: #{bottleneck_forward.1} parent=11 // pred_region
        _
      $region20: #{bottleneck_forward.1} parent=11 // pred_fallthru
        _
      // Predicated region
      $region21: #{bottleneck_forward.1} parent=11 // pred_check
        %p278 = pneg %p105
      $region22: #{bottleneck_forward.1} parent=11 // pred_check_branch
        %280 = sbr.rel (%p278) target = $region24
      $region23: #{bottleneck_forward.1} parent=11 // pred_region
        _
      $region24: #{bottleneck_forward.1} parent=11 // pred_fallthru
        _
      // Predicated region
      $region25: #{bottleneck_forward.1} parent=11 // pred_check
        %p281 = pneg %p126
      $region26: #{bottleneck_forward.1} parent=11 // pred_check_branch
        %283 = sbr.rel (%p281) target = $region28
      $region27: #{bottleneck_forward.1} parent=11 // pred_region
        _
      $region28: #{bottleneck_forward.1} parent=11 // pred_fallthru
        _
      // Predicated region
      $region29: #{bottleneck_forward.1} parent=11 // pred_check
        %p284 = pneg %p147
      $region30: #{bottleneck_forward.1} parent=11 // pred_check_branch
        %286 = sbr.rel (%p284) target = $region32
      $region31: #{bottleneck_forward.1} parent=11 // pred_region
        _
      $region32: #{bottleneck_forward.1} parent=11 // pred_fallthru
        _
      // Predicated region
      $region33: #{bottleneck_forward.1} parent=11 // pred_check
        %p287 = pneg %p168
      $region34: #{bottleneck_forward.1} parent=11 // pred_check_branch
        %289 = sbr.rel (%p287) target = $region36
      $region35: #{bottleneck_forward.1} parent=11 // pred_region
        _
      $region36: #{bottleneck_forward.1} parent=11 // pred_fallthru
        _
      // Predicated region
      $region37: #{bottleneck_forward.1} parent=11 // pred_check
        %p290 = pneg %p189
      $region38: #{bottleneck_forward.1} parent=11 // pred_check_branch
        %292 = sbr.rel (%p290) target = $region40
      $region39: #{bottleneck_forward.1} parent=11 // pred_region
        _
      $region40: #{bottleneck_forward.1} parent=11 // pred_fallthru
        _
      // Predicated region
      $region41: #{bottleneck_forward.1} parent=11 // pred_check
        %p293 = pneg %p210
      $region42: #{bottleneck_forward.1} parent=11 // pred_check_branch
        %295 = sbr.rel (%p293) target = $region44
      $region43: #{bottleneck_forward.1} parent=11 // pred_region
        _
      $region44: #{bottleneck_forward.1} parent=11 // pred_fallthru
        _
      // Predicated region
      $region45: #{bottleneck_forward.1} parent=11 // pred_check
        %p296 = pneg %p231
      $region46: #{bottleneck_forward.1} parent=11 // pred_check_branch
        %298 = sbr.rel (%p296) target = $region48
      $region47: #{bottleneck_forward.1} parent=11 // pred_region
        _
      $region48: #{bottleneck_forward.1} parent=11 // pred_fallthru
        _
    $region12: #{bottleneck_forward.1} parent=5 // pred_fallthru
      _
    %p299 = scmp.lt.s32.totalorder %s16, 2
    // Predicated region
    $region49: #{bottleneck_forward.1} parent=5 // pred_check
      %p300 = pneg %p299
    $region50: #{bottleneck_forward.1} parent=5 // pred_check_branch
      %302 = sbr.rel (%p300) target = $region52
    $region51: #{bottleneck_forward.1} parent=5 // pred_region
      // Predicated region
      $region53: #{bottleneck_forward.1} parent=51 // pred_check
        %p303 = pneg %p36
      $region54: #{bottleneck_forward.1} parent=51 // pred_check_branch
        %305 = sbr.rel (%p303) target = $region56
      $region55: #{bottleneck_forward.1} parent=51 // pred_region
        %s306 = smul.u32 4, %s16
        %p307 = scmp.lt.s32.totalorder %s306, 7
        %s308 = scalar_select %p307, %s306, 7
        %s309 = smul.addr %s308, 8
        %s310 = smul.addr %s309, 4
        %s311 = scalar_lea.vmem %s0, %s310
        %s312 = smul.u32 4, %s16
      $region56: #{bottleneck_forward.1} parent=51 // pred_fallthru
        _
    $region52: #{bottleneck_forward.1} parent=5 // pred_fallthru
      _
    %p313 = scmp.le.s32.totalorder 1, %s16
    %p314 = scmp.lt.s32.totalorder %s16, 3
    %p315 = pnand %p313, %p314
    %p316 = pneg %p315
    // Predicated region
    $region57: #{bottleneck_forward.1} parent=5 // pred_check
      _
    $region58: #{bottleneck_forward.1} parent=5 // pred_check_branch
      %318 = sbr.rel (%p315) target = $region60
    $region59: #{bottleneck_forward.1} parent=5 // pred_region
      %s319 = ssub.s32 %s16, 1
      %s320 = smul.u32 4, %s21
      %p321 = scmp.lt.s32.totalorder %s320, 7
      %s322 = scalar_select %p321, %s320, 7
      %s323 = smul.addr %s322, 8
      %s324 = smul.addr %s323, 4
      %s325 = scalar_lea.vmem %s0, %s324
      %p326 = pneg %p42
      %p327 = pneg %p39
      %p328 = pneg %p63
      %p329 = pneg %p60
      %p330 = pneg %p84
      %p331 = pneg %p81
      %p332 = pneg %p105
      %p333 = pneg %p102
      %p334 = pneg %p126
      %p335 = pneg %p123
      %p336 = pneg %p147
      %p337 = pneg %p144
      %p338 = pneg %p168
      %p339 = pneg %p165
      %p340 = pneg %p189
      %p341 = pneg %p186
      %p342 = pneg %p210
      %p343 = pneg %p207
      %p344 = pneg %p231
      %p345 = pneg %p228
      %p346 = pneg %p257
      %p347 = pneg %p254
      %s348 = smul.u32 4, %s21
      %p349 = scmp.lt.s32.totalorder %s348, 7
      %s350 = scalar_select %p349, %s348, 7
      %s351 = smul.addr %s350, 8
      %s352 = smul.addr %s351, 4
      %s353 = scalar_lea.vmem %s10, %s352
      %s354 = smul.u32 4, %s21
      %p355 = scmp.lt.s32.totalorder %s354, 7
      %s356 = scalar_select %p355, %s354, 7
      %s357 = smul.addr %s356, 8
      %s358 = smul.addr %s357, 4
      %s359 = scalar_lea.vmem %s0, %s358
      %s360 = smul.u32 4, %s21
      %s361 = smul.u32 4, %s21
      %p362 = scmp.lt.s32.totalorder %s361, 7
      %s363 = scalar_select %p362, %s361, 7
      %s364 = smul.addr %s363, 8
      %s365 = smul.addr %s364, 4
      %s366 = scalar_lea.vmem %s10, %s365
      %s367 = smul.u32 4, %s21
      %v369 = vld [vmem:[%s359] sm:$0xf]
      %v370 = vld [vmem:[%s359 + $0x4] sm:$0xf]
      %v371 = vld [vmem:[%s359 + $0x8] sm:$0xf]
      %v372 = vld [vmem:[%s359 + $0xc] sm:$0xf]
      %v373 = vld [vmem:[%s359 + $0x10] sm:$0xf]
      %v374 = vld [vmem:[%s359 + $0x14] sm:$0xf]
      %v375 = vld [vmem:[%s359 + $0x18] sm:$0xf]
      %v376 = vld [vmem:[%s359 + $0x1c] sm:$0xf]
      %v377 = vld [vmem:[%s359 + $0x20] sm:$0xf]
      %v378 = vld [vmem:[%s359 + $0x24] sm:$0xf]
      %v379 = vld [vmem:[%s359 + $0x28] sm:$0xf]
      %v380 = vld [vmem:[%s359 + $0x2c] sm:$0xf]
      %v381 = vld [vmem:[%s359 + $0x30] sm:$0xf]
      %v382 = vld [vmem:[%s359 + $0x34] sm:$0xf]
      %v383 = vld [vmem:[%s359 + $0x38] sm:$0xf]
      %v384 = vld [vmem:[%s359 + $0x3c] sm:$0xf]
      %v385 = vld [vmem:[%s359 + $0x40] sm:$0xf]
      %v386 = vld [vmem:[%s359 + $0x44] sm:$0xf]
      %v387 = vld [vmem:[%s359 + $0x48] sm:$0xf]
      %v388 = vld [vmem:[%s359 + $0x4c] sm:$0xf]
      %v389 = vld [vmem:[%s359 + $0x50] sm:$0xf]
      %v390 = vld [vmem:[%s359 + $0x54] sm:$0xf]
      %v391 = vld [vmem:[%s359 + $0x58] sm:$0xf]
      %v392 = vld [vmem:[%s359 + $0x5c] sm:$0xf]
      %v393 = vld [vmem:[%s359 + $0x60] sm:$0xf]
      %v394 = vld [vmem:[%s359 + $0x64] sm:$0xf]
      %v395 = vld [vmem:[%s359 + $0x68] sm:$0xf]
      %v396 = vld [vmem:[%s359 + $0x6c] sm:$0xf]
      %v397 = vld [vmem:[%s359 + $0x70] sm:$0xf]
      %v398 = vld [vmem:[%s359 + $0x74] sm:$0xf]
      %v399 = vld [vmem:[%s359 + $0x78] sm:$0xf]
      %v400 = vld [vmem:[%s359 + $0x7c] sm:$0xf]
      %401 = vst [vmem:[#allocation2] sm:$0xf] 0
      %402 = vst [vmem:[#allocation2 + $0x4] sm:$0x1] 0
      %403 = vst [vmem:[#allocation2 + $0x50] sm:$0xf] 0
      %404 = vst [vmem:[#allocation2 + $0x54] sm:$0x1] 0
      %405 = vst [vmem:[#allocation2 + $0xa0] sm:$0xf] 0
      %406 = vst [vmem:[#allocation2 + $0xa4] sm:$0x1] 0
      %407 = vst [vmem:[#allocation2 + $0xf0] sm:$0xf] 0
      %408 = vst [vmem:[#allocation2 + $0xf4] sm:$0x1] 0
      %s409 = scalar_lea.vmem [#allocation2], 72
      %410 = vst [vmem:[%s409] sm:$0xf] 0
      %411 = vst [vmem:[%s409 + $0x4] sm:$0x1] 0
      %412 = vst [vmem:[%s409 + $0x50] sm:$0xf] 0
      %413 = vst [vmem:[%s409 + $0x54] sm:$0x1] 0
      %414 = vst [vmem:[%s409 + $0xa0] sm:$0xf] 0
      %415 = vst [vmem:[%s409 + $0xa4] sm:$0x1] 0
      %416 = vst [vmem:[%s409 + $0xf0] sm:$0xf] 0
      %417 = vst [vmem:[%s409 + $0xf4] sm:$0x1] 0
      %s418 = scalar_lea.vmem [#allocation2], 8
      %vm419 = vcmask 1040384
      %vm420 = vsmask.f32 256
      %vm421 = vmand %vm419, %vm420
      %v422 = vld [vmem:[%s418] sm:$0x1]
      %v423 = vsel %vm421, 0, %v422
      %424 = vst [vmem:[%s418] sm:$0x1] %v423
      %v425 = vld [vmem:[%s418 + $0x8] sm:$0x1]
      %v426 = vsel %vm421, 0, %v425
      %427 = vst [vmem:[%s418 + $0x8] sm:$0x1] %v426
      %v428 = vld [vmem:[%s418 + $0x10] sm:$0x1]
      %v429 = vsel %vm421, 0, %v428
      %430 = vst [vmem:[%s418 + $0x10] sm:$0x1] %v429
      %v431 = vld [vmem:[%s418 + $0x18] sm:$0x1]
      %v432 = vsel %vm421, 0, %v431
      %433 = vst [vmem:[%s418 + $0x18] sm:$0x1] %v432
      %v434 = vld [vmem:[%s418 + $0x20] sm:$0x1]
      %v435 = vsel %vm421, 0, %v434
      %436 = vst [vmem:[%s418 + $0x20] sm:$0x1] %v435
      %v437 = vld [vmem:[%s418 + $0x28] sm:$0x1]
      %v438 = vsel %vm421, 0, %v437
      %439 = vst [vmem:[%s418 + $0x28] sm:$0x1] %v438
      %v440 = vld [vmem:[%s418 + $0x30] sm:$0x1]
      %v441 = vsel %vm421, 0, %v440
      %442 = vst [vmem:[%s418 + $0x30] sm:$0x1] %v441
      %v443 = vld [vmem:[%s418 + $0x38] sm:$0x1]
      %v444 = vsel %vm421, 0, %v443
      %445 = vst [vmem:[%s418 + $0x38] sm:$0x1] %v444
      %v446 = vld [vmem:[%s418 + $0x50] sm:$0x1]
      %v447 = vsel %vm421, 0, %v446
      %448 = vst [vmem:[%s418 + $0x50] sm:$0x1] %v447
      %v449 = vld [vmem:[%s418 + $0x58] sm:$0x1]
      %v450 = vsel %vm421, 0, %v449
      %451 = vst [vmem:[%s418 + $0x58] sm:$0x1] %v450
      %v452 = vld [vmem:[%s418 + $0x60] sm:$0x1]
      %v453 = vsel %vm421, 0, %v452
      %454 = vst [vmem:[%s418 + $0x60] sm:$0x1] %v453
      %v455 = vld [vmem:[%s418 + $0x68] sm:$0x1]
      %v456 = vsel %vm421, 0, %v455
      %457 = vst [vmem:[%s418 + $0x68] sm:$0x1] %v456
      %v458 = vld [vmem:[%s418 + $0x70] sm:$0x1]
      %v459 = vsel %vm421, 0, %v458
      %460 = vst [vmem:[%s418 + $0x70] sm:$0x1] %v459
      %v461 = vld [vmem:[%s418 + $0x78] sm:$0x1]
      %v462 = vsel %vm421, 0, %v461
      %463 = vst [vmem:[%s418 + $0x78] sm:$0x1] %v462
      %v464 = vld [vmem:[%s418 + $0x80] sm:$0x1]
      %v465 = vsel %vm421, 0, %v464
      %466 = vst [vmem:[%s418 + $0x80] sm:$0x1] %v465
      %v467 = vld [vmem:[%s418 + $0x88] sm:$0x1]
      %v468 = vsel %vm421, 0, %v467
      %469 = vst [vmem:[%s418 + $0x88] sm:$0x1] %v468
      %v470 = vld [vmem:[%s418 + $0xa0] sm:$0x1]
      %v471 = vsel %vm421, 0, %v470
      %472 = vst [vmem:[%s418 + $0xa0] sm:$0x1] %v471
      %v473 = vld [vmem:[%s418 + $0xa8] sm:$0x1]
      %v474 = vsel %vm421, 0, %v473
      %475 = vst [vmem:[%s418 + $0xa8] sm:$0x1] %v474
      %v476 = vld [vmem:[%s418 + $0xb0] sm:$0x1]
      %v477 = vsel %vm421, 0, %v476
      %478 = vst [vmem:[%s418 + $0xb0] sm:$0x1] %v477
      %v479 = vld [vmem:[%s418 + $0xb8] sm:$0x1]
      %v480 = vsel %vm421, 0, %v479
      %481 = vst [vmem:[%s418 + $0xb8] sm:$0x1] %v480
      %v482 = vld [vmem:[%s418 + $0xc0] sm:$0x1]
      %v483 = vsel %vm421, 0, %v482
      %484 = vst [vmem:[%s418 + $0xc0] sm:$0x1] %v483
      %v485 = vld [vmem:[%s418 + $0xc8] sm:$0x1]
      %v486 = vsel %vm421, 0, %v485
      %487 = vst [vmem:[%s418 + $0xc8] sm:$0x1] %v486
      %v488 = vld [vmem:[%s418 + $0xd0] sm:$0x1]
      %v489 = vsel %vm421, 0, %v488
      %490 = vst [vmem:[%s418 + $0xd0] sm:$0x1] %v489
      %v491 = vld [vmem:[%s418 + $0xd8] sm:$0x1]
      %v492 = vsel %vm421, 0, %v491
      %493 = vst [vmem:[%s418 + $0xd8] sm:$0x1] %v492
      %v494 = vld [vmem:[%s418 + $0xf0] sm:$0x1]
      %v495 = vsel %vm421, 0, %v494
      %496 = vst [vmem:[%s418 + $0xf0] sm:$0x1] %v495
      %v497 = vld [vmem:[%s418 + $0xf8] sm:$0x1]
      %v498 = vsel %vm421, 0, %v497
      %499 = vst [vmem:[%s418 + $0xf8] sm:$0x1] %v498
      %v500 = vld [vmem:[%s418 + $0x100] sm:$0x1]
      %v501 = vsel %vm421, 0, %v500
      %502 = vst [vmem:[%s418 + $0x100] sm:$0x1] %v501
      %v503 = vld [vmem:[%s418 + $0x108] sm:$0x1]
      %v504 = vsel %vm421, 0, %v503
      %505 = vst [vmem:[%s418 + $0x108] sm:$0x1] %v504
      %v506 = vld [vmem:[%s418 + $0x110] sm:$0x1]
      %v507 = vsel %vm421, 0, %v506
      %508 = vst [vmem:[%s418 + $0x110] sm:$0x1] %v507
      %v509 = vld [vmem:[%s418 + $0x118] sm:$0x1]
      %v510 = vsel %vm421, 0, %v509
      %511 = vst [vmem:[%s418 + $0x118] sm:$0x1] %v510
      %v512 = vld [vmem:[%s418 + $0x120] sm:$0x1]
      %v513 = vsel %vm421, 0, %v512
      %514 = vst [vmem:[%s418 + $0x120] sm:$0x1] %v513
      %v515 = vld [vmem:[%s418 + $0x128] sm:$0x1]
      %v516 = vsel %vm421, 0, %v515
      %517 = vst [vmem:[%s418 + $0x128] sm:$0x1] %v516
      %vm518 = vsmask.f32 7938
      %vm519 = vmand %vm419, %vm518
      %v520 = vld [vmem:[%s418 + $0x4] sm:$0x1]
      %v521 = vsel %vm519, 0, %v520
      %522 = vst [vmem:[%s418 + $0x4] sm:$0x1] %v521
      %v523 = vld [vmem:[%s418 + $0xc] sm:$0x1]
      %v524 = vsel %vm519, 0, %v523
      %525 = vst [vmem:[%s418 + $0xc] sm:$0x1] %v524
      %v526 = vld [vmem:[%s418 + $0x14] sm:$0x1]
      %v527 = vsel %vm519, 0, %v526
      %528 = vst [vmem:[%s418 + $0x14] sm:$0x1] %v527
      %v529 = vld [vmem:[%s418 + $0x1c] sm:$0x1]
      %v530 = vsel %vm519, 0, %v529
      %531 = vst [vmem:[%s418 + $0x1c] sm:$0x1] %v530
      %v532 = vld [vmem:[%s418 + $0x24] sm:$0x1]
      %v533 = vsel %vm519, 0, %v532
      %534 = vst [vmem:[%s418 + $0x24] sm:$0x1] %v533
      %v535 = vld [vmem:[%s418 + $0x2c] sm:$0x1]
      %v536 = vsel %vm519, 0, %v535
      %537 = vst [vmem:[%s418 + $0x2c] sm:$0x1] %v536
      %v538 = vld [vmem:[%s418 + $0x34] sm:$0x1]
      %v539 = vsel %vm519, 0, %v538
      %540 = vst [vmem:[%s418 + $0x34] sm:$0x1] %v539
      %v541 = vld [vmem:[%s418 + $0x3c] sm:$0x1]
      %v542 = vsel %vm519, 0, %v541
      %543 = vst [vmem:[%s418 + $0x3c] sm:$0x1] %v542
      %v544 = vld [vmem:[%s418 + $0x54] sm:$0x1]
      %v545 = vsel %vm519, 0, %v544
      %546 = vst [vmem:[%s418 + $0x54] sm:$0x1] %v545
      %v547 = vld [vmem:[%s418 + $0x5c] sm:$0x1]
      %v548 = vsel %vm519, 0, %v547
      %549 = vst [vmem:[%s418 + $0x5c] sm:$0x1] %v548
      %v550 = vld [vmem:[%s418 + $0x64] sm:$0x1]
      %v551 = vsel %vm519, 0, %v550
      %552 = vst [vmem:[%s418 + $0x64] sm:$0x1] %v551
      %v553 = vld [vmem:[%s418 + $0x6c] sm:$0x1]
      %v554 = vsel %vm519, 0, %v553
      %555 = vst [vmem:[%s418 + $0x6c] sm:$0x1] %v554
      %v556 = vld [vmem:[%s418 + $0x74] sm:$0x1]
      %v557 = vsel %vm519, 0, %v556
      %558 = vst [vmem:[%s418 + $0x74] sm:$0x1] %v557
      %v559 = vld [vmem:[%s418 + $0x7c] sm:$0x1]
      %v560 = vsel %vm519, 0, %v559
      %561 = vst [vmem:[%s418 + $0x7c] sm:$0x1] %v560
      %v562 = vld [vmem:[%s418 + $0x84] sm:$0x1]
      %v563 = vsel %vm519, 0, %v562
      %564 = vst [vmem:[%s418 + $0x84] sm:$0x1] %v563
      %v565 = vld [vmem:[%s418 + $0x8c] sm:$0x1]
      %v566 = vsel %vm519, 0, %v565
      %567 = vst [vmem:[%s418 + $0x8c] sm:$0x1] %v566
      %v568 = vld [vmem:[%s418 + $0xa4] sm:$0x1]
      %v569 = vsel %vm519, 0, %v568
      %570 = vst [vmem:[%s418 + $0xa4] sm:$0x1] %v569
      %v571 = vld [vmem:[%s418 + $0xac] sm:$0x1]
      %v572 = vsel %vm519, 0, %v571
      %573 = vst [vmem:[%s418 + $0xac] sm:$0x1] %v572
      %v574 = vld [vmem:[%s418 + $0xb4] sm:$0x1]
      %v575 = vsel %vm519, 0, %v574
      %576 = vst [vmem:[%s418 + $0xb4] sm:$0x1] %v575
      %v577 = vld [vmem:[%s418 + $0xbc] sm:$0x1]
      %v578 = vsel %vm519, 0, %v577
      %579 = vst [vmem:[%s418 + $0xbc] sm:$0x1] %v578
      %v580 = vld [vmem:[%s418 + $0xc4] sm:$0x1]
      %v581 = vsel %vm519, 0, %v580
      %582 = vst [vmem:[%s418 + $0xc4] sm:$0x1] %v581
      %v583 = vld [vmem:[%s418 + $0xcc] sm:$0x1]
      %v584 = vsel %vm519, 0, %v583
      %585 = vst [vmem:[%s418 + $0xcc] sm:$0x1] %v584
      %v586 = vld [vmem:[%s418 + $0xd4] sm:$0x1]
      %v587 = vsel %vm519, 0, %v586
      %588 = vst [vmem:[%s418 + $0xd4] sm:$0x1] %v587
      %v589 = vld [vmem:[%s418 + $0xdc] sm:$0x1]
      %v590 = vsel %vm519, 0, %v589
      %591 = vst [vmem:[%s418 + $0xdc] sm:$0x1] %v590
      %v592 = vld [vmem:[%s418 + $0xf4] sm:$0x1]
      %v593 = vsel %vm519, 0, %v592
      %594 = vst [vmem:[%s418 + $0xf4] sm:$0x1] %v593
      %v595 = vld [vmem:[%s418 + $0xfc] sm:$0x1]
      %v596 = vsel %vm519, 0, %v595
      %597 = vst [vmem:[%s418 + $0xfc] sm:$0x1] %v596
      %v598 = vld [vmem:[%s418 + $0x104] sm:$0x1]
      %v599 = vsel %vm519, 0, %v598
      %600 = vst [vmem:[%s418 + $0x104] sm:$0x1] %v599
      %v601 = vld [vmem:[%s418 + $0x10c] sm:$0x1]
      %v602 = vsel %vm519, 0, %v601
      %603 = vst [vmem:[%s418 + $0x10c] sm:$0x1] %v602
      %v604 = vld [vmem:[%s418 + $0x114] sm:$0x1]
      %v605 = vsel %vm519, 0, %v604
      %606 = vst [vmem:[%s418 + $0x114] sm:$0x1] %v605
      %v607 = vld [vmem:[%s418 + $0x11c] sm:$0x1]
      %v608 = vsel %vm519, 0, %v607
      %609 = vst [vmem:[%s418 + $0x11c] sm:$0x1] %v608
      %v610 = vld [vmem:[%s418 + $0x124] sm:$0x1]
      %v611 = vsel %vm519, 0, %v610
      %612 = vst [vmem:[%s418 + $0x124] sm:$0x1] %v611
      %v613 = vld [vmem:[%s418 + $0x12c] sm:$0x1]
      %v614 = vsel %vm519, 0, %v613
      %615 = vst [vmem:[%s418 + $0x12c] sm:$0x1] %v614
      %v616 = vld [vmem:[%s1] sm:$0xf]
      %v617 = vld [vmem:[%s1 + $0x4] sm:$0xf]
      %v618 = vld [vmem:[%s1 + $0x8] sm:$0xf]
      %v619 = vld [vmem:[%s1 + $0xc] sm:$0xf]
      %v620 = vld [vmem:[%s1 + $0x10] sm:$0xf]
      %v621 = vld [vmem:[%s1 + $0x14] sm:$0xf]
      %v622 = vld [vmem:[%s1 + $0x18] sm:$0xf]
      %v623 = vld [vmem:[%s1 + $0x1c] sm:$0xf]
      %v624 = vld [vmem:[%s1 + $0x20] sm:$0xf]
      %v625 = vld [vmem:[%s1 + $0x24] sm:$0xf]
      %v626 = vld [vmem:[%s1 + $0x28] sm:$0xf]
      %v627 = vld [vmem:[%s1 + $0x2c] sm:$0xf]
      %v628 = vld [vmem:[%s1 + $0x30] sm:$0xf]
      %v629 = vld [vmem:[%s1 + $0x34] sm:$0xf]
      %v630 = vld [vmem:[%s1 + $0x38] sm:$0xf]
      %v631 = vld [vmem:[%s1 + $0x3c] sm:$0xf]
      %v664 = vunpack.c.l.b16 %v369
      %v665 = vunpack.c.l.b16 %v370
      %v666 = vunpack.c.l.b16 %v371
      %v667 = vunpack.c.l.b16 %v372
      %v668 = vunpack.c.l.b16 %v373
      %v669 = vunpack.c.l.b16 %v374
      %v670 = vunpack.c.l.b16 %v375
      %v671 = vunpack.c.l.b16 %v376
      %v672 = vunpack.c.l.b16 %v377
      %v673 = vunpack.c.l.b16 %v378
      %v674 = vunpack.c.l.b16 %v379
      %v675 = vunpack.c.l.b16 %v380
      %v676 = vunpack.c.l.b16 %v381
      %v677 = vunpack.c.l.b16 %v382
      %v678 = vunpack.c.l.b16 %v383
      %v679 = vunpack.c.l.b16 %v384
      %v680 = vunpack.c.l.b16 %v385
      %v681 = vunpack.c.l.b16 %v386
      %v682 = vunpack.c.l.b16 %v387
      %v683 = vunpack.c.l.b16 %v388
      %v684 = vunpack.c.l.b16 %v389
      %v685 = vunpack.c.l.b16 %v390
      %v686 = vunpack.c.l.b16 %v391
      %v687 = vunpack.c.l.b16 %v392
      %v688 = vunpack.c.l.b16 %v393
      %v689 = vunpack.c.l.b16 %v394
      %v690 = vunpack.c.l.b16 %v395
      %v691 = vunpack.c.l.b16 %v396
      %v692 = vunpack.c.l.b16 %v397
      %v693 = vunpack.c.l.b16 %v398
      %v694 = vunpack.c.l.b16 %v399
      %v695 = vunpack.c.l.b16 %v400
      %v696 = vpack.c.b16 %v665, %v664
      %v697 = vpack.c.b16 %v667, %v666
      %v698 = vpack.c.b16 %v669, %v668
      %v699 = vpack.c.b16 %v671, %v670
      %v700 = vpack.c.b16 %v673, %v672
      %v701 = vpack.c.b16 %v675, %v674
      %v702 = vpack.c.b16 %v677, %v676
      %v703 = vpack.c.b16 %v679, %v678
      %v704 = vpack.c.b16 %v681, %v680
      %v705 = vpack.c.b16 %v683, %v682
      %v706 = vpack.c.b16 %v685, %v684
      %v707 = vpack.c.b16 %v687, %v686
      %v708 = vpack.c.b16 %v689, %v688
      %v709 = vpack.c.b16 %v691, %v690
      %v710 = vpack.c.b16 %v693, %v692
      %v711 = vpack.c.b16 %v695, %v694
      %v744 = vunpack.c.l.b16 %v616
      %v745 = vunpack.c.l.b16 %v617
      %v746 = vunpack.c.l.b16 %v618
      %v747 = vunpack.c.l.b16 %v619
      %v748 = vunpack.c.l.b16 %v620
      %v749 = vunpack.c.l.b16 %v621
      %v750 = vunpack.c.l.b16 %v622
      %v751 = vunpack.c.l.b16 %v623
      %v752 = vunpack.c.l.b16 %v624
      %v753 = vunpack.c.l.b16 %v625
      %v754 = vunpack.c.l.b16 %v626
      %v755 = vunpack.c.l.b16 %v627
      %v756 = vunpack.c.l.b16 %v628
      %v757 = vunpack.c.l.b16 %v629
      %v758 = vunpack.c.l.b16 %v630
      %v759 = vunpack.c.l.b16 %v631
      %v760 = vpack.c.b16 %v745, %v744
      %v761 = vpack.c.b16 %v747, %v746
      %v762 = vpack.c.b16 %v749, %v748
      %v763 = vpack.c.b16 %v751, %v750
      %v764 = vpack.c.b16 %v753, %v752
      %v765 = vpack.c.b16 %v755, %v754
      %v766 = vpack.c.b16 %v757, %v756
      %v767 = vpack.c.b16 %v759, %v758
      %776 = vmatprep.subr.bf16.mxu0 0
      %777 = vmatpush1.bf16.msra.mxu0 %v760
      %778 = vmatprep.subr.bf16.mxu0 0
      %779 = vmatpush1.bf16.msra.mxu0 %v761
      %780 = vmatprep.subr.bf16.mxu0 0
      %781 = vmatpush1.bf16.msra.mxu0 %v762
      %782 = vmatprep.subr.bf16.mxu0 0
      %783 = vmatpush1.bf16.msra.mxu0 %v763
      %784 = vmatprep.subr.bf16.mxu0 0
      %785 = vmatpush1.bf16.msra.mxu0 %v764
      %786 = vmatprep.subr.bf16.mxu0 0
      %787 = vmatpush1.bf16.msra.mxu0 %v765
      %788 = vmatprep.subr.bf16.mxu0 0
      %789 = vmatpush1.bf16.msra.mxu0 %v766
      %790 = vmatprep.subr.bf16.mxu0 0
      %791 = vmatpush1.bf16.msra.mxu0 %v767
      %792 = vmatprep.subr.bf16.mxu0 0
      %793 = vmatpush1.bf16.msra.mxu0 0
      %794 = vmatprep.subr.bf16.mxu0 0
      %795 = vmatpush1.bf16.msra.mxu0 0
      %796 = vmatprep.subr.bf16.mxu0 0
      %797 = vmatpush1.bf16.msra.mxu0 0
      %798 = vmatprep.subr.bf16.mxu0 0
      %799 = vmatpush1.bf16.msra.mxu0 0
      %800 = vmatprep.subr.bf16.mxu0 0
      %801 = vmatpush1.bf16.msra.mxu0 0
      %802 = vmatprep.subr.bf16.mxu0 0
      %803 = vmatpush1.bf16.msra.mxu0 0
      %804 = vmatprep.subr.bf16.mxu0 0
      %805 = vmatpush1.bf16.msra.mxu0 0
      %806 = vmatprep.subr.bf16.mxu0 0
      %807 = vmatpush1.bf16.msra.mxu0 0
      %808 = vmatprep.mubr.bf16.mxu0 0
      %809 = vmatmul.mubr.bf16.gmra.mrb[0].mxu0 %v696
      %v810 = vpop.f32.mrb[0].mxu0
      %v811 = vadd.f32 0.0, %v810
      %v812 = vpop.f32.mrb[0].mxu0
      %v813 = vpop.f32.mrb[0].mxu0
      %v814 = vadd.f32 0.0, %v813
      %v815 = vpop.f32.mrb[0].mxu0
      %816 = vmatprep.mubr.bf16.mxu0 0
      %817 = vmatmul.mubr.bf16.gmra.mrb[0].mxu0 %v697
      %v818 = vpop.f32.mrb[0].mxu0
      %v819 = vadd.f32 0.0, %v818
      %v820 = vpop.f32.mrb[0].mxu0
      %v821 = vpop.f32.mrb[0].mxu0
      %v822 = vadd.f32 0.0, %v821
      %v823 = vpop.f32.mrb[0].mxu0
      %824 = vmatprep.mubr.bf16.mxu0 0
      %825 = vmatmul.mubr.bf16.gmra.mrb[0].mxu0 %v698
      %v826 = vpop.f32.mrb[0].mxu0
      %v827 = vadd.f32 0.0, %v826
      %v828 = vpop.f32.mrb[0].mxu0
      %v829 = vpop.f32.mrb[0].mxu0
      %v830 = vadd.f32 0.0, %v829
      %v831 = vpop.f32.mrb[0].mxu0
      %832 = vmatprep.mubr.bf16.mxu0 0
      %833 = vmatmul.mubr.bf16.gmra.mrb[0].mxu0 %v699
      %v834 = vpop.f32.mrb[0].mxu0
      %v835 = vadd.f32 0.0, %v834
      %v836 = vpop.f32.mrb[0].mxu0
      %v837 = vpop.f32.mrb[0].mxu0
      %v838 = vadd.f32 0.0, %v837
      %v839 = vpop.f32.mrb[0].mxu0
      %840 = vmatprep.mubr.bf16.mxu0 0
      %841 = vmatmul.mubr.bf16.gmra.mrb[0].mxu0 %v700
      %v842 = vpop.f32.mrb[0].mxu0
      %v843 = vadd.f32 0.0, %v842
      %v844 = vpop.f32.mrb[0].mxu0
      %v845 = vpop.f32.mrb[0].mxu0
      %v846 = vadd.f32 0.0, %v845
      %v847 = vpop.f32.mrb[0].mxu0
      %848 = vmatprep.mubr.bf16.mxu0 0
      %849 = vmatmul.mubr.bf16.gmra.mrb[0].mxu0 %v701
      %v850 = vpop.f32.mrb[0].mxu0
      %v851 = vadd.f32 0.0, %v850
      %v852 = vpop.f32.mrb[0].mxu0
      %v853 = vpop.f32.mrb[0].mxu0
      %v854 = vadd.f32 0.0, %v853
      %v855 = vpop.f32.mrb[0].mxu0
      %856 = vmatprep.mubr.bf16.mxu0 0
      %857 = vmatmul.mubr.bf16.gmra.mrb[0].mxu0 %v702
      %v858 = vpop.f32.mrb[0].mxu0
      %v859 = vadd.f32 0.0, %v858
      %v860 = vpop.f32.mrb[0].mxu0
      %v861 = vpop.f32.mrb[0].mxu0
      %v862 = vadd.f32 0.0, %v861
      %v863 = vpop.f32.mrb[0].mxu0
      %864 = vmatprep.mubr.bf16.mxu0 0
      %865 = vmatmul.mubr.bf16.gmra.mrb[0].mxu0 %v703
      %v866 = vpop.f32.mrb[0].mxu0
      %v867 = vadd.f32 0.0, %v866
      %v868 = vpop.f32.mrb[0].mxu0
      %v869 = vpop.f32.mrb[0].mxu0
      %v870 = vadd.f32 0.0, %v869
      %v871 = vpop.f32.mrb[0].mxu0
      %872 = vmatprep.mubr.bf16.mxu0 0
      %873 = vmatmul.mubr.bf16.gmra.mrb[0].mxu0 %v704
      %v874 = vpop.f32.mrb[0].mxu0
      %v875 = vadd.f32 0.0, %v874
      %v876 = vpop.f32.mrb[0].mxu0
      %v877 = vpop.f32.mrb[0].mxu0
      %v878 = vadd.f32 0.0, %v877
      %v879 = vpop.f32.mrb[0].mxu0
      %880 = vmatprep.mubr.bf16.mxu0 0
      %881 = vmatmul.mubr.bf16.gmra.mrb[0].mxu0 %v705
      %v882 = vpop.f32.mrb[0].mxu0
      %v883 = vadd.f32 0.0, %v882
      %v884 = vpop.f32.mrb[0].mxu0
      %v885 = vpop.f32.mrb[0].mxu0
      %v886 = vadd.f32 0.0, %v885
      %v887 = vpop.f32.mrb[0].mxu0
      %888 = vmatprep.mubr.bf16.mxu0 0
      %889 = vmatmul.mubr.bf16.gmra.mrb[0].mxu0 %v706
      %v890 = vpop.f32.mrb[0].mxu0
      %v891 = vadd.f32 0.0, %v890
      %v892 = vpop.f32.mrb[0].mxu0
      %v893 = vpop.f32.mrb[0].mxu0
      %v894 = vadd.f32 0.0, %v893
      %v895 = vpop.f32.mrb[0].mxu0
      %896 = vmatprep.mubr.bf16.mxu0 0
      %897 = vmatmul.mubr.bf16.gmra.mrb[0].mxu0 %v707
      %v898 = vpop.f32.mrb[0].mxu0
      %v899 = vadd.f32 0.0, %v898
      %v900 = vpop.f32.mrb[0].mxu0
      %v901 = vpop.f32.mrb[0].mxu0
      %v902 = vadd.f32 0.0, %v901
      %v903 = vpop.f32.mrb[0].mxu0
      %904 = vmatprep.mubr.bf16.mxu0 0
      %905 = vmatmul.mubr.bf16.gmra.mrb[0].mxu0 %v708
      %v906 = vpop.f32.mrb[0].mxu0
      %v907 = vadd.f32 0.0, %v906
      %v908 = vpop.f32.mrb[0].mxu0
      %v909 = vpop.f32.mrb[0].mxu0
      %v910 = vadd.f32 0.0, %v909
      %v911 = vpop.f32.mrb[0].mxu0
      %912 = vmatprep.mubr.bf16.mxu0 0
      %913 = vmatmul.mubr.bf16.gmra.mrb[0].mxu0 %v709
      %v914 = vpop.f32.mrb[0].mxu0
      %v915 = vadd.f32 0.0, %v914
      %v916 = vpop.f32.mrb[0].mxu0
      %v917 = vpop.f32.mrb[0].mxu0
      %v918 = vadd.f32 0.0, %v917
      %v919 = vpop.f32.mrb[0].mxu0
      %920 = vmatprep.mubr.bf16.mxu0 0
      %921 = vmatmul.mubr.bf16.gmra.mrb[0].mxu0 %v710
      %v922 = vpop.f32.mrb[0].mxu0
      %v923 = vadd.f32 0.0, %v922
      %v924 = vpop.f32.mrb[0].mxu0
      %v925 = vpop.f32.mrb[0].mxu0
      %v926 = vadd.f32 0.0, %v925
      %v927 = vpop.f32.mrb[0].mxu0
      %928 = vmatprep.mubr.bf16.mxu0 0
      %929 = vmatmul.mubr.bf16.gmra.mrb[0].mxu0 %v711
      %v930 = vpop.f32.mrb[0].mxu0
      %v931 = vadd.f32 0.0, %v930
      %v932 = vpop.f32.mrb[0].mxu0
      %v933 = vpop.f32.mrb[0].mxu0
      %v934 = vadd.f32 0.0, %v933
      %v935 = vpop.f32.mrb[0].mxu0
      %936 = vdwg.mxu0
      %v937 = vld [vmem:[%s2] sm:$0x1]
      %v939 = vlaneseq
      %v940 = vshrl.u32 %v939, 7
      %v941 = vsub.s32 0, %v940
      %v942 = vrot.slane %v937, %v941
      %v944 = vmul.f32 %v811, %v942
      %v945 = vmul.f32 %v814, %v942
      %v946 = vmul.f32 %v819, %v942
      %v947 = vmul.f32 %v822, %v942
      %v948 = vmul.f32 %v827, %v942
      %v949 = vmul.f32 %v830, %v942
      %v950 = vmul.f32 %v835, %v942
      %v951 = vmul.f32 %v838, %v942
      %v952 = vmul.f32 %v843, %v942
      %v953 = vmul.f32 %v846, %v942
      %v954 = vmul.f32 %v851, %v942
      %v955 = vmul.f32 %v854, %v942
      %v956 = vmul.f32 %v859, %v942
      %v957 = vmul.f32 %v862, %v942
      %v958 = vmul.f32 %v867, %v942
      %v959 = vmul.f32 %v870, %v942
      %v960 = vmul.f32 %v875, %v942
      %v961 = vmul.f32 %v878, %v942
      %v962 = vmul.f32 %v883, %v942
      %v963 = vmul.f32 %v886, %v942
      %v964 = vmul.f32 %v891, %v942
      %v965 = vmul.f32 %v894, %v942
      %v966 = vmul.f32 %v899, %v942
      %v967 = vmul.f32 %v902, %v942
      %v968 = vmul.f32 %v907, %v942
      %v969 = vmul.f32 %v910, %v942
      %v970 = vmul.f32 %v915, %v942
      %v971 = vmul.f32 %v918, %v942
      %v972 = vmul.f32 %v923, %v942
      %v973 = vmul.f32 %v926, %v942
      %v974 = vmul.f32 %v931, %v942
      %v975 = vmul.f32 %v934, %v942
      %v976 = vld [vmem:[%s3] sm:$0x1]
      %v978 = vlaneseq
      %v979 = vshrl.u32 %v978, 7
      %v980 = vsub.s32 0, %v979
      %v981 = vrot.slane %v976, %v980
      %v983 = vadd.f32 %v944, %v981
      %v984 = vadd.f32 %v945, %v981
      %v985 = vadd.f32 %v946, %v981
      %v986 = vadd.f32 %v947, %v981
      %v987 = vadd.f32 %v948, %v981
      %v988 = vadd.f32 %v949, %v981
      %v989 = vadd.f32 %v950, %v981
      %v990 = vadd.f32 %v951, %v981
      %v991 = vadd.f32 %v952, %v981
      %v992 = vadd.f32 %v953, %v981
      %v993 = vadd.f32 %v954, %v981
      %v994 = vadd.f32 %v955, %v981
      %v995 = vadd.f32 %v956, %v981
      %v996 = vadd.f32 %v957, %v981
      %v997 = vadd.f32 %v958, %v981
      %v998 = vadd.f32 %v959, %v981
      %v999 = vadd.f32 %v960, %v981
      %v1000 = vadd.f32 %v961, %v981
      %v1001 = vadd.f32 %v962, %v981
      %v1002 = vadd.f32 %v963, %v981
      %v1003 = vadd.f32 %v964, %v981
      %v1004 = vadd.f32 %v965, %v981
      %v1005 = vadd.f32 %v966, %v981
      %v1006 = vadd.f32 %v967, %v981
      %v1007 = vadd.f32 %v968, %v981
      %v1008 = vadd.f32 %v969, %v981
      %v1009 = vadd.f32 %v970, %v981
      %v1010 = vadd.f32 %v971, %v981
      %v1011 = vadd.f32 %v972, %v981
      %v1012 = vadd.f32 %v973, %v981
      %v1013 = vadd.f32 %v974, %v981
      %v1014 = vadd.f32 %v975, %v981
      %v1015 = vmax.f32 %v983, 0.0
      %v1016 = vmax.f32 %v984, 0.0
      %v1017 = vmax.f32 %v985, 0.0
      %v1018 = vmax.f32 %v986, 0.0
      %v1019 = vmax.f32 %v987, 0.0
      %v1020 = vmax.f32 %v988, 0.0
      %v1021 = vmax.f32 %v989, 0.0
      %v1022 = vmax.f32 %v990, 0.0
      %v1023 = vmax.f32 %v991, 0.0
      %v1024 = vmax.f32 %v992, 0.0
      %v1025 = vmax.f32 %v993, 0.0
      %v1026 = vmax.f32 %v994, 0.0
      %v1027 = vmax.f32 %v995, 0.0
      %v1028 = vmax.f32 %v996, 0.0
      %v1029 = vmax.f32 %v997, 0.0
      %v1030 = vmax.f32 %v998, 0.0
      %v1031 = vmax.f32 %v999, 0.0
      %v1032 = vmax.f32 %v1000, 0.0
      %v1033 = vmax.f32 %v1001, 0.0
      %v1034 = vmax.f32 %v1002, 0.0
      %v1035 = vmax.f32 %v1003, 0.0
      %v1036 = vmax.f32 %v1004, 0.0
      %v1037 = vmax.f32 %v1005, 0.0
      %v1038 = vmax.f32 %v1006, 0.0
      %v1039 = vmax.f32 %v1007, 0.0
      %v1040 = vmax.f32 %v1008, 0.0
      %v1041 = vmax.f32 %v1009, 0.0
      %v1042 = vmax.f32 %v1010, 0.0
      %v1043 = vmax.f32 %v1011, 0.0
      %v1044 = vmax.f32 %v1012, 0.0
      %v1045 = vmax.f32 %v1013, 0.0
      %v1046 = vmax.f32 %v1014, 0.0
      %v1047 = vpack.c.bf16 %v1015, %v1015
      %v1048 = vpack.c.bf16 %v1016, %v1016
      %v1049 = vpack.c.bf16 %v1017, %v1017
      %v1050 = vpack.c.bf16 %v1018, %v1018
      %v1051 = vpack.c.bf16 %v1019, %v1019
      %v1052 = vpack.c.bf16 %v1020, %v1020
      %v1053 = vpack.c.bf16 %v1021, %v1021
      %v1054 = vpack.c.bf16 %v1022, %v1022
      %v1055 = vpack.c.bf16 %v1023, %v1023
      %v1056 = vpack.c.bf16 %v1024, %v1024
      %v1057 = vpack.c.bf16 %v1025, %v1025
      %v1058 = vpack.c.bf16 %v1026, %v1026
      %v1059 = vpack.c.bf16 %v1027, %v1027
      %v1060 = vpack.c.bf16 %v1028, %v1028
      %v1061 = vpack.c.bf16 %v1029, %v1029
      %v1062 = vpack.c.bf16 %v1030, %v1030
      %v1063 = vpack.c.bf16 %v1031, %v1031
      %v1064 = vpack.c.bf16 %v1032, %v1032
      %v1065 = vpack.c.bf16 %v1033, %v1033
      %v1066 = vpack.c.bf16 %v1034, %v1034
      %v1067 = vpack.c.bf16 %v1035, %v1035
      %v1068 = vpack.c.bf16 %v1036, %v1036
      %v1069 = vpack.c.bf16 %v1037, %v1037
      %v1070 = vpack.c.bf16 %v1038, %v1038
      %v1071 = vpack.c.bf16 %v1039, %v1039
      %v1072 = vpack.c.bf16 %v1040, %v1040
      %v1073 = vpack.c.bf16 %v1041, %v1041
      %v1074 = vpack.c.bf16 %v1042, %v1042
      %v1075 = vpack.c.bf16 %v1043, %v1043
      %v1076 = vpack.c.bf16 %v1044, %v1044
      %v1077 = vpack.c.bf16 %v1045, %v1045
      %v1078 = vpack.c.bf16 %v1046, %v1046
      %v1111 = vunpack.c.l.b16 %v1047
      %v1112 = vunpack.c.l.b16 %v1048
      %v1113 = vunpack.c.l.b16 %v1049
      %v1114 = vunpack.c.l.b16 %v1050
      %v1115 = vunpack.c.l.b16 %v1051
      %v1116 = vunpack.c.l.b16 %v1052
      %v1117 = vunpack.c.l.b16 %v1053
      %v1118 = vunpack.c.l.b16 %v1054
      %v1119 = vunpack.c.l.b16 %v1055
      %v1120 = vunpack.c.l.b16 %v1056
      %v1121 = vunpack.c.l.b16 %v1057
      %v1122 = vunpack.c.l.b16 %v1058
      %v1123 = vunpack.c.l.b16 %v1059
      %v1124 = vunpack.c.l.b16 %v1060
      %v1125 = vunpack.c.l.b16 %v1061
      %v1126 = vunpack.c.l.b16 %v1062
      %v1127 = vunpack.c.l.b16 %v1063
      %v1128 = vunpack.c.l.b16 %v1064
      %v1129 = vunpack.c.l.b16 %v1065
      %v1130 = vunpack.c.l.b16 %v1066
      %v1131 = vunpack.c.l.b16 %v1067
      %v1132 = vunpack.c.l.b16 %v1068
      %v1133 = vunpack.c.l.b16 %v1069
      %v1134 = vunpack.c.l.b16 %v1070
      %v1135 = vunpack.c.l.b16 %v1071
      %v1136 = vunpack.c.l.b16 %v1072
      %v1137 = vunpack.c.l.b16 %v1073
      %v1138 = vunpack.c.l.b16 %v1074
      %v1139 = vunpack.c.l.b16 %v1075
      %v1140 = vunpack.c.l.b16 %v1076
      %v1141 = vunpack.c.l.b16 %v1077
      %v1142 = vunpack.c.l.b16 %v1078
      %v1143 = vpack.c.b16 %v1111, %v1111
      %v1144 = vpack.c.b16 %v1112, %v1112
      %v1145 = vpack.c.b16 %v1113, %v1113
      %v1146 = vpack.c.b16 %v1114, %v1114
      %v1147 = vpack.c.b16 %v1115, %v1115
      %v1148 = vpack.c.b16 %v1116, %v1116
      %v1149 = vpack.c.b16 %v1117, %v1117
      %v1150 = vpack.c.b16 %v1118, %v1118
      %v1151 = vpack.c.b16 %v1119, %v1119
      %v1152 = vpack.c.b16 %v1120, %v1120
      %v1153 = vpack.c.b16 %v1121, %v1121
      %v1154 = vpack.c.b16 %v1122, %v1122
      %v1155 = vpack.c.b16 %v1123, %v1123
      %v1156 = vpack.c.b16 %v1124, %v1124
      %v1157 = vpack.c.b16 %v1125, %v1125
      %v1158 = vpack.c.b16 %v1126, %v1126
      %v1159 = vpack.c.b16 %v1127, %v1127
      %v1160 = vpack.c.b16 %v1128, %v1128
      %v1161 = vpack.c.b16 %v1129, %v1129
      %v1162 = vpack.c.b16 %v1130, %v1130
      %v1163 = vpack.c.b16 %v1131, %v1131
      %v1164 = vpack.c.b16 %v1132, %v1132
      %v1165 = vpack.c.b16 %v1133, %v1133
      %v1166 = vpack.c.b16 %v1134, %v1134
      %v1167 = vpack.c.b16 %v1135, %v1135
      %v1168 = vpack.c.b16 %v1136, %v1136
      %v1169 = vpack.c.b16 %v1137, %v1137
      %v1170 = vpack.c.b16 %v1138, %v1138
      %v1171 = vpack.c.b16 %v1139, %v1139
      %v1172 = vpack.c.b16 %v1140, %v1140
      %v1173 = vpack.c.b16 %v1141, %v1141
      %v1174 = vpack.c.b16 %v1142, %v1142
      %v1176 = vshrl.u32 %v1143, 16
      %v1178 = vrot.slane %v1176, 7
      %v1179 = vshll.u32 %v1143, 16
      %v1181 = vor.u32 %v1178, %v1179
      %v1182 = vrot.slane %v1178, 4
      %v1184 = vshrl.u32 %v1144, 16
      %v1186 = vrot.slane %v1184, 7
      %v1187 = vshll.u32 %v1144, 16
      %v1189 = vor.u32 %v1186, %v1187
      %v1190 = vrot.slane %v1186, 4
      %v1192 = vshrl.u32 %v1145, 16
      %v1194 = vrot.slane %v1192, 7
      %v1195 = vshll.u32 %v1145, 16
      %v1197 = vor.u32 %v1194, %v1195
      %v1198 = vrot.slane %v1194, 4
      %v1200 = vshrl.u32 %v1146, 16
      %v1202 = vrot.slane %v1200, 7
      %v1203 = vshll.u32 %v1146, 16
      %v1205 = vor.u32 %v1202, %v1203
      %v1206 = vrot.slane %v1202, 4
      %v1208 = vshrl.u32 %v1147, 16
      %v1210 = vrot.slane %v1208, 7
      %v1211 = vshll.u32 %v1147, 16
      %v1213 = vor.u32 %v1210, %v1211
      %v1214 = vrot.slane %v1210, 4
      %v1216 = vshrl.u32 %v1148, 16
      %v1218 = vrot.slane %v1216, 7
      %v1219 = vshll.u32 %v1148, 16
      %v1221 = vor.u32 %v1218, %v1219
      %v1222 = vrot.slane %v1218, 4
      %v1224 = vshrl.u32 %v1149, 16
      %v1226 = vrot.slane %v1224, 7
      %v1227 = vshll.u32 %v1149, 16
      %v1229 = vor.u32 %v1226, %v1227
      %v1230 = vrot.slane %v1226, 4
      %v1232 = vshrl.u32 %v1150, 16
      %v1234 = vrot.slane %v1232, 7
      %v1235 = vshll.u32 %v1150, 16
      %v1237 = vor.u32 %v1234, %v1235
      %v1238 = vrot.slane %v1234, 4
      %v1240 = vshrl.u32 %v1151, 16
      %v1242 = vrot.slane %v1240, 7
      %v1243 = vshll.u32 %v1151, 16
      %v1245 = vor.u32 %v1242, %v1243
      %v1246 = vrot.slane %v1242, 4
      %v1248 = vshrl.u32 %v1152, 16
      %v1250 = vrot.slane %v1248, 7
      %v1251 = vshll.u32 %v1152, 16
      %v1253 = vor.u32 %v1250, %v1251
      %v1254 = vrot.slane %v1250, 4
      %v1256 = vshrl.u32 %v1153, 16
      %v1258 = vrot.slane %v1256, 7
      %v1259 = vshll.u32 %v1153, 16
      %v1261 = vor.u32 %v1258, %v1259
      %v1262 = vrot.slane %v1258, 4
      %v1264 = vshrl.u32 %v1154, 16
      %v1266 = vrot.slane %v1264, 7
      %v1267 = vshll.u32 %v1154, 16
      %v1269 = vor.u32 %v1266, %v1267
      %v1270 = vrot.slane %v1266, 4
      %v1272 = vshrl.u32 %v1155, 16
      %v1274 = vrot.slane %v1272, 7
      %v1275 = vshll.u32 %v1155, 16
      %v1277 = vor.u32 %v1274, %v1275
      %v1278 = vrot.slane %v1274, 4
      %v1280 = vshrl.u32 %v1156, 16
      %v1282 = vrot.slane %v1280, 7
      %v1283 = vshll.u32 %v1156, 16
      %v1285 = vor.u32 %v1282, %v1283
      %v1286 = vrot.slane %v1282, 4
      %v1288 = vshrl.u32 %v1157, 16
      %v1290 = vrot.slane %v1288, 7
      %v1291 = vshll.u32 %v1157, 16
      %v1293 = vor.u32 %v1290, %v1291
      %v1294 = vrot.slane %v1290, 4
      %v1296 = vshrl.u32 %v1158, 16
      %v1298 = vrot.slane %v1296, 7
      %v1299 = vshll.u32 %v1158, 16
      %v1301 = vor.u32 %v1298, %v1299
      %v1302 = vrot.slane %v1298, 4
      %v1304 = vshrl.u32 %v1159, 16
      %v1306 = vrot.slane %v1304, 7
      %v1307 = vshll.u32 %v1159, 16
      %v1309 = vor.u32 %v1306, %v1307
      %v1310 = vrot.slane %v1306, 4
      %v1312 = vshrl.u32 %v1160, 16
      %v1314 = vrot.slane %v1312, 7
      %v1315 = vshll.u32 %v1160, 16
      %v1317 = vor.u32 %v1314, %v1315
      %v1318 = vrot.slane %v1314, 4
      %v1320 = vshrl.u32 %v1161, 16
      %v1322 = vrot.slane %v1320, 7
      %v1323 = vshll.u32 %v1161, 16
      %v1325 = vor.u32 %v1322, %v1323
      %v1326 = vrot.slane %v1322, 4
      %v1328 = vshrl.u32 %v1162, 16
      %v1330 = vrot.slane %v1328, 7
      %v1331 = vshll.u32 %v1162, 16
      %v1333 = vor.u32 %v1330, %v1331
      %v1334 = vrot.slane %v1330, 4
      %v1336 = vshrl.u32 %v1163, 16
      %v1338 = vrot.slane %v1336, 7
      %v1339 = vshll.u32 %v1163, 16
      %v1341 = vor.u32 %v1338, %v1339
      %v1342 = vrot.slane %v1338, 4
      %v1344 = vshrl.u32 %v1164, 16
      %v1346 = vrot.slane %v1344, 7
      %v1347 = vshll.u32 %v1164, 16
      %v1349 = vor.u32 %v1346, %v1347
      %v1350 = vrot.slane %v1346, 4
      %v1352 = vshrl.u32 %v1165, 16
      %v1354 = vrot.slane %v1352, 7
      %v1355 = vshll.u32 %v1165, 16
      %v1357 = vor.u32 %v1354, %v1355
      %v1358 = vrot.slane %v1354, 4
      %v1360 = vshrl.u32 %v1166, 16
      %v1362 = vrot.slane %v1360, 7
      %v1363 = vshll.u32 %v1166, 16
      %v1365 = vor.u32 %v1362, %v1363
      %v1366 = vrot.slane %v1362, 4
      %v1368 = vshrl.u32 %v1167, 16
      %v1370 = vrot.slane %v1368, 7
      %v1371 = vshll.u32 %v1167, 16
      %v1373 = vor.u32 %v1370, %v1371
      %v1374 = vrot.slane %v1370, 4
      %v1376 = vshrl.u32 %v1168, 16
      %v1378 = vrot.slane %v1376, 7
      %v1379 = vshll.u32 %v1168, 16
      %v1381 = vor.u32 %v1378, %v1379
      %v1382 = vrot.slane %v1378, 4
      %v1384 = vshrl.u32 %v1169, 16
      %v1386 = vrot.slane %v1384, 7
      %v1387 = vshll.u32 %v1169, 16
      %v1389 = vor.u32 %v1386, %v1387
      %v1390 = vrot.slane %v1386, 4
      %v1392 = vshrl.u32 %v1170, 16
      %v1394 = vrot.slane %v1392, 7
      %v1395 = vshll.u32 %v1170, 16
      %v1397 = vor.u32 %v1394, %v1395
      %v1398 = vrot.slane %v1394, 4
      %v1400 = vshrl.u32 %v1171, 16
      %v1402 = vrot.slane %v1400, 7
      %v1403 = vshll.u32 %v1171, 16
      %v1405 = vor.u32 %v1402, %v1403
      %v1406 = vrot.slane %v1402, 4
      %v1408 = vshrl.u32 %v1172, 16
      %v1410 = vrot.slane %v1408, 7
      %v1411 = vshll.u32 %v1172, 16
      %v1413 = vor.u32 %v1410, %v1411
      %v1414 = vrot.slane %v1410, 4
      %v1416 = vshrl.u32 %v1173, 16
      %v1418 = vrot.slane %v1416, 7
      %v1419 = vshll.u32 %v1173, 16
      %v1421 = vor.u32 %v1418, %v1419
      %v1422 = vrot.slane %v1418, 4
      %v1424 = vshrl.u32 %v1174, 16
      %v1426 = vrot.slane %v1424, 7
      %v1427 = vshll.u32 %v1174, 16
      %v1429 = vor.u32 %v1426, %v1427
      %v1430 = vrot.slane %v1426, 4
      %vm1495 = vcmask 1043456
      %vm1496 = vmand %vm1495, %vm518
      %v1497 = vld [vmem:[%s418] sm:$0xf]
      %v1498 = vsel %vm1496, %v1181, %v1497
      %1499 = vst [vmem:[%s418] sm:$0xf] %v1498
      %v1500 = vld [vmem:[%s418 + $0x4] sm:$0x1]
      %v1501 = vsel %vm421, %v1182, %v1500
      %1502 = vst [vmem:[%s418 + $0x4] sm:$0x1] %v1501
      %v1503 = vld [vmem:[%s418 + $0x8] sm:$0xf]
      %v1504 = vsel %vm1496, %v1189, %v1503
      %1505 = vst [vmem:[%s418 + $0x8] sm:$0xf] %v1504
      %v1506 = vld [vmem:[%s418 + $0xc] sm:$0x1]
      %v1507 = vsel %vm421, %v1190, %v1506
      %1508 = vst [vmem:[%s418 + $0xc] sm:$0x1] %v1507
      %v1509 = vld [vmem:[%s418 + $0x10] sm:$0xf]
      %v1510 = vsel %vm1496, %v1197, %v1509
      %1511 = vst [vmem:[%s418 + $0x10] sm:$0xf] %v1510
      %v1512 = vld [vmem:[%s418 + $0x14] sm:$0x1]
      %v1513 = vsel %vm421, %v1198, %v1512
      %1514 = vst [vmem:[%s418 + $0x14] sm:$0x1] %v1513
      %v1515 = vld [vmem:[%s418 + $0x18] sm:$0xf]
      %v1516 = vsel %vm1496, %v1205, %v1515
      %1517 = vst [vmem:[%s418 + $0x18] sm:$0xf] %v1516
      %v1518 = vld [vmem:[%s418 + $0x1c] sm:$0x1]
      %v1519 = vsel %vm421, %v1206, %v1518
      %1520 = vst [vmem:[%s418 + $0x1c] sm:$0x1] %v1519
      %v1521 = vld [vmem:[%s418 + $0x20] sm:$0xf]
      %v1522 = vsel %vm1496, %v1213, %v1521
      %1523 = vst [vmem:[%s418 + $0x20] sm:$0xf] %v1522
      %v1524 = vld [vmem:[%s418 + $0x24] sm:$0x1]
      %v1525 = vsel %vm421, %v1214, %v1524
      %1526 = vst [vmem:[%s418 + $0x24] sm:$0x1] %v1525
      %v1527 = vld [vmem:[%s418 + $0x28] sm:$0xf]
      %v1528 = vsel %vm1496, %v1221, %v1527
      %1529 = vst [vmem:[%s418 + $0x28] sm:$0xf] %v1528
      %v1530 = vld [vmem:[%s418 + $0x2c] sm:$0x1]
      %v1531 = vsel %vm421, %v1222, %v1530
      %1532 = vst [vmem:[%s418 + $0x2c] sm:$0x1] %v1531
      %v1533 = vld [vmem:[%s418 + $0x30] sm:$0xf]
      %v1534 = vsel %vm1496, %v1229, %v1533
      %1535 = vst [vmem:[%s418 + $0x30] sm:$0xf] %v1534
      %v1536 = vld [vmem:[%s418 + $0x34] sm:$0x1]
      %v1537 = vsel %vm421, %v1230, %v1536
      %1538 = vst [vmem:[%s418 + $0x34] sm:$0x1] %v1537
      %v1539 = vld [vmem:[%s418 + $0x38] sm:$0xf]
      %v1540 = vsel %vm1496, %v1237, %v1539
      %1541 = vst [vmem:[%s418 + $0x38] sm:$0xf] %v1540
      %v1542 = vld [vmem:[%s418 + $0x3c] sm:$0x1]
      %v1543 = vsel %vm421, %v1238, %v1542
      %1544 = vst [vmem:[%s418 + $0x3c] sm:$0x1] %v1543
      %v1545 = vld [vmem:[%s418 + $0x50] sm:$0xf]
      %v1546 = vsel %vm1496, %v1245, %v1545
      %1547 = vst [vmem:[%s418 + $0x50] sm:$0xf] %v1546
      %v1548 = vld [vmem:[%s418 + $0x54] sm:$0x1]
      %v1549 = vsel %vm421, %v1246, %v1548
      %1550 = vst [vmem:[%s418 + $0x54] sm:$0x1] %v1549
      %v1551 = vld [vmem:[%s418 + $0x58] sm:$0xf]
      %v1552 = vsel %vm1496, %v1253, %v1551
      %1553 = vst [vmem:[%s418 + $0x58] sm:$0xf] %v1552
      %v1554 = vld [vmem:[%s418 + $0x5c] sm:$0x1]
      %v1555 = vsel %vm421, %v1254, %v1554
      %1556 = vst [vmem:[%s418 + $0x5c] sm:$0x1] %v1555
      %v1557 = vld [vmem:[%s418 + $0x60] sm:$0xf]
      %v1558 = vsel %vm1496, %v1261, %v1557
      %1559 = vst [vmem:[%s418 + $0x60] sm:$0xf] %v1558
      %v1560 = vld [vmem:[%s418 + $0x64] sm:$0x1]
      %v1561 = vsel %vm421, %v1262, %v1560
      %1562 = vst [vmem:[%s418 + $0x64] sm:$0x1] %v1561
      %v1563 = vld [vmem:[%s418 + $0x68] sm:$0xf]
      %v1564 = vsel %vm1496, %v1269, %v1563
      %1565 = vst [vmem:[%s418 + $0x68] sm:$0xf] %v1564
      %v1566 = vld [vmem:[%s418 + $0x6c] sm:$0x1]
      %v1567 = vsel %vm421, %v1270, %v1566
      %1568 = vst [vmem:[%s418 + $0x6c] sm:$0x1] %v1567
      %v1569 = vld [vmem:[%s418 + $0x70] sm:$0xf]
      %v1570 = vsel %vm1496, %v1277, %v1569
      %1571 = vst [vmem:[%s418 + $0x70] sm:$0xf] %v1570
      %v1572 = vld [vmem:[%s418 + $0x74] sm:$0x1]
      %v1573 = vsel %vm421, %v1278, %v1572
      %1574 = vst [vmem:[%s418 + $0x74] sm:$0x1] %v1573
      %v1575 = vld [vmem:[%s418 + $0x78] sm:$0xf]
      %v1576 = vsel %vm1496, %v1285, %v1575
      %1577 = vst [vmem:[%s418 + $0x78] sm:$0xf] %v1576
      %v1578 = vld [vmem:[%s418 + $0x7c] sm:$0x1]
      %v1579 = vsel %vm421, %v1286, %v1578
      %1580 = vst [vmem:[%s418 + $0x7c] sm:$0x1] %v1579
      %v1581 = vld [vmem:[%s418 + $0x80] sm:$0xf]
      %v1582 = vsel %vm1496, %v1293, %v1581
      %1583 = vst [vmem:[%s418 + $0x80] sm:$0xf] %v1582
      %v1584 = vld [vmem:[%s418 + $0x84] sm:$0x1]
      %v1585 = vsel %vm421, %v1294, %v1584
      %1586 = vst [vmem:[%s418 + $0x84] sm:$0x1] %v1585
      %v1587 = vld [vmem:[%s418 + $0x88] sm:$0xf]
      %v1588 = vsel %vm1496, %v1301, %v1587
      %1589 = vst [vmem:[%s418 + $0x88] sm:$0xf] %v1588
      %v1590 = vld [vmem:[%s418 + $0x8c] sm:$0x1]
      %v1591 = vsel %vm421, %v1302, %v1590
      %1592 = vst [vmem:[%s418 + $0x8c] sm:$0x1] %v1591
      %v1593 = vld [vmem:[%s418 + $0xa0] sm:$0xf]
      %v1594 = vsel %vm1496, %v1309, %v1593
      %1595 = vst [vmem:[%s418 + $0xa0] sm:$0xf] %v1594
      %v1596 = vld [vmem:[%s418 + $0xa4] sm:$0x1]
      %v1597 = vsel %vm421, %v1310, %v1596
      %1598 = vst [vmem:[%s418 + $0xa4] sm:$0x1] %v1597
      %v1599 = vld [vmem:[%s418 + $0xa8] sm:$0xf]
      %v1600 = vsel %vm1496, %v1317, %v1599
      %1601 = vst [vmem:[%s418 + $0xa8] sm:$0xf] %v1600
      %v1602 = vld [vmem:[%s418 + $0xac] sm:$0x1]
      %v1603 = vsel %vm421, %v1318, %v1602
      %1604 = vst [vmem:[%s418 + $0xac] sm:$0x1] %v1603
      %v1605 = vld [vmem:[%s418 + $0xb0] sm:$0xf]
      %v1606 = vsel %vm1496, %v1325, %v1605
      %1607 = vst [vmem:[%s418 + $0xb0] sm:$0xf] %v1606
      %v1608 = vld [vmem:[%s418 + $0xb4] sm:$0x1]
      %v1609 = vsel %vm421, %v1326, %v1608
      %1610 = vst [vmem:[%s418 + $0xb4] sm:$0x1] %v1609
      %v1611 = vld [vmem:[%s418 + $0xb8] sm:$0xf]
      %v1612 = vsel %vm1496, %v1333, %v1611
      %1613 = vst [vmem:[%s418 + $0xb8] sm:$0xf] %v1612
      %v1614 = vld [vmem:[%s418 + $0xbc] sm:$0x1]
      %v1615 = vsel %vm421, %v1334, %v1614
      %1616 = vst [vmem:[%s418 + $0xbc] sm:$0x1] %v1615
      %v1617 = vld [vmem:[%s418 + $0xc0] sm:$0xf]
      %v1618 = vsel %vm1496, %v1341, %v1617
      %1619 = vst [vmem:[%s418 + $0xc0] sm:$0xf] %v1618
      %v1620 = vld [vmem:[%s418 + $0xc4] sm:$0x1]
      %v1621 = vsel %vm421, %v1342, %v1620
      %1622 = vst [vmem:[%s418 + $0xc4] sm:$0x1] %v1621
      %v1623 = vld [vmem:[%s418 + $0xc8] sm:$0xf]
      %v1624 = vsel %vm1496, %v1349, %v1623
      %1625 = vst [vmem:[%s418 + $0xc8] sm:$0xf] %v1624
      %v1626 = vld [vmem:[%s418 + $0xcc] sm:$0x1]
      %v1627 = vsel %vm421, %v1350, %v1626
      %1628 = vst [vmem:[%s418 + $0xcc] sm:$0x1] %v1627
      %v1629 = vld [vmem:[%s418 + $0xd0] sm:$0xf]
      %v1630 = vsel %vm1496, %v1357, %v1629
      %1631 = vst [vmem:[%s418 + $0xd0] sm:$0xf] %v1630
      %v1632 = vld [vmem:[%s418 + $0xd4] sm:$0x1]
      %v1633 = vsel %vm421, %v1358, %v1632
      %1634 = vst [vmem:[%s418 + $0xd4] sm:$0x1] %v1633
      %v1635 = vld [vmem:[%s418 + $0xd8] sm:$0xf]
      %v1636 = vsel %vm1496, %v1365, %v1635
      %1637 = vst [vmem:[%s418 + $0xd8] sm:$0xf] %v1636
      %v1638 = vld [vmem:[%s418 + $0xdc] sm:$0x1]
      %v1639 = vsel %vm421, %v1366, %v1638
      %1640 = vst [vmem:[%s418 + $0xdc] sm:$0x1] %v1639
      %v1641 = vld [vmem:[%s418 + $0xf0] sm:$0xf]
      %v1642 = vsel %vm1496, %v1373, %v1641
      %1643 = vst [vmem:[%s418 + $0xf0] sm:$0xf] %v1642
      %v1644 = vld [vmem:[%s418 + $0xf4] sm:$0x1]
      %v1645 = vsel %vm421, %v1374, %v1644
      %1646 = vst [vmem:[%s418 + $0xf4] sm:$0x1] %v1645
      %v1647 = vld [vmem:[%s418 + $0xf8] sm:$0xf]
      %v1648 = vsel %vm1496, %v1381, %v1647
      %1649 = vst [vmem:[%s418 + $0xf8] sm:$0xf] %v1648
      %v1650 = vld [vmem:[%s418 + $0xfc] sm:$0x1]
      %v1651 = vsel %vm421, %v1382, %v1650
      %1652 = vst [vmem:[%s418 + $0xfc] sm:$0x1] %v1651
      %v1653 = vld [vmem:[%s418 + $0x100] sm:$0xf]
      %v1654 = vsel %vm1496, %v1389, %v1653
      %1655 = vst [vmem:[%s418 + $0x100] sm:$0xf] %v1654
      %v1656 = vld [vmem:[%s418 + $0x104] sm:$0x1]
      %v1657 = vsel %vm421, %v1390, %v1656
      %1658 = vst [vmem:[%s418 + $0x104] sm:$0x1] %v1657
      %v1659 = vld [vmem:[%s418 + $0x108] sm:$0xf]
      %v1660 = vsel %vm1496, %v1397, %v1659
      %1661 = vst [vmem:[%s418 + $0x108] sm:$0xf] %v1660
      %v1662 = vld [vmem:[%s418 + $0x10c] sm:$0x1]
      %v1663 = vsel %vm421, %v1398, %v1662
      %1664 = vst [vmem:[%s418 + $0x10c] sm:$0x1] %v1663
      %v1665 = vld [vmem:[%s418 + $0x110] sm:$0xf]
      %v1666 = vsel %vm1496, %v1405, %v1665
      %1667 = vst [vmem:[%s418 + $0x110] sm:$0xf] %v1666
      %v1668 = vld [vmem:[%s418 + $0x114] sm:$0x1]
      %v1669 = vsel %vm421, %v1406, %v1668
      %1670 = vst [vmem:[%s418 + $0x114] sm:$0x1] %v1669
      %v1671 = vld [vmem:[%s418 + $0x118] sm:$0xf]
      %v1672 = vsel %vm1496, %v1413, %v1671
      %1673 = vst [vmem:[%s418 + $0x118] sm:$0xf] %v1672
      %v1674 = vld [vmem:[%s418 + $0x11c] sm:$0x1]
      %v1675 = vsel %vm421, %v1414, %v1674
      %1676 = vst [vmem:[%s418 + $0x11c] sm:$0x1] %v1675
      %v1677 = vld [vmem:[%s418 + $0x120] sm:$0xf]
      %v1678 = vsel %vm1496, %v1421, %v1677
      %1679 = vst [vmem:[%s418 + $0x120] sm:$0xf] %v1678
      %v1680 = vld [vmem:[%s418 + $0x124] sm:$0x1]
      %v1681 = vsel %vm421, %v1422, %v1680
      %1682 = vst [vmem:[%s418 + $0x124] sm:$0x1] %v1681
      %v1683 = vld [vmem:[%s418 + $0x128] sm:$0xf]
      %v1684 = vsel %vm1496, %v1429, %v1683
      %1685 = vst [vmem:[%s418 + $0x128] sm:$0xf] %v1684
      %v1686 = vld [vmem:[%s418 + $0x12c] sm:$0x1]
      %v1687 = vsel %vm421, %v1430, %v1686
      %1688 = vst [vmem:[%s418 + $0x12c] sm:$0x1] %v1687
      %v1689 = vld [vmem:[#allocation2] sm:$0xf]
      %v1690 = vld [vmem:[#allocation2 + $0x8] sm:$0xf]
      %v1691 = vld [vmem:[#allocation2 + $0x10] sm:$0xf]
      %v1692 = vld [vmem:[#allocation2 + $0x18] sm:$0xf]
      %v1693 = vld [vmem:[#allocation2 + $0x20] sm:$0xf]
      %v1694 = vld [vmem:[#allocation2 + $0x28] sm:$0xf]
      %v1695 = vld [vmem:[#allocation2 + $0x30] sm:$0xf]
      %v1696 = vld [vmem:[#allocation2 + $0x38] sm:$0xf]
      %v1697 = vld [vmem:[#allocation2 + $0x50] sm:$0xf]
      %v1698 = vld [vmem:[#allocation2 + $0x58] sm:$0xf]
      %v1699 = vld [vmem:[#allocation2 + $0x60] sm:$0xf]
      %v1700 = vld [vmem:[#allocation2 + $0x68] sm:$0xf]
      %v1701 = vld [vmem:[#allocation2 + $0x70] sm:$0xf]
      %v1702 = vld [vmem:[#allocation2 + $0x78] sm:$0xf]
      %v1703 = vld [vmem:[#allocation2 + $0x80] sm:$0xf]
      %v1704 = vld [vmem:[#allocation2 + $0x88] sm:$0xf]
      %v1705 = vld [vmem:[#allocation2 + $0xa0] sm:$0xf]
      %v1706 = vld [vmem:[#allocation2 + $0xa8] sm:$0xf]
      %v1707 = vld [vmem:[#allocation2 + $0xb0] sm:$0xf]
      %v1708 = vld [vmem:[#allocation2 + $0xb8] sm:$0xf]
      %v1709 = vld [vmem:[#allocation2 + $0xc0] sm:$0xf]
      %v1710 = vld [vmem:[#allocation2 + $0xc8] sm:$0xf]
      %v1711 = vld [vmem:[#allocation2 + $0xd0] sm:$0xf]
      %v1712 = vld [vmem:[#allocation2 + $0xd8] sm:$0xf]
      %v1713 = vld [vmem:[#allocation2 + $0xf0] sm:$0xf]
      %v1714 = vld [vmem:[#allocation2 + $0xf8] sm:$0xf]
      %v1715 = vld [vmem:[#allocation2 + $0x100] sm:$0xf]
      %v1716 = vld [vmem:[#allocation2 + $0x108] sm:$0xf]
      %v1717 = vld [vmem:[#allocation2 + $0x110] sm:$0xf]
      %v1718 = vld [vmem:[#allocation2 + $0x118] sm:$0xf]
      %v1719 = vld [vmem:[#allocation2 + $0x120] sm:$0xf]
      %v1720 = vld [vmem:[#allocation2 + $0x128] sm:$0xf]
      %v1753 = vunpack.c.l.b16 %v1689
      %v1754 = vunpack.c.l.b16 %v1690
      %v1755 = vunpack.c.l.b16 %v1691
      %v1756 = vunpack.c.l.b16 %v1692
      %v1757 = vunpack.c.l.b16 %v1693
      %v1758 = vunpack.c.l.b16 %v1694
      %v1759 = vunpack.c.l.b16 %v1695
      %v1760 = vunpack.c.l.b16 %v1696
      %v1761 = vunpack.c.l.b16 %v1697
      %v1762 = vunpack.c.l.b16 %v1698
      %v1763 = vunpack.c.l.b16 %v1699
      %v1764 = vunpack.c.l.b16 %v1700
      %v1765 = vunpack.c.l.b16 %v1701
      %v1766 = vunpack.c.l.b16 %v1702
      %v1767 = vunpack.c.l.b16 %v1703
      %v1768 = vunpack.c.l.b16 %v1704
      %v1769 = vunpack.c.l.b16 %v1705
      %v1770 = vunpack.c.l.b16 %v1706
      %v1771 = vunpack.c.l.b16 %v1707
      %v1772 = vunpack.c.l.b16 %v1708
      %v1773 = vunpack.c.l.b16 %v1709
      %v1774 = vunpack.c.l.b16 %v1710
      %v1775 = vunpack.c.l.b16 %v1711
      %v1776 = vunpack.c.l.b16 %v1712
      %v1777 = vunpack.c.l.b16 %v1713
      %v1778 = vunpack.c.l.b16 %v1714
      %v1779 = vunpack.c.l.b16 %v1715
      %v1780 = vunpack.c.l.b16 %v1716
      %v1781 = vunpack.c.l.b16 %v1717
      %v1782 = vunpack.c.l.b16 %v1718
      %v1783 = vunpack.c.l.b16 %v1719
      %v1784 = vunpack.c.l.b16 %v1720
      %v1785 = vpack.c.b16 %v1754, %v1753
      %v1786 = vpack.c.b16 %v1756, %v1755
      %v1787 = vpack.c.b16 %v1758, %v1757
      %v1788 = vpack.c.b16 %v1760, %v1759
      %v1789 = vpack.c.b16 %v1762, %v1761
      %v1790 = vpack.c.b16 %v1764, %v1763
      %v1791 = vpack.c.b16 %v1766, %v1765
      %v1792 = vpack.c.b16 %v1768, %v1767
      %v1793 = vpack.c.b16 %v1770, %v1769
      %v1794 = vpack.c.b16 %v1772, %v1771
      %v1795 = vpack.c.b16 %v1774, %v1773
      %v1796 = vpack.c.b16 %v1776, %v1775
      %v1797 = vpack.c.b16 %v1778, %v1777
      %v1798 = vpack.c.b16 %v1780, %v1779
      %v1799 = vpack.c.b16 %v1782, %v1781
      %v1800 = vpack.c.b16 %v1784, %v1783
      %1817 = vst [vmem:[#allocation3] sm:$0xff] %v1785
      %1818 = vst [vmem:[#allocation3 + $0x48] sm:$0xff] %v1786
      %1819 = vst [vmem:[#allocation3 + $0x90] sm:$0xff] %v1787
      %1820 = vst [vmem:[#allocation3 + $0xd8] sm:$0xff] %v1788
      %1821 = vst [vmem:[#allocation3 + $0x120] sm:$0xff] %v1789
      %1822 = vst [vmem:[#allocation3 + $0x168] sm:$0xff] %v1790
      %1823 = vst [vmem:[#allocation3 + $0x1b0] sm:$0xff] %v1791
      %1824 = vst [vmem:[#allocation3 + $0x1f8] sm:$0xff] %v1792
      %1825 = vst [vmem:[#allocation3 + $0x240] sm:$0xff] %v1793
      %1826 = vst [vmem:[#allocation3 + $0x288] sm:$0xff] %v1794
      %1827 = vst [vmem:[#allocation3 + $0x2d0] sm:$0xff] %v1795
      %1828 = vst [vmem:[#allocation3 + $0x318] sm:$0xff] %v1796
      %1829 = vst [vmem:[#allocation3 + $0x360] sm:$0xff] %v1797
      %1830 = vst [vmem:[#allocation3 + $0x3a8] sm:$0xff] %v1798
      %1831 = vst [vmem:[#allocation3 + $0x3f0] sm:$0xff] %v1799
      %1832 = vst [vmem:[#allocation3 + $0x438] sm:$0xff] %v1800
      %v1833 = vld [vmem:[#allocation2] sm:$0xf]
      %v1834 = vld [vmem:[#allocation2 + $0x4] sm:$0x1]
      %v1835 = vld [vmem:[#allocation2 + $0x8] sm:$0xf]
      %v1836 = vld [vmem:[#allocation2 + $0xc] sm:$0x1]
      %v1837 = vld [vmem:[#allocation2 + $0x10] sm:$0xf]
      %v1838 = vld [vmem:[#allocation2 + $0x14] sm:$0x1]
      %v1839 = vld [vmem:[#allocation2 + $0x18] sm:$0xf]
      %v1840 = vld [vmem:[#allocation2 + $0x1c] sm:$0x1]
      %v1841 = vld [vmem:[#allocation2 + $0x20] sm:$0xf]
      %v1842 = vld [vmem:[#allocation2 + $0x24] sm:$0x1]
      %v1843 = vld [vmem:[#allocation2 + $0x28] sm:$0xf]
      %v1844 = vld [vmem:[#allocation2 + $0x2c] sm:$0x1]
      %v1845 = vld [vmem:[#allocation2 + $0x30] sm:$0xf]
      %v1846 = vld [vmem:[#allocation2 + $0x34] sm:$0x1]
      %v1847 = vld [vmem:[#allocation2 + $0x38] sm:$0xf]
      %v1848 = vld [vmem:[#allocation2 + $0x3c] sm:$0x1]
      %v1849 = vld [vmem:[#allocation2 + $0x50] sm:$0xf]
      %v1850 = vld [vmem:[#allocation2 + $0x54] sm:$0x1]
      %v1851 = vld [vmem:[#allocation2 + $0x58] sm:$0xf]
      %v1852 = vld [vmem:[#allocation2 + $0x5c] sm:$0x1]
      %v1853 = vld [vmem:[#allocation2 + $0x60] sm:$0xf]
      %v1854 = vld [vmem:[#allocation2 + $0x64] sm:$0x1]
      %v1855 = vld [vmem:[#allocation2 + $0x68] sm:$0xf]
      %v1856 = vld [vmem:[#allocation2 + $0x6c] sm:$0x1]
      %v1857 = vld [vmem:[#allocation2 + $0x70] sm:$0xf]
      %v1858 = vld [vmem:[#allocation2 + $0x74] sm:$0x1]
      %v1859 = vld [vmem:[#allocation2 + $0x78] sm:$0xf]
      %v1860 = vld [vmem:[#allocation2 + $0x7c] sm:$0x1]
      %v1861 = vld [vmem:[#allocation2 + $0x80] sm:$0xf]
      %v1862 = vld [vmem:[#allocation2 + $0x84] sm:$0x1]
      %v1863 = vld [vmem:[#allocation2 + $0x88] sm:$0xf]
      %v1864 = vld [vmem:[#allocation2 + $0x8c] sm:$0x1]
      %v1865 = vld [vmem:[#allocation2 + $0xa0] sm:$0xf]
      %v1866 = vld [vmem:[#allocation2 + $0xa4] sm:$0x1]
      %v1867 = vld [vmem:[#allocation2 + $0xa8] sm:$0xf]
      %v1868 = vld [vmem:[#allocation2 + $0xac] sm:$0x1]
      %v1869 = vld [vmem:[#allocation2 + $0xb0] sm:$0xf]
      %v1870 = vld [vmem:[#allocation2 + $0xb4] sm:$0x1]
      %v1871 = vld [vmem:[#allocation2 + $0xb8] sm:$0xf]
      %v1872 = vld [vmem:[#allocation2 + $0xbc] sm:$0x1]
      %v1873 = vld [vmem:[#allocation2 + $0xc0] sm:$0xf]
      %v1874 = vld [vmem:[#allocation2 + $0xc4] sm:$0x1]
      %v1875 = vld [vmem:[#allocation2 + $0xc8] sm:$0xf]
      %v1876 = vld [vmem:[#allocation2 + $0xcc] sm:$0x1]
      %v1877 = vld [vmem:[#allocation2 + $0xd0] sm:$0xf]
      %v1878 = vld [vmem:[#allocation2 + $0xd4] sm:$0x1]
      %v1879 = vld [vmem:[#allocation2 + $0xd8] sm:$0xf]
      %v1880 = vld [vmem:[#allocation2 + $0xdc] sm:$0x1]
      %v1881 = vld [vmem:[#allocation2 + $0xf0] sm:$0xf]
      %v1882 = vld [vmem:[#allocation2 + $0xf4] sm:$0x1]
      %v1883 = vld [vmem:[#allocation2 + $0xf8] sm:$0xf]
      %v1884 = vld [vmem:[#allocation2 + $0xfc] sm:$0x1]
      %v1885 = vld [vmem:[#allocation2 + $0x100] sm:$0xf]
      %v1886 = vld [vmem:[#allocation2 + $0x104] sm:$0x1]
      %v1887 = vld [vmem:[#allocation2 + $0x108] sm:$0xf]
      %v1888 = vld [vmem:[#allocation2 + $0x10c] sm:$0x1]
      %v1889 = vld [vmem:[#allocation2 + $0x110] sm:$0xf]
      %v1890 = vld [vmem:[#allocation2 + $0x114] sm:$0x1]
      %v1891 = vld [vmem:[#allocation2 + $0x118] sm:$0xf]
      %v1892 = vld [vmem:[#allocation2 + $0x11c] sm:$0x1]
      %v1893 = vld [vmem:[#allocation2 + $0x120] sm:$0xf]
      %v1894 = vld [vmem:[#allocation2 + $0x124] sm:$0x1]
      %v1895 = vld [vmem:[#allocation2 + $0x128] sm:$0xf]
      %v1896 = vld [vmem:[#allocation2 + $0x12c] sm:$0x1]
      %vm1897 = vsmask.f32 3328
      %vm1898 = vsmask.f32 7440
      %vm1899 = vmor %vm1897, %vm1898
      %v1901 = vshrl.u32 %v1833, 16
      %v1903 = vrot.slane %v1901, 4
      %v1904 = vshll.u32 %v1833, 16
      %v1906 = vrot.slane %v1904, 5
      %v1907 = vor.u32 %v1903, %v1906
      %v1908 = vrot.slane %v1907, 4
      %v1910 = vshll.u32 %v1834, 16
      %v1912 = vrot.slane %v1910, 5
      %v1913 = vsel %vm1899, %v1908, %v1912
      %v1915 = vshrl.u32 %v1835, 16
      %v1917 = vrot.slane %v1915, 4
      %v1918 = vshll.u32 %v1835, 16
      %v1920 = vrot.slane %v1918, 5
      %v1921 = vor.u32 %v1917, %v1920
      %v1922 = vrot.slane %v1921, 4
      %v1924 = vshll.u32 %v1836, 16
      %v1926 = vrot.slane %v1924, 5
      %v1927 = vsel %vm1899, %v1922, %v1926
      %v1929 = vshrl.u32 %v1837, 16
      %v1931 = vrot.slane %v1929, 4
      %v1932 = vshll.u32 %v1837, 16
      %v1934 = vrot.slane %v1932, 5
      %v1935 = vor.u32 %v1931, %v1934
      %v1936 = vrot.slane %v1935, 4
      %v1938 = vshll.u32 %v1838, 16
      %v1940 = vrot.slane %v1938, 5
      %v1941 = vsel %vm1899, %v1936, %v1940
      %v1943 = vshrl.u32 %v1839, 16
      %v1945 = vrot.slane %v1943, 4
      %v1946 = vshll.u32 %v1839, 16
      %v1948 = vrot.slane %v1946, 5
      %v1949 = vor.u32 %v1945, %v1948
      %v1950 = vrot.slane %v1949, 4
      %v1952 = vshll.u32 %v1840, 16
      %v1954 = vrot.slane %v1952, 5
      %v1955 = vsel %vm1899, %v1950, %v1954
      %v1957 = vshrl.u32 %v1841, 16
      %v1959 = vrot.slane %v1957, 4
      %v1960 = vshll.u32 %v1841, 16
      %v1962 = vrot.slane %v1960, 5
      %v1963 = vor.u32 %v1959, %v1962
      %v1964 = vrot.slane %v1963, 4
      %v1966 = vshll.u32 %v1842, 16
      %v1968 = vrot.slane %v1966, 5
      %v1969 = vsel %vm1899, %v1964, %v1968
      %v1971 = vshrl.u32 %v1843, 16
      %v1973 = vrot.slane %v1971, 4
      %v1974 = vshll.u32 %v1843, 16
      %v1976 = vrot.slane %v1974, 5
      %v1977 = vor.u32 %v1973, %v1976
      %v1978 = vrot.slane %v1977, 4
      %v1980 = vshll.u32 %v1844, 16
      %v1982 = vrot.slane %v1980, 5
      %v1983 = vsel %vm1899, %v1978, %v1982
      %v1985 = vshrl.u32 %v1845, 16
      %v1987 = vrot.slane %v1985, 4
      %v1988 = vshll.u32 %v1845, 16
      %v1990 = vrot.slane %v1988, 5
      %v1991 = vor.u32 %v1987, %v1990
      %v1992 = vrot.slane %v1991, 4
      %v1994 = vshll.u32 %v1846, 16
      %v1996 = vrot.slane %v1994, 5
      %v1997 = vsel %vm1899, %v1992, %v1996
      %v1999 = vshrl.u32 %v1847, 16
      %v2001 = vrot.slane %v1999, 4
      %v2002 = vshll.u32 %v1847, 16
      %v2004 = vrot.slane %v2002, 5
      %v2005 = vor.u32 %v2001, %v2004
      %v2006 = vrot.slane %v2005, 4
      %v2008 = vshll.u32 %v1848, 16
      %v2010 = vrot.slane %v2008, 5
      %v2011 = vsel %vm1899, %v2006, %v2010
      %v2013 = vshrl.u32 %v1849, 16
      %v2015 = vrot.slane %v2013, 4
      %v2016 = vshll.u32 %v1849, 16
      %v2018 = vrot.slane %v2016, 5
      %v2019 = vor.u32 %v2015, %v2018
      %v2020 = vrot.slane %v2019, 4
      %v2022 = vshll.u32 %v1850, 16
      %v2024 = vrot.slane %v2022, 5
      %v2025 = vsel %vm1899, %v2020, %v2024
      %v2027 = vshrl.u32 %v1851, 16
      %v2029 = vrot.slane %v2027, 4
      %v2030 = vshll.u32 %v1851, 16
      %v2032 = vrot.slane %v2030, 5
      %v2033 = vor.u32 %v2029, %v2032
      %v2034 = vrot.slane %v2033, 4
      %v2036 = vshll.u32 %v1852, 16
      %v2038 = vrot.slane %v2036, 5
      %v2039 = vsel %vm1899, %v2034, %v2038
      %v2041 = vshrl.u32 %v1853, 16
      %v2043 = vrot.slane %v2041, 4
      %v2044 = vshll.u32 %v1853, 16
      %v2046 = vrot.slane %v2044, 5
      %v2047 = vor.u32 %v2043, %v2046
      %v2048 = vrot.slane %v2047, 4
      %v2050 = vshll.u32 %v1854, 16
      %v2052 = vrot.slane %v2050, 5
      %v2053 = vsel %vm1899, %v2048, %v2052
      %v2055 = vshrl.u32 %v1855, 16
      %v2057 = vrot.slane %v2055, 4
      %v2058 = vshll.u32 %v1855, 16
      %v2060 = vrot.slane %v2058, 5
      %v2061 = vor.u32 %v2057, %v2060
      %v2062 = vrot.slane %v2061, 4
      %v2064 = vshll.u32 %v1856, 16
      %v2066 = vrot.slane %v2064, 5
      %v2067 = vsel %vm1899, %v2062, %v2066
      %v2069 = vshrl.u32 %v1857, 16
      %v2071 = vrot.slane %v2069, 4
      %v2072 = vshll.u32 %v1857, 16
      %v2074 = vrot.slane %v2072, 5
      %v2075 = vor.u32 %v2071, %v2074
      %v2076 = vrot.slane %v2075, 4
      %v2078 = vshll.u32 %v1858, 16
      %v2080 = vrot.slane %v2078, 5
      %v2081 = vsel %vm1899, %v2076, %v2080
      %v2083 = vshrl.u32 %v1859, 16
      %v2085 = vrot.slane %v2083, 4
      %v2086 = vshll.u32 %v1859, 16
      %v2088 = vrot.slane %v2086, 5
      %v2089 = vor.u32 %v2085, %v2088
      %v2090 = vrot.slane %v2089, 4
      %v2092 = vshll.u32 %v1860, 16
      %v2094 = vrot.slane %v2092, 5
      %v2095 = vsel %vm1899, %v2090, %v2094
      %v2097 = vshrl.u32 %v1861, 16
      %v2099 = vrot.slane %v2097, 4
      %v2100 = vshll.u32 %v1861, 16
      %v2102 = vrot.slane %v2100, 5
      %v2103 = vor.u32 %v2099, %v2102
      %v2104 = vrot.slane %v2103, 4
      %v2106 = vshll.u32 %v1862, 16
      %v2108 = vrot.slane %v2106, 5
      %v2109 = vsel %vm1899, %v2104, %v2108
      %v2111 = vshrl.u32 %v1863, 16
      %v2113 = vrot.slane %v2111, 4
      %v2114 = vshll.u32 %v1863, 16
      %v2116 = vrot.slane %v2114, 5
      %v2117 = vor.u32 %v2113, %v2116
      %v2118 = vrot.slane %v2117, 4
      %v2120 = vshll.u32 %v1864, 16
      %v2122 = vrot.slane %v2120, 5
      %v2123 = vsel %vm1899, %v2118, %v2122
      %v2125 = vshrl.u32 %v1865, 16
      %v2127 = vrot.slane %v2125, 4
      %v2128 = vshll.u32 %v1865, 16
      %v2130 = vrot.slane %v2128, 5
      %v2131 = vor.u32 %v2127, %v2130
      %v2132 = vrot.slane %v2131, 4
      %v2134 = vshll.u32 %v1866, 16
      %v2136 = vrot.slane %v2134, 5
      %v2137 = vsel %vm1899, %v2132, %v2136
      %v2139 = vshrl.u32 %v1867, 16
      %v2141 = vrot.slane %v2139, 4
      %v2142 = vshll.u32 %v1867, 16
      %v2144 = vrot.slane %v2142, 5
      %v2145 = vor.u32 %v2141, %v2144
      %v2146 = vrot.slane %v2145, 4
      %v2148 = vshll.u32 %v1868, 16
      %v2150 = vrot.slane %v2148, 5
      %v2151 = vsel %vm1899, %v2146, %v2150
      %v2153 = vshrl.u32 %v1869, 16
      %v2155 = vrot.slane %v2153, 4
      %v2156 = vshll.u32 %v1869, 16
      %v2158 = vrot.slane %v2156, 5
      %v2159 = vor.u32 %v2155, %v2158
      %v2160 = vrot.slane %v2159, 4
      %v2162 = vshll.u32 %v1870, 16
      %v2164 = vrot.slane %v2162, 5
      %v2165 = vsel %vm1899, %v2160, %v2164
      %v2167 = vshrl.u32 %v1871, 16
      %v2169 = vrot.slane %v2167, 4
      %v2170 = vshll.u32 %v1871, 16
      %v2172 = vrot.slane %v2170, 5
      %v2173 = vor.u32 %v2169, %v2172
      %v2174 = vrot.slane %v2173, 4
      %v2176 = vshll.u32 %v1872, 16
      %v2178 = vrot.slane %v2176, 5
      %v2179 = vsel %vm1899, %v2174, %v2178
      %v2181 = vshrl.u32 %v1873, 16
      %v2183 = vrot.slane %v2181, 4
      %v2184 = vshll.u32 %v1873, 16
      %v2186 = vrot.slane %v2184, 5
      %v2187 = vor.u32 %v2183, %v2186
      %v2188 = vrot.slane %v2187, 4
      %v2190 = vshll.u32 %v1874, 16
      %v2192 = vrot.slane %v2190, 5
      %v2193 = vsel %vm1899, %v2188, %v2192
      %v2195 = vshrl.u32 %v1875, 16
      %v2197 = vrot.slane %v2195, 4
      %v2198 = vshll.u32 %v1875, 16
      %v2200 = vrot.slane %v2198, 5
      %v2201 = vor.u32 %v2197, %v2200
      %v2202 = vrot.slane %v2201, 4
      %v2204 = vshll.u32 %v1876, 16
      %v2206 = vrot.slane %v2204, 5
      %v2207 = vsel %vm1899, %v2202, %v2206
      %v2209 = vshrl.u32 %v1877, 16
      %v2211 = vrot.slane %v2209, 4
      %v2212 = vshll.u32 %v1877, 16
      %v2214 = vrot.slane %v2212, 5
      %v2215 = vor.u32 %v2211, %v2214
      %v2216 = vrot.slane %v2215, 4
      %v2218 = vshll.u32 %v1878, 16
      %v2220 = vrot.slane %v2218, 5
      %v2221 = vsel %vm1899, %v2216, %v2220
      %v2223 = vshrl.u32 %v1879, 16
      %v2225 = vrot.slane %v2223, 4
      %v2226 = vshll.u32 %v1879, 16
      %v2228 = vrot.slane %v2226, 5
      %v2229 = vor.u32 %v2225, %v2228
      %v2230 = vrot.slane %v2229, 4
      %v2232 = vshll.u32 %v1880, 16
      %v2234 = vrot.slane %v2232, 5
      %v2235 = vsel %vm1899, %v2230, %v2234
      %v2237 = vshrl.u32 %v1881, 16
      %v2239 = vrot.slane %v2237, 4
      %v2240 = vshll.u32 %v1881, 16
      %v2242 = vrot.slane %v2240, 5
      %v2243 = vor.u32 %v2239, %v2242
      %v2244 = vrot.slane %v2243, 4
      %v2246 = vshll.u32 %v1882, 16
      %v2248 = vrot.slane %v2246, 5
      %v2249 = vsel %vm1899, %v2244, %v2248
      %v2251 = vshrl.u32 %v1883, 16
      %v2253 = vrot.slane %v2251, 4
      %v2254 = vshll.u32 %v1883, 16
      %v2256 = vrot.slane %v2254, 5
      %v2257 = vor.u32 %v2253, %v2256
      %v2258 = vrot.slane %v2257, 4
      %v2260 = vshll.u32 %v1884, 16
      %v2262 = vrot.slane %v2260, 5
      %v2263 = vsel %vm1899, %v2258, %v2262
      %v2265 = vshrl.u32 %v1885, 16
      %v2267 = vrot.slane %v2265, 4
      %v2268 = vshll.u32 %v1885, 16
      %v2270 = vrot.slane %v2268, 5
      %v2271 = vor.u32 %v2267, %v2270
      %v2272 = vrot.slane %v2271, 4
      %v2274 = vshll.u32 %v1886, 16
      %v2276 = vrot.slane %v2274, 5
      %v2277 = vsel %vm1899, %v2272, %v2276
      %v2279 = vshrl.u32 %v1887, 16
      %v2281 = vrot.slane %v2279, 4
      %v2282 = vshll.u32 %v1887, 16
      %v2284 = vrot.slane %v2282, 5
      %v2285 = vor.u32 %v2281, %v2284
      %v2286 = vrot.slane %v2285, 4
      %v2288 = vshll.u32 %v1888, 16
      %v2290 = vrot.slane %v2288, 5
      %v2291 = vsel %vm1899, %v2286, %v2290
      %v2293 = vshrl.u32 %v1889, 16
      %v2295 = vrot.slane %v2293, 4
      %v2296 = vshll.u32 %v1889, 16
      %v2298 = vrot.slane %v2296, 5
      %v2299 = vor.u32 %v2295, %v2298
      %v2300 = vrot.slane %v2299, 4
      %v2302 = vshll.u32 %v1890, 16
      %v2304 = vrot.slane %v2302, 5
      %v2305 = vsel %vm1899, %v2300, %v2304
      %v2307 = vshrl.u32 %v1891, 16
      %v2309 = vrot.slane %v2307, 4
      %v2310 = vshll.u32 %v1891, 16
      %v2312 = vrot.slane %v2310, 5
      %v2313 = vor.u32 %v2309, %v2312
      %v2314 = vrot.slane %v2313, 4
      %v2316 = vshll.u32 %v1892, 16
      %v2318 = vrot.slane %v2316, 5
      %v2319 = vsel %vm1899, %v2314, %v2318
      %v2321 = vshrl.u32 %v1893, 16
      %v2323 = vrot.slane %v2321, 4
      %v2324 = vshll.u32 %v1893, 16
      %v2326 = vrot.slane %v2324, 5
      %v2327 = vor.u32 %v2323, %v2326
      %v2328 = vrot.slane %v2327, 4
      %v2330 = vshll.u32 %v1894, 16
      %v2332 = vrot.slane %v2330, 5
      %v2333 = vsel %vm1899, %v2328, %v2332
      %v2335 = vshrl.u32 %v1895, 16
      %v2337 = vrot.slane %v2335, 4
      %v2338 = vshll.u32 %v1895, 16
      %v2340 = vrot.slane %v2338, 5
      %v2341 = vor.u32 %v2337, %v2340
      %v2342 = vrot.slane %v2341, 4
      %v2344 = vshll.u32 %v1896, 16
      %v2346 = vrot.slane %v2344, 5
      %v2347 = vsel %vm1899, %v2342, %v2346
      %v2348 = vunpack.c.l.b16 %v1913
      %v2349 = vunpack.c.l.b16 %v1927
      %v2350 = vunpack.c.l.b16 %v1941
      %v2351 = vunpack.c.l.b16 %v1955
      %v2352 = vunpack.c.l.b16 %v1969
      %v2353 = vunpack.c.l.b16 %v1983
      %v2354 = vunpack.c.l.b16 %v1997
      %v2355 = vunpack.c.l.b16 %v2011
      %v2356 = vunpack.c.l.b16 %v2025
      %v2357 = vunpack.c.l.b16 %v2039
      %v2358 = vunpack.c.l.b16 %v2053
      %v2359 = vunpack.c.l.b16 %v2067
      %v2360 = vunpack.c.l.b16 %v2081
      %v2361 = vunpack.c.l.b16 %v2095
      %v2362 = vunpack.c.l.b16 %v2109
      %v2363 = vunpack.c.l.b16 %v2123
      %v2364 = vunpack.c.l.b16 %v2137
      %v2365 = vunpack.c.l.b16 %v2151
      %v2366 = vunpack.c.l.b16 %v2165
      %v2367 = vunpack.c.l.b16 %v2179
      %v2368 = vunpack.c.l.b16 %v2193
      %v2369 = vunpack.c.l.b16 %v2207
      %v2370 = vunpack.c.l.b16 %v2221
      %v2371 = vunpack.c.l.b16 %v2235
      %v2372 = vunpack.c.l.b16 %v2249
      %v2373 = vunpack.c.l.b16 %v2263
      %v2374 = vunpack.c.l.b16 %v2277
      %v2375 = vunpack.c.l.b16 %v2291
      %v2376 = vunpack.c.l.b16 %v2305
      %v2377 = vunpack.c.l.b16 %v2319
      %v2378 = vunpack.c.l.b16 %v2333
      %v2379 = vunpack.c.l.b16 %v2347
      %v2380 = vpack.c.b16 %v2349, %v2348
      %v2381 = vpack.c.b16 %v2351, %v2350
      %v2382 = vpack.c.b16 %v2353, %v2352
      %v2383 = vpack.c.b16 %v2355, %v2354
      %v2384 = vpack.c.b16 %v2357, %v2356
      %v2385 = vpack.c.b16 %v2359, %v2358
      %v2386 = vpack.c.b16 %v2361, %v2360
      %v2387 = vpack.c.b16 %v2363, %v2362
      %v2388 = vpack.c.b16 %v2365, %v2364
      %v2389 = vpack.c.b16 %v2367, %v2366
      %v2390 = vpack.c.b16 %v2369, %v2368
      %v2391 = vpack.c.b16 %v2371, %v2370
      %v2392 = vpack.c.b16 %v2373, %v2372
      %v2393 = vpack.c.b16 %v2375, %v2374
      %v2394 = vpack.c.b16 %v2377, %v2376
      %v2395 = vpack.c.b16 %v2379, %v2378
      %2412 = vst [vmem:[#allocation3 + $0x8] sm:$0xff] %v2380
      %2413 = vst [vmem:[#allocation3 + $0x50] sm:$0xff] %v2381
      %2414 = vst [vmem:[#allocation3 + $0x98] sm:$0xff] %v2382
      %2415 = vst [vmem:[#allocation3 + $0xe0] sm:$0xff] %v2383
      %2416 = vst [vmem:[#allocation3 + $0x128] sm:$0xff] %v2384
      %2417 = vst [vmem:[#allocation3 + $0x170] sm:$0xff] %v2385
      %2418 = vst [vmem:[#allocation3 + $0x1b8] sm:$0xff] %v2386
      %2419 = vst [vmem:[#allocation3 + $0x200] sm:$0xff] %v2387
      %2420 = vst [vmem:[#allocation3 + $0x248] sm:$0xff] %v2388
      %2421 = vst [vmem:[#allocation3 + $0x290] sm:$0xff] %v2389
      %2422 = vst [vmem:[#allocation3 + $0x2d8] sm:$0xff] %v2390
      %2423 = vst [vmem:[#allocation3 + $0x320] sm:$0xff] %v2391
      %2424 = vst [vmem:[#allocation3 + $0x368] sm:$0xff] %v2392
      %2425 = vst [vmem:[#allocation3 + $0x3b0] sm:$0xff] %v2393
      %2426 = vst [vmem:[#allocation3 + $0x3f8] sm:$0xff] %v2394
      %2427 = vst [vmem:[#allocation3 + $0x440] sm:$0xff] %v2395
      %v2428 = vld [vmem:[#allocation2] sm:$0xe]
      %v2429 = vld [vmem:[#allocation2 + $0x4] sm:$0x1]
      %v2430 = vld [vmem:[#allocation2 + $0x8] sm:$0xe]
      %v2431 = vld [vmem:[#allocation2 + $0xc] sm:$0x1]
      %v2432 = vld [vmem:[#allocation2 + $0x10] sm:$0xe]
      %v2433 = vld [vmem:[#allocation2 + $0x14] sm:$0x1]
      %v2434 = vld [vmem:[#allocation2 + $0x18] sm:$0xe]
      %v2435 = vld [vmem:[#allocation2 + $0x1c] sm:$0x1]
      %v2436 = vld [vmem:[#allocation2 + $0x20] sm:$0xe]
      %v2437 = vld [vmem:[#allocation2 + $0x24] sm:$0x1]
      %v2438 = vld [vmem:[#allocation2 + $0x28] sm:$0xe]
      %v2439 = vld [vmem:[#allocation2 + $0x2c] sm:$0x1]
      %v2440 = vld [vmem:[#allocation2 + $0x30] sm:$0xe]
      %v2441 = vld [vmem:[#allocation2 + $0x34] sm:$0x1]
      %v2442 = vld [vmem:[#allocation2 + $0x38] sm:$0xe]
      %v2443 = vld [vmem:[#allocation2 + $0x3c] sm:$0x1]
      %v2444 = vld [vmem:[#allocation2 + $0x50] sm:$0xe]
      %v2445 = vld [vmem:[#allocation2 + $0x54] sm:$0x1]
      %v2446 = vld [vmem:[#allocation2 + $0x58] sm:$0xe]
      %v2447 = vld [vmem:[#allocation2 + $0x5c] sm:$0x1]
      %v2448 = vld [vmem:[#allocation2 + $0x60] sm:$0xe]
      %v2449 = vld [vmem:[#allocation2 + $0x64] sm:$0x1]
      %v2450 = vld [vmem:[#allocation2 + $0x68] sm:$0xe]
      %v2451 = vld [vmem:[#allocation2 + $0x6c] sm:$0x1]
      %v2452 = vld [vmem:[#allocation2 + $0x70] sm:$0xe]
      %v2453 = vld [vmem:[#allocation2 + $0x74] sm:$0x1]
      %v2454 = vld [vmem:[#allocation2 + $0x78] sm:$0xe]
      %v2455 = vld [vmem:[#allocation2 + $0x7c] sm:$0x1]
      %v2456 = vld [vmem:[#allocation2 + $0x80] sm:$0xe]
      %v2457 = vld [vmem:[#allocation2 + $0x84] sm:$0x1]
      %v2458 = vld [vmem:[#allocation2 + $0x88] sm:$0xe]
      %v2459 = vld [vmem:[#allocation2 + $0x8c] sm:$0x1]
      %v2460 = vld [vmem:[#allocation2 + $0xa0] sm:$0xe]
      %v2461 = vld [vmem:[#allocation2 + $0xa4] sm:$0x1]
      %v2462 = vld [vmem:[#allocation2 + $0xa8] sm:$0xe]
      %v2463 = vld [vmem:[#allocation2 + $0xac] sm:$0x1]
      %v2464 = vld [vmem:[#allocation2 + $0xb0] sm:$0xe]
      %v2465 = vld [vmem:[#allocation2 + $0xb4] sm:$0x1]
      %v2466 = vld [vmem:[#allocation2 + $0xb8] sm:$0xe]
      %v2467 = vld [vmem:[#allocation2 + $0xbc] sm:$0x1]
      %v2468 = vld [vmem:[#allocation2 + $0xc0] sm:$0xe]
      %v2469 = vld [vmem:[#allocation2 + $0xc4] sm:$0x1]
      %v2470 = vld [vmem:[#allocation2 + $0xc8] sm:$0xe]
      %v2471 = vld [vmem:[#allocation2 + $0xcc] sm:$0x1]
      %v2472 = vld [vmem:[#allocation2 + $0xd0] sm:$0xe]
      %v2473 = vld [vmem:[#allocation2 + $0xd4] sm:$0x1]
      %v2474 = vld [vmem:[#allocation2 + $0xd8] sm:$0xe]
      %v2475 = vld [vmem:[#allocation2 + $0xdc] sm:$0x1]
      %v2476 = vld [vmem:[#allocation2 + $0xf0] sm:$0xe]
      %v2477 = vld [vmem:[#allocation2 + $0xf4] sm:$0x1]
      %v2478 = vld [vmem:[#allocation2 + $0xf8] sm:$0xe]
      %v2479 = vld [vmem:[#allocation2 + $0xfc] sm:$0x1]
      %v2480 = vld [vmem:[#allocation2 + $0x100] sm:$0xe]
      %v2481 = vld [vmem:[#allocation2 + $0x104] sm:$0x1]
      %v2482 = vld [vmem:[#allocation2 + $0x108] sm:$0xe]
      %v2483 = vld [vmem:[#allocation2 + $0x10c] sm:$0x1]
      %v2484 = vld [vmem:[#allocation2 + $0x110] sm:$0xe]
      %v2485 = vld [vmem:[#allocation2 + $0x114] sm:$0x1]
      %v2486 = vld [vmem:[#allocation2 + $0x118] sm:$0xe]
      %v2487 = vld [vmem:[#allocation2 + $0x11c] sm:$0x1]
      %v2488 = vld [vmem:[#allocation2 + $0x120] sm:$0xe]
      %v2489 = vld [vmem:[#allocation2 + $0x124] sm:$0x1]
      %v2490 = vld [vmem:[#allocation2 + $0x128] sm:$0xe]
      %v2491 = vld [vmem:[#allocation2 + $0x12c] sm:$0x1]
      %vm2556 = vcmask 1042432
      %vm2557 = vcmask 1046532
      %vm2558 = vmor %vm2556, %vm2557
      %v2559 = vrot.slane %v2428, 5
      %v2560 = vrot.slane %v2559, 4
      %v2561 = vrot.slane %v2429, 5
      %v2562 = vsel %vm2558, %v2560, %v2561
      %v2563 = vrot.slane %v2430, 5
      %v2564 = vrot.slane %v2563, 4
      %v2565 = vrot.slane %v2431, 5
      %v2566 = vsel %vm2558, %v2564, %v2565
      %v2567 = vrot.slane %v2432, 5
      %v2568 = vrot.slane %v2567, 4
      %v2569 = vrot.slane %v2433, 5
      %v2570 = vsel %vm2558, %v2568, %v2569
      %v2571 = vrot.slane %v2434, 5
      %v2572 = vrot.slane %v2571, 4
      %v2573 = vrot.slane %v2435, 5
      %v2574 = vsel %vm2558, %v2572, %v2573
      %v2575 = vrot.slane %v2436, 5
      %v2576 = vrot.slane %v2575, 4
      %v2577 = vrot.slane %v2437, 5
      %v2578 = vsel %vm2558, %v2576, %v2577
      %v2579 = vrot.slane %v2438, 5
      %v2580 = vrot.slane %v2579, 4
      %v2581 = vrot.slane %v2439, 5
      %v2582 = vsel %vm2558, %v2580, %v2581
      %v2583 = vrot.slane %v2440, 5
      %v2584 = vrot.slane %v2583, 4
      %v2585 = vrot.slane %v2441, 5
      %v2586 = vsel %vm2558, %v2584, %v2585
      %v2587 = vrot.slane %v2442, 5
      %v2588 = vrot.slane %v2587, 4
      %v2589 = vrot.slane %v2443, 5
      %v2590 = vsel %vm2558, %v2588, %v2589
      %v2591 = vrot.slane %v2444, 5
      %v2592 = vrot.slane %v2591, 4
      %v2593 = vrot.slane %v2445, 5
      %v2594 = vsel %vm2558, %v2592, %v2593
      %v2595 = vrot.slane %v2446, 5
      %v2596 = vrot.slane %v2595, 4
      %v2597 = vrot.slane %v2447, 5
      %v2598 = vsel %vm2558, %v2596, %v2597
      %v2599 = vrot.slane %v2448, 5
      %v2600 = vrot.slane %v2599, 4
      %v2601 = vrot.slane %v2449, 5
      %v2602 = vsel %vm2558, %v2600, %v2601
      %v2603 = vrot.slane %v2450, 5
      %v2604 = vrot.slane %v2603, 4
      %v2605 = vrot.slane %v2451, 5
      %v2606 = vsel %vm2558, %v2604, %v2605
      %v2607 = vrot.slane %v2452, 5
      %v2608 = vrot.slane %v2607, 4
      %v2609 = vrot.slane %v2453, 5
      %v2610 = vsel %vm2558, %v2608, %v2609
      %v2611 = vrot.slane %v2454, 5
      %v2612 = vrot.slane %v2611, 4
      %v2613 = vrot.slane %v2455, 5
      %v2614 = vsel %vm2558, %v2612, %v2613
      %v2615 = vrot.slane %v2456, 5
      %v2616 = vrot.slane %v2615, 4
      %v2617 = vrot.slane %v2457, 5
      %v2618 = vsel %vm2558, %v2616, %v2617
      %v2619 = vrot.slane %v2458, 5
      %v2620 = vrot.slane %v2619, 4
      %v2621 = vrot.slane %v2459, 5
      %v2622 = vsel %vm2558, %v2620, %v2621
      %v2623 = vrot.slane %v2460, 5
      %v2624 = vrot.slane %v2623, 4
      %v2625 = vrot.slane %v2461, 5
      %v2626 = vsel %vm2558, %v2624, %v2625
      %v2627 = vrot.slane %v2462, 5
      %v2628 = vrot.slane %v2627, 4
      %v2629 = vrot.slane %v2463, 5
      %v2630 = vsel %vm2558, %v2628, %v2629
      %v2631 = vrot.slane %v2464, 5
      %v2632 = vrot.slane %v2631, 4
      %v2633 = vrot.slane %v2465, 5
      %v2634 = vsel %vm2558, %v2632, %v2633
      %v2635 = vrot.slane %v2466, 5
      %v2636 = vrot.slane %v2635, 4
      %v2637 = vrot.slane %v2467, 5
      %v2638 = vsel %vm2558, %v2636, %v2637
      %v2639 = vrot.slane %v2468, 5
      %v2640 = vrot.slane %v2639, 4
      %v2641 = vrot.slane %v2469, 5
      %v2642 = vsel %vm2558, %v2640, %v2641
      %v2643 = vrot.slane %v2470, 5
      %v2644 = vrot.slane %v2643, 4
      %v2645 = vrot.slane %v2471, 5
      %v2646 = vsel %vm2558, %v2644, %v2645
      %v2647 = vrot.slane %v2472, 5
      %v2648 = vrot.slane %v2647, 4
      %v2649 = vrot.slane %v2473, 5
      %v2650 = vsel %vm2558, %v2648, %v2649
      %v2651 = vrot.slane %v2474, 5
      %v2652 = vrot.slane %v2651, 4
      %v2653 = vrot.slane %v2475, 5
      %v2654 = vsel %vm2558, %v2652, %v2653
      %v2655 = vrot.slane %v2476, 5
      %v2656 = vrot.slane %v2655, 4
      %v2657 = vrot.slane %v2477, 5
      %v2658 = vsel %vm2558, %v2656, %v2657
      %v2659 = vrot.slane %v2478, 5
      %v2660 = vrot.slane %v2659, 4
      %v2661 = vrot.slane %v2479, 5
      %v2662 = vsel %vm2558, %v2660, %v2661
      %v2663 = vrot.slane %v2480, 5
      %v2664 = vrot.slane %v2663, 4
      %v2665 = vrot.slane %v2481, 5
      %v2666 = vsel %vm2558, %v2664, %v2665
      %v2667 = vrot.slane %v2482, 5
      %v2668 = vrot.slane %v2667, 4
      %v2669 = vrot.slane %v2483, 5
      %v2670 = vsel %vm2558, %v2668, %v2669
      %v2671 = vrot.slane %v2484, 5
      %v2672 = vrot.slane %v2671, 4
      %v2673 = vrot.slane %v2485, 5
      %v2674 = vsel %vm2558, %v2672, %v2673
      %v2675 = vrot.slane %v2486, 5
      %v2676 = vrot.slane %v2675, 4
      %v2677 = vrot.slane %v2487, 5
      %v2678 = vsel %vm2558, %v2676, %v2677
      %v2679 = vrot.slane %v2488, 5
      %v2680 = vrot.slane %v2679, 4
      %v2681 = vrot.slane %v2489, 5
      %v2682 = vsel %vm2558, %v2680, %v2681
      %v2683 = vrot.slane %v2490, 5
      %v2684 = vrot.slane %v2683, 4
      %v2685 = vrot.slane %v2491, 5
      %v2686 = vsel %vm2558, %v2684, %v2685
      %v2687 = vunpack.c.l.b16 %v2562
      %v2688 = vunpack.c.l.b16 %v2566
      %v2689 = vunpack.c.l.b16 %v2570
      %v2690 = vunpack.c.l.b16 %v2574
      %v2691 = vunpack.c.l.b16 %v2578
      %v2692 = vunpack.c.l.b16 %v2582
      %v2693 = vunpack.c.l.b16 %v2586
      %v2694 = vunpack.c.l.b16 %v2590
      %v2695 = vunpack.c.l.b16 %v2594
      %v2696 = vunpack.c.l.b16 %v2598
      %v2697 = vunpack.c.l.b16 %v2602
      %v2698 = vunpack.c.l.b16 %v2606
      %v2699 = vunpack.c.l.b16 %v2610
      %v2700 = vunpack.c.l.b16 %v2614
      %v2701 = vunpack.c.l.b16 %v2618
      %v2702 = vunpack.c.l.b16 %v2622
      %v2703 = vunpack.c.l.b16 %v2626
      %v2704 = vunpack.c.l.b16 %v2630
      %v2705 = vunpack.c.l.b16 %v2634
      %v2706 = vunpack.c.l.b16 %v2638
      %v2707 = vunpack.c.l.b16 %v2642
      %v2708 = vunpack.c.l.b16 %v2646
      %v2709 = vunpack.c.l.b16 %v2650
      %v2710 = vunpack.c.l.b16 %v2654
      %v2711 = vunpack.c.l.b16 %v2658
      %v2712 = vunpack.c.l.b16 %v2662
      %v2713 = vunpack.c.l.b16 %v2666
      %v2714 = vunpack.c.l.b16 %v2670
      %v2715 = vunpack.c.l.b16 %v2674
      %v2716 = vunpack.c.l.b16 %v2678
      %v2717 = vunpack.c.l.b16 %v2682
      %v2718 = vunpack.c.l.b16 %v2686
      %v2719 = vpack.c.b16 %v2688, %v2687
      %v2720 = vpack.c.b16 %v2690, %v2689
      %v2721 = vpack.c.b16 %v2692, %v2691
      %v2722 = vpack.c.b16 %v2694, %v2693
      %v2723 = vpack.c.b16 %v2696, %v2695
      %v2724 = vpack.c.b16 %v2698, %v2697
      %v2725 = vpack.c.b16 %v2700, %v2699
      %v2726 = vpack.c.b16 %v2702, %v2701
      %v2727 = vpack.c.b16 %v2704, %v2703
      %v2728 = vpack.c.b16 %v2706, %v2705
      %v2729 = vpack.c.b16 %v2708, %v2707
      %v2730 = vpack.c.b16 %v2710, %v2709
      %v2731 = vpack.c.b16 %v2712, %v2711
      %v2732 = vpack.c.b16 %v2714, %v2713
      %v2733 = vpack.c.b16 %v2716, %v2715
      %v2734 = vpack.c.b16 %v2718, %v2717
      %2751 = vst [vmem:[#allocation3 + $0x10] sm:$0xff] %v2719
      %2752 = vst [vmem:[#allocation3 + $0x58] sm:$0xff] %v2720
      %2753 = vst [vmem:[#allocation3 + $0xa0] sm:$0xff] %v2721
      %2754 = vst [vmem:[#allocation3 + $0xe8] sm:$0xff] %v2722
      %2755 = vst [vmem:[#allocation3 + $0x130] sm:$0xff] %v2723
      %2756 = vst [vmem:[#allocation3 + $0x178] sm:$0xff] %v2724
      %2757 = vst [vmem:[#allocation3 + $0x1c0] sm:$0xff] %v2725
      %2758 = vst [vmem:[#allocation3 + $0x208] sm:$0xff] %v2726
      %2759 = vst [vmem:[#allocation3 + $0x250] sm:$0xff] %v2727
      %2760 = vst [vmem:[#allocation3 + $0x298] sm:$0xff] %v2728
      %2761 = vst [vmem:[#allocation3 + $0x2e0] sm:$0xff] %v2729
      %2762 = vst [vmem:[#allocation3 + $0x328] sm:$0xff] %v2730
      %2763 = vst [vmem:[#allocation3 + $0x370] sm:$0xff] %v2731
      %2764 = vst [vmem:[#allocation3 + $0x3b8] sm:$0xff] %v2732
      %2765 = vst [vmem:[#allocation3 + $0x400] sm:$0xff] %v2733
      %2766 = vst [vmem:[#allocation3 + $0x448] sm:$0xff] %v2734
      %v2767 = vld [vmem:[%s418] sm:$0xf]
      %v2768 = vld [vmem:[%s418 + $0x8] sm:$0xf]
      %v2769 = vld [vmem:[%s418 + $0x10] sm:$0xf]
      %v2770 = vld [vmem:[%s418 + $0x18] sm:$0xf]
      %v2771 = vld [vmem:[%s418 + $0x20] sm:$0xf]
      %v2772 = vld [vmem:[%s418 + $0x28] sm:$0xf]
      %v2773 = vld [vmem:[%s418 + $0x30] sm:$0xf]
      %v2774 = vld [vmem:[%s418 + $0x38] sm:$0xf]
      %v2775 = vld [vmem:[%s418 + $0x50] sm:$0xf]
      %v2776 = vld [vmem:[%s418 + $0x58] sm:$0xf]
      %v2777 = vld [vmem:[%s418 + $0x60] sm:$0xf]
      %v2778 = vld [vmem:[%s418 + $0x68] sm:$0xf]
      %v2779 = vld [vmem:[%s418 + $0x70] sm:$0xf]
      %v2780 = vld [vmem:[%s418 + $0x78] sm:$0xf]
      %v2781 = vld [vmem:[%s418 + $0x80] sm:$0xf]
      %v2782 = vld [vmem:[%s418 + $0x88] sm:$0xf]
      %v2783 = vld [vmem:[%s418 + $0xa0] sm:$0xf]
      %v2784 = vld [vmem:[%s418 + $0xa8] sm:$0xf]
      %v2785 = vld [vmem:[%s418 + $0xb0] sm:$0xf]
      %v2786 = vld [vmem:[%s418 + $0xb8] sm:$0xf]
      %v2787 = vld [vmem:[%s418 + $0xc0] sm:$0xf]
      %v2788 = vld [vmem:[%s418 + $0xc8] sm:$0xf]
      %v2789 = vld [vmem:[%s418 + $0xd0] sm:$0xf]
      %v2790 = vld [vmem:[%s418 + $0xd8] sm:$0xf]
      %v2791 = vld [vmem:[%s418 + $0xf0] sm:$0xf]
      %v2792 = vld [vmem:[%s418 + $0xf8] sm:$0xf]
      %v2793 = vld [vmem:[%s418 + $0x100] sm:$0xf]
      %v2794 = vld [vmem:[%s418 + $0x108] sm:$0xf]
      %v2795 = vld [vmem:[%s418 + $0x110] sm:$0xf]
      %v2796 = vld [vmem:[%s418 + $0x118] sm:$0xf]
      %v2797 = vld [vmem:[%s418 + $0x120] sm:$0xf]
      %v2798 = vld [vmem:[%s418 + $0x128] sm:$0xf]
      %v2831 = vunpack.c.l.b16 %v2767
      %v2832 = vunpack.c.l.b16 %v2768
      %v2833 = vunpack.c.l.b16 %v2769
      %v2834 = vunpack.c.l.b16 %v2770
      %v2835 = vunpack.c.l.b16 %v2771
      %v2836 = vunpack.c.l.b16 %v2772
      %v2837 = vunpack.c.l.b16 %v2773
      %v2838 = vunpack.c.l.b16 %v2774
      %v2839 = vunpack.c.l.b16 %v2775
      %v2840 = vunpack.c.l.b16 %v2776
      %v2841 = vunpack.c.l.b16 %v2777
      %v2842 = vunpack.c.l.b16 %v2778
      %v2843 = vunpack.c.l.b16 %v2779
      %v2844 = vunpack.c.l.b16 %v2780
      %v2845 = vunpack.c.l.b16 %v2781
      %v2846 = vunpack.c.l.b16 %v2782
      %v2847 = vunpack.c.l.b16 %v2783
      %v2848 = vunpack.c.l.b16 %v2784
      %v2849 = vunpack.c.l.b16 %v2785
      %v2850 = vunpack.c.l.b16 %v2786
      %v2851 = vunpack.c.l.b16 %v2787
      %v2852 = vunpack.c.l.b16 %v2788
      %v2853 = vunpack.c.l.b16 %v2789
      %v2854 = vunpack.c.l.b16 %v2790
      %v2855 = vunpack.c.l.b16 %v2791
      %v2856 = vunpack.c.l.b16 %v2792
      %v2857 = vunpack.c.l.b16 %v2793
      %v2858 = vunpack.c.l.b16 %v2794
      %v2859 = vunpack.c.l.b16 %v2795
      %v2860 = vunpack.c.l.b16 %v2796
      %v2861 = vunpack.c.l.b16 %v2797
      %v2862 = vunpack.c.l.b16 %v2798
      %v2863 = vpack.c.b16 %v2832, %v2831
      %v2864 = vpack.c.b16 %v2834, %v2833
      %v2865 = vpack.c.b16 %v2836, %v2835
      %v2866 = vpack.c.b16 %v2838, %v2837
      %v2867 = vpack.c.b16 %v2840, %v2839
      %v2868 = vpack.c.b16 %v2842, %v2841
      %v2869 = vpack.c.b16 %v2844, %v2843
      %v2870 = vpack.c.b16 %v2846, %v2845
      %v2871 = vpack.c.b16 %v2848, %v2847
      %v2872 = vpack.c.b16 %v2850, %v2849
      %v2873 = vpack.c.b16 %v2852, %v2851
      %v2874 = vpack.c.b16 %v2854, %v2853
      %v2875 = vpack.c.b16 %v2856, %v2855
      %v2876 = vpack.c.b16 %v2858, %v2857
      %v2877 = vpack.c.b16 %v2860, %v2859
      %v2878 = vpack.c.b16 %v2862, %v2861
      %2895 = vst [vmem:[#allocation3 + $0x18] sm:$0xff] %v2863
      %2896 = vst [vmem:[#allocation3 + $0x60] sm:$0xff] %v2864
      %2897 = vst [vmem:[#allocation3 + $0xa8] sm:$0xff] %v2865
      %2898 = vst [vmem:[#allocation3 + $0xf0] sm:$0xff] %v2866
      %2899 = vst [vmem:[#allocation3 + $0x138] sm:$0xff] %v2867
      %2900 = vst [vmem:[#allocation3 + $0x180] sm:$0xff] %v2868
      %2901 = vst [vmem:[#allocation3 + $0x1c8] sm:$0xff] %v2869
      %2902 = vst [vmem:[#allocation3 + $0x210] sm:$0xff] %v2870
      %2903 = vst [vmem:[#allocation3 + $0x258] sm:$0xff] %v2871
      %2904 = vst [vmem:[#allocation3 + $0x2a0] sm:$0xff] %v2872
      %2905 = vst [vmem:[#allocation3 + $0x2e8] sm:$0xff] %v2873
      %2906 = vst [vmem:[#allocation3 + $0x330] sm:$0xff] %v2874
      %2907 = vst [vmem:[#allocation3 + $0x378] sm:$0xff] %v2875
      %2908 = vst [vmem:[#allocation3 + $0x3c0] sm:$0xff] %v2876
      %2909 = vst [vmem:[#allocation3 + $0x408] sm:$0xff] %v2877
      %2910 = vst [vmem:[#allocation3 + $0x450] sm:$0xff] %v2878
      %v2911 = vld [vmem:[%s418] sm:$0xf]
      %v2912 = vld [vmem:[%s418 + $0x4] sm:$0x1]
      %v2913 = vld [vmem:[%s418 + $0x8] sm:$0xf]
      %v2914 = vld [vmem:[%s418 + $0xc] sm:$0x1]
      %v2915 = vld [vmem:[%s418 + $0x10] sm:$0xf]
      %v2916 = vld [vmem:[%s418 + $0x14] sm:$0x1]
      %v2917 = vld [vmem:[%s418 + $0x18] sm:$0xf]
      %v2918 = vld [vmem:[%s418 + $0x1c] sm:$0x1]
      %v2919 = vld [vmem:[%s418 + $0x20] sm:$0xf]
      %v2920 = vld [vmem:[%s418 + $0x24] sm:$0x1]
      %v2921 = vld [vmem:[%s418 + $0x28] sm:$0xf]
      %v2922 = vld [vmem:[%s418 + $0x2c] sm:$0x1]
      %v2923 = vld [vmem:[%s418 + $0x30] sm:$0xf]
      %v2924 = vld [vmem:[%s418 + $0x34] sm:$0x1]
      %v2925 = vld [vmem:[%s418 + $0x38] sm:$0xf]
      %v2926 = vld [vmem:[%s418 + $0x3c] sm:$0x1]
      %v2927 = vld [vmem:[%s418 + $0x50] sm:$0xf]
      %v2928 = vld [vmem:[%s418 + $0x54] sm:$0x1]
      %v2929 = vld [vmem:[%s418 + $0x58] sm:$0xf]
      %v2930 = vld [vmem:[%s418 + $0x5c] sm:$0x1]
      %v2931 = vld [vmem:[%s418 + $0x60] sm:$0xf]
      %v2932 = vld [vmem:[%s418 + $0x64] sm:$0x1]
      %v2933 = vld [vmem:[%s418 + $0x68] sm:$0xf]
      %v2934 = vld [vmem:[%s418 + $0x6c] sm:$0x1]
      %v2935 = vld [vmem:[%s418 + $0x70] sm:$0xf]
      %v2936 = vld [vmem:[%s418 + $0x74] sm:$0x1]
      %v2937 = vld [vmem:[%s418 + $0x78] sm:$0xf]
      %v2938 = vld [vmem:[%s418 + $0x7c] sm:$0x1]
      %v2939 = vld [vmem:[%s418 + $0x80] sm:$0xf]
      %v2940 = vld [vmem:[%s418 + $0x84] sm:$0x1]
      %v2941 = vld [vmem:[%s418 + $0x88] sm:$0xf]
      %v2942 = vld [vmem:[%s418 + $0x8c] sm:$0x1]
      %v2943 = vld [vmem:[%s418 + $0xa0] sm:$0xf]
      %v2944 = vld [vmem:[%s418 + $0xa4] sm:$0x1]
      %v2945 = vld [vmem:[%s418 + $0xa8] sm:$0xf]
      %v2946 = vld [vmem:[%s418 + $0xac] sm:$0x1]
      %v2947 = vld [vmem:[%s418 + $0xb0] sm:$0xf]
      %v2948 = vld [vmem:[%s418 + $0xb4] sm:$0x1]
      %v2949 = vld [vmem:[%s418 + $0xb8] sm:$0xf]
      %v2950 = vld [vmem:[%s418 + $0xbc] sm:$0x1]
      %v2951 = vld [vmem:[%s418 + $0xc0] sm:$0xf]
      %v2952 = vld [vmem:[%s418 + $0xc4] sm:$0x1]
      %v2953 = vld [vmem:[%s418 + $0xc8] sm:$0xf]
      %v2954 = vld [vmem:[%s418 + $0xcc] sm:$0x1]
      %v2955 = vld [vmem:[%s418 + $0xd0] sm:$0xf]
      %v2956 = vld [vmem:[%s418 + $0xd4] sm:$0x1]
      %v2957 = vld [vmem:[%s418 + $0xd8] sm:$0xf]
      %v2958 = vld [vmem:[%s418 + $0xdc] sm:$0x1]
      %v2959 = vld [vmem:[%s418 + $0xf0] sm:$0xf]
      %v2960 = vld [vmem:[%s418 + $0xf4] sm:$0x1]
      %v2961 = vld [vmem:[%s418 + $0xf8] sm:$0xf]
      %v2962 = vld [vmem:[%s418 + $0xfc] sm:$0x1]
      %v2963 = vld [vmem:[%s418 + $0x100] sm:$0xf]
      %v2964 = vld [vmem:[%s418 + $0x104] sm:$0x1]
      %v2965 = vld [vmem:[%s418 + $0x108] sm:$0xf]
      %v2966 = vld [vmem:[%s418 + $0x10c] sm:$0x1]
      %v2967 = vld [vmem:[%s418 + $0x110] sm:$0xf]
      %v2968 = vld [vmem:[%s418 + $0x114] sm:$0x1]
      %v2969 = vld [vmem:[%s418 + $0x118] sm:$0xf]
      %v2970 = vld [vmem:[%s418 + $0x11c] sm:$0x1]
      %v2971 = vld [vmem:[%s418 + $0x120] sm:$0xf]
      %v2972 = vld [vmem:[%s418 + $0x124] sm:$0x1]
      %v2973 = vld [vmem:[%s418 + $0x128] sm:$0xf]
      %v2974 = vld [vmem:[%s418 + $0x12c] sm:$0x1]
      %v2976 = vshrl.u32 %v2911, 16
      %v2978 = vrot.slane %v2976, 4
      %v2979 = vshll.u32 %v2911, 16
      %v2981 = vrot.slane %v2979, 5
      %v2982 = vor.u32 %v2978, %v2981
      %v2983 = vrot.slane %v2982, 4
      %v2985 = vshll.u32 %v2912, 16
      %v2987 = vrot.slane %v2985, 5
      %v2988 = vsel %vm1899, %v2983, %v2987
      %v2990 = vshrl.u32 %v2913, 16
      %v2992 = vrot.slane %v2990, 4
      %v2993 = vshll.u32 %v2913, 16
      %v2995 = vrot.slane %v2993, 5
      %v2996 = vor.u32 %v2992, %v2995
      %v2997 = vrot.slane %v2996, 4
      %v2999 = vshll.u32 %v2914, 16
      %v3001 = vrot.slane %v2999, 5
      %v3002 = vsel %vm1899, %v2997, %v3001
      %v3004 = vshrl.u32 %v2915, 16
      %v3006 = vrot.slane %v3004, 4
      %v3007 = vshll.u32 %v2915, 16
      %v3009 = vrot.slane %v3007, 5
      %v3010 = vor.u32 %v3006, %v3009
      %v3011 = vrot.slane %v3010, 4
      %v3013 = vshll.u32 %v2916, 16
      %v3015 = vrot.slane %v3013, 5
      %v3016 = vsel %vm1899, %v3011, %v3015
      %v3018 = vshrl.u32 %v2917, 16
      %v3020 = vrot.slane %v3018, 4
      %v3021 = vshll.u32 %v2917, 16
      %v3023 = vrot.slane %v3021, 5
      %v3024 = vor.u32 %v3020, %v3023
      %v3025 = vrot.slane %v3024, 4
      %v3027 = vshll.u32 %v2918, 16
      %v3029 = vrot.slane %v3027, 5
      %v3030 = vsel %vm1899, %v3025, %v3029
      %v3032 = vshrl.u32 %v2919, 16
      %v3034 = vrot.slane %v3032, 4
      %v3035 = vshll.u32 %v2919, 16
      %v3037 = vrot.slane %v3035, 5
      %v3038 = vor.u32 %v3034, %v3037
      %v3039 = vrot.slane %v3038, 4
      %v3041 = vshll.u32 %v2920, 16
      %v3043 = vrot.slane %v3041, 5
      %v3044 = vsel %vm1899, %v3039, %v3043
      %v3046 = vshrl.u32 %v2921, 16
      %v3048 = vrot.slane %v3046, 4
      %v3049 = vshll.u32 %v2921, 16
      %v3051 = vrot.slane %v3049, 5
      %v3052 = vor.u32 %v3048, %v3051
      %v3053 = vrot.slane %v3052, 4
      %v3055 = vshll.u32 %v2922, 16
      %v3057 = vrot.slane %v3055, 5
      %v3058 = vsel %vm1899, %v3053, %v3057
      %v3060 = vshrl.u32 %v2923, 16
      %v3062 = vrot.slane %v3060, 4
      %v3063 = vshll.u32 %v2923, 16
      %v3065 = vrot.slane %v3063, 5
      %v3066 = vor.u32 %v3062, %v3065
      %v3067 = vrot.slane %v3066, 4
      %v3069 = vshll.u32 %v2924, 16
      %v3071 = vrot.slane %v3069, 5
      %v3072 = vsel %vm1899, %v3067, %v3071
      %v3074 = vshrl.u32 %v2925, 16
      %v3076 = vrot.slane %v3074, 4
      %v3077 = vshll.u32 %v2925, 16
      %v3079 = vrot.slane %v3077, 5
      %v3080 = vor.u32 %v3076, %v3079
      %v3081 = vrot.slane %v3080, 4
      %v3083 = vshll.u32 %v2926, 16
      %v3085 = vrot.slane %v3083, 5
      %v3086 = vsel %vm1899, %v3081, %v3085
      %v3088 = vshrl.u32 %v2927, 16
      %v3090 = vrot.slane %v3088, 4
      %v3091 = vshll.u32 %v2927, 16
      %v3093 = vrot.slane %v3091, 5
      %v3094 = vor.u32 %v3090, %v3093
      %v3095 = vrot.slane %v3094, 4
      %v3097 = vshll.u32 %v2928, 16
      %v3099 = vrot.slane %v3097, 5
      %v3100 = vsel %vm1899, %v3095, %v3099
      %v3102 = vshrl.u32 %v2929, 16
      %v3104 = vrot.slane %v3102, 4
      %v3105 = vshll.u32 %v2929, 16
      %v3107 = vrot.slane %v3105, 5
      %v3108 = vor.u32 %v3104, %v3107
      %v3109 = vrot.slane %v3108, 4
      %v3111 = vshll.u32 %v2930, 16
      %v3113 = vrot.slane %v3111, 5
      %v3114 = vsel %vm1899, %v3109, %v3113
      %v3116 = vshrl.u32 %v2931, 16
      %v3118 = vrot.slane %v3116, 4
      %v3119 = vshll.u32 %v2931, 16
      %v3121 = vrot.slane %v3119, 5
      %v3122 = vor.u32 %v3118, %v3121
      %v3123 = vrot.slane %v3122, 4
      %v3125 = vshll.u32 %v2932, 16
      %v3127 = vrot.slane %v3125, 5
      %v3128 = vsel %vm1899, %v3123, %v3127
      %v3130 = vshrl.u32 %v2933, 16
      %v3132 = vrot.slane %v3130, 4
      %v3133 = vshll.u32 %v2933, 16
      %v3135 = vrot.slane %v3133, 5
      %v3136 = vor.u32 %v3132, %v3135
      %v3137 = vrot.slane %v3136, 4
      %v3139 = vshll.u32 %v2934, 16
      %v3141 = vrot.slane %v3139, 5
      %v3142 = vsel %vm1899, %v3137, %v3141
      %v3144 = vshrl.u32 %v2935, 16
      %v3146 = vrot.slane %v3144, 4
      %v3147 = vshll.u32 %v2935, 16
      %v3149 = vrot.slane %v3147, 5
      %v3150 = vor.u32 %v3146, %v3149
      %v3151 = vrot.slane %v3150, 4
      %v3153 = vshll.u32 %v2936, 16
      %v3155 = vrot.slane %v3153, 5
      %v3156 = vsel %vm1899, %v3151, %v3155
      %v3158 = vshrl.u32 %v2937, 16
      %v3160 = vrot.slane %v3158, 4
      %v3161 = vshll.u32 %v2937, 16
      %v3163 = vrot.slane %v3161, 5
      %v3164 = vor.u32 %v3160, %v3163
      %v3165 = vrot.slane %v3164, 4
      %v3167 = vshll.u32 %v2938, 16
      %v3169 = vrot.slane %v3167, 5
      %v3170 = vsel %vm1899, %v3165, %v3169
      %v3172 = vshrl.u32 %v2939, 16
      %v3174 = vrot.slane %v3172, 4
      %v3175 = vshll.u32 %v2939, 16
      %v3177 = vrot.slane %v3175, 5
      %v3178 = vor.u32 %v3174, %v3177
      %v3179 = vrot.slane %v3178, 4
      %v3181 = vshll.u32 %v2940, 16
      %v3183 = vrot.slane %v3181, 5
      %v3184 = vsel %vm1899, %v3179, %v3183
      %v3186 = vshrl.u32 %v2941, 16
      %v3188 = vrot.slane %v3186, 4
      %v3189 = vshll.u32 %v2941, 16
      %v3191 = vrot.slane %v3189, 5
      %v3192 = vor.u32 %v3188, %v3191
      %v3193 = vrot.slane %v3192, 4
      %v3195 = vshll.u32 %v2942, 16
      %v3197 = vrot.slane %v3195, 5
      %v3198 = vsel %vm1899, %v3193, %v3197
      %v3200 = vshrl.u32 %v2943, 16
      %v3202 = vrot.slane %v3200, 4
      %v3203 = vshll.u32 %v2943, 16
      %v3205 = vrot.slane %v3203, 5
      %v3206 = vor.u32 %v3202, %v3205
      %v3207 = vrot.slane %v3206, 4
      %v3209 = vshll.u32 %v2944, 16
      %v3211 = vrot.slane %v3209, 5
      %v3212 = vsel %vm1899, %v3207, %v3211
      %v3214 = vshrl.u32 %v2945, 16
      %v3216 = vrot.slane %v3214, 4
      %v3217 = vshll.u32 %v2945, 16
      %v3219 = vrot.slane %v3217, 5
      %v3220 = vor.u32 %v3216, %v3219
      %v3221 = vrot.slane %v3220, 4
      %v3223 = vshll.u32 %v2946, 16
      %v3225 = vrot.slane %v3223, 5
      %v3226 = vsel %vm1899, %v3221, %v3225
      %v3228 = vshrl.u32 %v2947, 16
      %v3230 = vrot.slane %v3228, 4
      %v3231 = vshll.u32 %v2947, 16
      %v3233 = vrot.slane %v3231, 5
      %v3234 = vor.u32 %v3230, %v3233
      %v3235 = vrot.slane %v3234, 4
      %v3237 = vshll.u32 %v2948, 16
      %v3239 = vrot.slane %v3237, 5
      %v3240 = vsel %vm1899, %v3235, %v3239
      %v3242 = vshrl.u32 %v2949, 16
      %v3244 = vrot.slane %v3242, 4
      %v3245 = vshll.u32 %v2949, 16
      %v3247 = vrot.slane %v3245, 5
      %v3248 = vor.u32 %v3244, %v3247
      %v3249 = vrot.slane %v3248, 4
      %v3251 = vshll.u32 %v2950, 16
      %v3253 = vrot.slane %v3251, 5
      %v3254 = vsel %vm1899, %v3249, %v3253
      %v3256 = vshrl.u32 %v2951, 16
      %v3258 = vrot.slane %v3256, 4
      %v3259 = vshll.u32 %v2951, 16
      %v3261 = vrot.slane %v3259, 5
      %v3262 = vor.u32 %v3258, %v3261
      %v3263 = vrot.slane %v3262, 4
      %v3265 = vshll.u32 %v2952, 16
      %v3267 = vrot.slane %v3265, 5
      %v3268 = vsel %vm1899, %v3263, %v3267
      %v3270 = vshrl.u32 %v2953, 16
      %v3272 = vrot.slane %v3270, 4
      %v3273 = vshll.u32 %v2953, 16
      %v3275 = vrot.slane %v3273, 5
      %v3276 = vor.u32 %v3272, %v3275
      %v3277 = vrot.slane %v3276, 4
      %v3279 = vshll.u32 %v2954, 16
      %v3281 = vrot.slane %v3279, 5
      %v3282 = vsel %vm1899, %v3277, %v3281
      %v3284 = vshrl.u32 %v2955, 16
      %v3286 = vrot.slane %v3284, 4
      %v3287 = vshll.u32 %v2955, 16
      %v3289 = vrot.slane %v3287, 5
      %v3290 = vor.u32 %v3286, %v3289
      %v3291 = vrot.slane %v3290, 4
      %v3293 = vshll.u32 %v2956, 16
      %v3295 = vrot.slane %v3293, 5
      %v3296 = vsel %vm1899, %v3291, %v3295
      %v3298 = vshrl.u32 %v2957, 16
      %v3300 = vrot.slane %v3298, 4
      %v3301 = vshll.u32 %v2957, 16
      %v3303 = vrot.slane %v3301, 5
      %v3304 = vor.u32 %v3300, %v3303
      %v3305 = vrot.slane %v3304, 4
      %v3307 = vshll.u32 %v2958, 16
      %v3309 = vrot.slane %v3307, 5
      %v3310 = vsel %vm1899, %v3305, %v3309
      %v3312 = vshrl.u32 %v2959, 16
      %v3314 = vrot.slane %v3312, 4
      %v3315 = vshll.u32 %v2959, 16
      %v3317 = vrot.slane %v3315, 5
      %v3318 = vor.u32 %v3314, %v3317
      %v3319 = vrot.slane %v3318, 4
      %v3321 = vshll.u32 %v2960, 16
      %v3323 = vrot.slane %v3321, 5
      %v3324 = vsel %vm1899, %v3319, %v3323
      %v3326 = vshrl.u32 %v2961, 16
      %v3328 = vrot.slane %v3326, 4
      %v3329 = vshll.u32 %v2961, 16
      %v3331 = vrot.slane %v3329, 5
      %v3332 = vor.u32 %v3328, %v3331
      %v3333 = vrot.slane %v3332, 4
      %v3335 = vshll.u32 %v2962, 16
      %v3337 = vrot.slane %v3335, 5
      %v3338 = vsel %vm1899, %v3333, %v3337
      %v3340 = vshrl.u32 %v2963, 16
      %v3342 = vrot.slane %v3340, 4
      %v3343 = vshll.u32 %v2963, 16
      %v3345 = vrot.slane %v3343, 5
      %v3346 = vor.u32 %v3342, %v3345
      %v3347 = vrot.slane %v3346, 4
      %v3349 = vshll.u32 %v2964, 16
      %v3351 = vrot.slane %v3349, 5
      %v3352 = vsel %vm1899, %v3347, %v3351
      %v3354 = vshrl.u32 %v2965, 16
      %v3356 = vrot.slane %v3354, 4
      %v3357 = vshll.u32 %v2965, 16
      %v3359 = vrot.slane %v3357, 5
      %v3360 = vor.u32 %v3356, %v3359
      %v3361 = vrot.slane %v3360, 4
      %v3363 = vshll.u32 %v2966, 16
      %v3365 = vrot.slane %v3363, 5
      %v3366 = vsel %vm1899, %v3361, %v3365
      %v3368 = vshrl.u32 %v2967, 16
      %v3370 = vrot.slane %v3368, 4
      %v3371 = vshll.u32 %v2967, 16
      %v3373 = vrot.slane %v3371, 5
      %v3374 = vor.u32 %v3370, %v3373
      %v3375 = vrot.slane %v3374, 4
      %v3377 = vshll.u32 %v2968, 16
      %v3379 = vrot.slane %v3377, 5
      %v3380 = vsel %vm1899, %v3375, %v3379
      %v3382 = vshrl.u32 %v2969, 16
      %v3384 = vrot.slane %v3382, 4
      %v3385 = vshll.u32 %v2969, 16
      %v3387 = vrot.slane %v3385, 5
      %v3388 = vor.u32 %v3384, %v3387
      %v3389 = vrot.slane %v3388, 4
      %v3391 = vshll.u32 %v2970, 16
      %v3393 = vrot.slane %v3391, 5
      %v3394 = vsel %vm1899, %v3389, %v3393
      %v3396 = vshrl.u32 %v2971, 16
      %v3398 = vrot.slane %v3396, 4
      %v3399 = vshll.u32 %v2971, 16
      %v3401 = vrot.slane %v3399, 5
      %v3402 = vor.u32 %v3398, %v3401
      %v3403 = vrot.slane %v3402, 4
      %v3405 = vshll.u32 %v2972, 16
      %v3407 = vrot.slane %v3405, 5
      %v3408 = vsel %vm1899, %v3403, %v3407
      %v3410 = vshrl.u32 %v2973, 16
      %v3412 = vrot.slane %v3410, 4
      %v3413 = vshll.u32 %v2973, 16
      %v3415 = vrot.slane %v3413, 5
      %v3416 = vor.u32 %v3412, %v3415
      %v3417 = vrot.slane %v3416, 4
      %v3419 = vshll.u32 %v2974, 16
      %v3421 = vrot.slane %v3419, 5
      %v3422 = vsel %vm1899, %v3417, %v3421
      %v3423 = vunpack.c.l.b16 %v2988
      %v3424 = vunpack.c.l.b16 %v3002
      %v3425 = vunpack.c.l.b16 %v3016
      %v3426 = vunpack.c.l.b16 %v3030
      %v3427 = vunpack.c.l.b16 %v3044
      %v3428 = vunpack.c.l.b16 %v3058
      %v3429 = vunpack.c.l.b16 %v3072
      %v3430 = vunpack.c.l.b16 %v3086
      %v3431 = vunpack.c.l.b16 %v3100
      %v3432 = vunpack.c.l.b16 %v3114
      %v3433 = vunpack.c.l.b16 %v3128
      %v3434 = vunpack.c.l.b16 %v3142
      %v3435 = vunpack.c.l.b16 %v3156
      %v3436 = vunpack.c.l.b16 %v3170
      %v3437 = vunpack.c.l.b16 %v3184
      %v3438 = vunpack.c.l.b16 %v3198
      %v3439 = vunpack.c.l.b16 %v3212
      %v3440 = vunpack.c.l.b16 %v3226
      %v3441 = vunpack.c.l.b16 %v3240
      %v3442 = vunpack.c.l.b16 %v3254
      %v3443 = vunpack.c.l.b16 %v3268
      %v3444 = vunpack.c.l.b16 %v3282
      %v3445 = vunpack.c.l.b16 %v3296
      %v3446 = vunpack.c.l.b16 %v3310
      %v3447 = vunpack.c.l.b16 %v3324
      %v3448 = vunpack.c.l.b16 %v3338
      %v3449 = vunpack.c.l.b16 %v3352
      %v3450 = vunpack.c.l.b16 %v3366
      %v3451 = vunpack.c.l.b16 %v3380
      %v3452 = vunpack.c.l.b16 %v3394
      %v3453 = vunpack.c.l.b16 %v3408
      %v3454 = vunpack.c.l.b16 %v3422
      %v3455 = vpack.c.b16 %v3424, %v3423
      %v3456 = vpack.c.b16 %v3426, %v3425
      %v3457 = vpack.c.b16 %v3428, %v3427
      %v3458 = vpack.c.b16 %v3430, %v3429
      %v3459 = vpack.c.b16 %v3432, %v3431
      %v3460 = vpack.c.b16 %v3434, %v3433
      %v3461 = vpack.c.b16 %v3436, %v3435
      %v3462 = vpack.c.b16 %v3438, %v3437
      %v3463 = vpack.c.b16 %v3440, %v3439
      %v3464 = vpack.c.b16 %v3442, %v3441
      %v3465 = vpack.c.b16 %v3444, %v3443
      %v3466 = vpack.c.b16 %v3446, %v3445
      %v3467 = vpack.c.b16 %v3448, %v3447
      %v3468 = vpack.c.b16 %v3450, %v3449
      %v3469 = vpack.c.b16 %v3452, %v3451
      %v3470 = vpack.c.b16 %v3454, %v3453
      %3487 = vst [vmem:[#allocation3 + $0x20] sm:$0xff] %v3455
      %3488 = vst [vmem:[#allocation3 + $0x68] sm:$0xff] %v3456
      %3489 = vst [vmem:[#allocation3 + $0xb0] sm:$0xff] %v3457
      %3490 = vst [vmem:[#allocation3 + $0xf8] sm:$0xff] %v3458
      %3491 = vst [vmem:[#allocation3 + $0x140] sm:$0xff] %v3459
      %3492 = vst [vmem:[#allocation3 + $0x188] sm:$0xff] %v3460
      %3493 = vst [vmem:[#allocation3 + $0x1d0] sm:$0xff] %v3461
      %3494 = vst [vmem:[#allocation3 + $0x218] sm:$0xff] %v3462
      %3495 = vst [vmem:[#allocation3 + $0x260] sm:$0xff] %v3463
      %3496 = vst [vmem:[#allocation3 + $0x2a8] sm:$0xff] %v3464
      %3497 = vst [vmem:[#allocation3 + $0x2f0] sm:$0xff] %v3465
      %3498 = vst [vmem:[#allocation3 + $0x338] sm:$0xff] %v3466
      %3499 = vst [vmem:[#allocation3 + $0x380] sm:$0xff] %v3467
      %3500 = vst [vmem:[#allocation3 + $0x3c8] sm:$0xff] %v3468
      %3501 = vst [vmem:[#allocation3 + $0x410] sm:$0xff] %v3469
      %3502 = vst [vmem:[#allocation3 + $0x458] sm:$0xff] %v3470
      %v3503 = vld [vmem:[%s418] sm:$0xe]
      %v3504 = vld [vmem:[%s418 + $0x4] sm:$0x1]
      %v3505 = vld [vmem:[%s418 + $0x8] sm:$0xe]
      %v3506 = vld [vmem:[%s418 + $0xc] sm:$0x1]
      %v3507 = vld [vmem:[%s418 + $0x10] sm:$0xe]
      %v3508 = vld [vmem:[%s418 + $0x14] sm:$0x1]
      %v3509 = vld [vmem:[%s418 + $0x18] sm:$0xe]
      %v3510 = vld [vmem:[%s418 + $0x1c] sm:$0x1]
      %v3511 = vld [vmem:[%s418 + $0x20] sm:$0xe]
      %v3512 = vld [vmem:[%s418 + $0x24] sm:$0x1]
      %v3513 = vld [vmem:[%s418 + $0x28] sm:$0xe]
      %v3514 = vld [vmem:[%s418 + $0x2c] sm:$0x1]
      %v3515 = vld [vmem:[%s418 + $0x30] sm:$0xe]
      %v3516 = vld [vmem:[%s418 + $0x34] sm:$0x1]
      %v3517 = vld [vmem:[%s418 + $0x38] sm:$0xe]
      %v3518 = vld [vmem:[%s418 + $0x3c] sm:$0x1]
      %v3519 = vld [vmem:[%s418 + $0x50] sm:$0xe]
      %v3520 = vld [vmem:[%s418 + $0x54] sm:$0x1]
      %v3521 = vld [vmem:[%s418 + $0x58] sm:$0xe]
      %v3522 = vld [vmem:[%s418 + $0x5c] sm:$0x1]
      %v3523 = vld [vmem:[%s418 + $0x60] sm:$0xe]
      %v3524 = vld [vmem:[%s418 + $0x64] sm:$0x1]
      %v3525 = vld [vmem:[%s418 + $0x68] sm:$0xe]
      %v3526 = vld [vmem:[%s418 + $0x6c] sm:$0x1]
      %v3527 = vld [vmem:[%s418 + $0x70] sm:$0xe]
      %v3528 = vld [vmem:[%s418 + $0x74] sm:$0x1]
      %v3529 = vld [vmem:[%s418 + $0x78] sm:$0xe]
      %v3530 = vld [vmem:[%s418 + $0x7c] sm:$0x1]
      %v3531 = vld [vmem:[%s418 + $0x80] sm:$0xe]
      %v3532 = vld [vmem:[%s418 + $0x84] sm:$0x1]
      %v3533 = vld [vmem:[%s418 + $0x88] sm:$0xe]
      %v3534 = vld [vmem:[%s418 + $0x8c] sm:$0x1]
      %v3535 = vld [vmem:[%s418 + $0xa0] sm:$0xe]
      %v3536 = vld [vmem:[%s418 + $0xa4] sm:$0x1]
      %v3537 = vld [vmem:[%s418 + $0xa8] sm:$0xe]
      %v3538 = vld [vmem:[%s418 + $0xac] sm:$0x1]
      %v3539 = vld [vmem:[%s418 + $0xb0] sm:$0xe]
      %v3540 = vld [vmem:[%s418 + $0xb4] sm:$0x1]
      %v3541 = vld [vmem:[%s418 + $0xb8] sm:$0xe]
      %v3542 = vld [vmem:[%s418 + $0xbc] sm:$0x1]
      %v3543 = vld [vmem:[%s418 + $0xc0] sm:$0xe]
      %v3544 = vld [vmem:[%s418 + $0xc4] sm:$0x1]
      %v3545 = vld [vmem:[%s418 + $0xc8] sm:$0xe]
      %v3546 = vld [vmem:[%s418 + $0xcc] sm:$0x1]
      %v3547 = vld [vmem:[%s418 + $0xd0] sm:$0xe]
      %v3548 = vld [vmem:[%s418 + $0xd4] sm:$0x1]
      %v3549 = vld [vmem:[%s418 + $0xd8] sm:$0xe]
      %v3550 = vld [vmem:[%s418 + $0xdc] sm:$0x1]
      %v3551 = vld [vmem:[%s418 + $0xf0] sm:$0xe]
      %v3552 = vld [vmem:[%s418 + $0xf4] sm:$0x1]
      %v3553 = vld [vmem:[%s418 + $0xf8] sm:$0xe]
      %v3554 = vld [vmem:[%s418 + $0xfc] sm:$0x1]
      %v3555 = vld [vmem:[%s418 + $0x100] sm:$0xe]
      %v3556 = vld [vmem:[%s418 + $0x104] sm:$0x1]
      %v3557 = vld [vmem:[%s418 + $0x108] sm:$0xe]
      %v3558 = vld [vmem:[%s418 + $0x10c] sm:$0x1]
      %v3559 = vld [vmem:[%s418 + $0x110] sm:$0xe]
      %v3560 = vld [vmem:[%s418 + $0x114] sm:$0x1]
      %v3561 = vld [vmem:[%s418 + $0x118] sm:$0xe]
      %v3562 = vld [vmem:[%s418 + $0x11c] sm:$0x1]
      %v3563 = vld [vmem:[%s418 + $0x120] sm:$0xe]
      %v3564 = vld [vmem:[%s418 + $0x124] sm:$0x1]
      %v3565 = vld [vmem:[%s418 + $0x128] sm:$0xe]
      %v3566 = vld [vmem:[%s418 + $0x12c] sm:$0x1]
      %v3631 = vrot.slane %v3503, 5
      %v3632 = vrot.slane %v3631, 4
      %v3633 = vrot.slane %v3504, 5
      %v3634 = vsel %vm2558, %v3632, %v3633
      %v3635 = vrot.slane %v3505, 5
      %v3636 = vrot.slane %v3635, 4
      %v3637 = vrot.slane %v3506, 5
      %v3638 = vsel %vm2558, %v3636, %v3637
      %v3639 = vrot.slane %v3507, 5
      %v3640 = vrot.slane %v3639, 4
      %v3641 = vrot.slane %v3508, 5
      %v3642 = vsel %vm2558, %v3640, %v3641
      %v3643 = vrot.slane %v3509, 5
      %v3644 = vrot.slane %v3643, 4
      %v3645 = vrot.slane %v3510, 5
      %v3646 = vsel %vm2558, %v3644, %v3645
      %v3647 = vrot.slane %v3511, 5
      %v3648 = vrot.slane %v3647, 4
      %v3649 = vrot.slane %v3512, 5
      %v3650 = vsel %vm2558, %v3648, %v3649
      %v3651 = vrot.slane %v3513, 5
      %v3652 = vrot.slane %v3651, 4
      %v3653 = vrot.slane %v3514, 5
      %v3654 = vsel %vm2558, %v3652, %v3653
      %v3655 = vrot.slane %v3515, 5
      %v3656 = vrot.slane %v3655, 4
      %v3657 = vrot.slane %v3516, 5
      %v3658 = vsel %vm2558, %v3656, %v3657
      %v3659 = vrot.slane %v3517, 5
      %v3660 = vrot.slane %v3659, 4
      %v3661 = vrot.slane %v3518, 5
      %v3662 = vsel %vm2558, %v3660, %v3661
      %v3663 = vrot.slane %v3519, 5
      %v3664 = vrot.slane %v3663, 4
      %v3665 = vrot.slane %v3520, 5
      %v3666 = vsel %vm2558, %v3664, %v3665
      %v3667 = vrot.slane %v3521, 5
      %v3668 = vrot.slane %v3667, 4
      %v3669 = vrot.slane %v3522, 5
      %v3670 = vsel %vm2558, %v3668, %v3669
      %v3671 = vrot.slane %v3523, 5
      %v3672 = vrot.slane %v3671, 4
      %v3673 = vrot.slane %v3524, 5
      %v3674 = vsel %vm2558, %v3672, %v3673
      %v3675 = vrot.slane %v3525, 5
      %v3676 = vrot.slane %v3675, 4
      %v3677 = vrot.slane %v3526, 5
      %v3678 = vsel %vm2558, %v3676, %v3677
      %v3679 = vrot.slane %v3527, 5
      %v3680 = vrot.slane %v3679, 4
      %v3681 = vrot.slane %v3528, 5
      %v3682 = vsel %vm2558, %v3680, %v3681
      %v3683 = vrot.slane %v3529, 5
      %v3684 = vrot.slane %v3683, 4
      %v3685 = vrot.slane %v3530, 5
      %v3686 = vsel %vm2558, %v3684, %v3685
      %v3687 = vrot.slane %v3531, 5
      %v3688 = vrot.slane %v3687, 4
      %v3689 = vrot.slane %v3532, 5
      %v3690 = vsel %vm2558, %v3688, %v3689
      %v3691 = vrot.slane %v3533, 5
      %v3692 = vrot.slane %v3691, 4
      %v3693 = vrot.slane %v3534, 5
      %v3694 = vsel %vm2558, %v3692, %v3693
      %v3695 = vrot.slane %v3535, 5
      %v3696 = vrot.slane %v3695, 4
      %v3697 = vrot.slane %v3536, 5
      %v3698 = vsel %vm2558, %v3696, %v3697
      %v3699 = vrot.slane %v3537, 5
      %v3700 = vrot.slane %v3699, 4
      %v3701 = vrot.slane %v3538, 5
      %v3702 = vsel %vm2558, %v3700, %v3701
      %v3703 = vrot.slane %v3539, 5
      %v3704 = vrot.slane %v3703, 4
      %v3705 = vrot.slane %v3540, 5
      %v3706 = vsel %vm2558, %v3704, %v3705
      %v3707 = vrot.slane %v3541, 5
      %v3708 = vrot.slane %v3707, 4
      %v3709 = vrot.slane %v3542, 5
      %v3710 = vsel %vm2558, %v3708, %v3709
      %v3711 = vrot.slane %v3543, 5
      %v3712 = vrot.slane %v3711, 4
      %v3713 = vrot.slane %v3544, 5
      %v3714 = vsel %vm2558, %v3712, %v3713
      %v3715 = vrot.slane %v3545, 5
      %v3716 = vrot.slane %v3715, 4
      %v3717 = vrot.slane %v3546, 5
      %v3718 = vsel %vm2558, %v3716, %v3717
      %v3719 = vrot.slane %v3547, 5
      %v3720 = vrot.slane %v3719, 4
      %v3721 = vrot.slane %v3548, 5
      %v3722 = vsel %vm2558, %v3720, %v3721
      %v3723 = vrot.slane %v3549, 5
      %v3724 = vrot.slane %v3723, 4
      %v3725 = vrot.slane %v3550, 5
      %v3726 = vsel %vm2558, %v3724, %v3725
      %v3727 = vrot.slane %v3551, 5
      %v3728 = vrot.slane %v3727, 4
      %v3729 = vrot.slane %v3552, 5
      %v3730 = vsel %vm2558, %v3728, %v3729
      %v3731 = vrot.slane %v3553, 5
      %v3732 = vrot.slane %v3731, 4
      %v3733 = vrot.slane %v3554, 5
      %v3734 = vsel %vm2558, %v3732, %v3733
      %v3735 = vrot.slane %v3555, 5
      %v3736 = vrot.slane %v3735, 4
      %v3737 = vrot.slane %v3556, 5
      %v3738 = vsel %vm2558, %v3736, %v3737
      %v3739 = vrot.slane %v3557, 5
      %v3740 = vrot.slane %v3739, 4
      %v3741 = vrot.slane %v3558, 5
      %v3742 = vsel %vm2558, %v3740, %v3741
      %v3743 = vrot.slane %v3559, 5
      %v3744 = vrot.slane %v3743, 4
      %v3745 = vrot.slane %v3560, 5
      %v3746 = vsel %vm2558, %v3744, %v3745
      %v3747 = vrot.slane %v3561, 5
      %v3748 = vrot.slane %v3747, 4
      %v3749 = vrot.slane %v3562, 5
      %v3750 = vsel %vm2558, %v3748, %v3749
      %v3751 = vrot.slane %v3563, 5
      %v3752 = vrot.slane %v3751, 4
      %v3753 = vrot.slane %v3564, 5
      %v3754 = vsel %vm2558, %v3752, %v3753
      %v3755 = vrot.slane %v3565, 5
      %v3756 = vrot.slane %v3755, 4
      %v3757 = vrot.slane %v3566, 5
      %v3758 = vsel %vm2558, %v3756, %v3757
      %v3759 = vunpack.c.l.b16 %v3634
      %v3760 = vunpack.c.l.b16 %v3638
      %v3761 = vunpack.c.l.b16 %v3642
      %v3762 = vunpack.c.l.b16 %v3646
      %v3763 = vunpack.c.l.b16 %v3650
      %v3764 = vunpack.c.l.b16 %v3654
      %v3765 = vunpack.c.l.b16 %v3658
      %v3766 = vunpack.c.l.b16 %v3662
      %v3767 = vunpack.c.l.b16 %v3666
      %v3768 = vunpack.c.l.b16 %v3670
      %v3769 = vunpack.c.l.b16 %v3674
      %v3770 = vunpack.c.l.b16 %v3678
      %v3771 = vunpack.c.l.b16 %v3682
      %v3772 = vunpack.c.l.b16 %v3686
      %v3773 = vunpack.c.l.b16 %v3690
      %v3774 = vunpack.c.l.b16 %v3694
      %v3775 = vunpack.c.l.b16 %v3698
      %v3776 = vunpack.c.l.b16 %v3702
      %v3777 = vunpack.c.l.b16 %v3706
      %v3778 = vunpack.c.l.b16 %v3710
      %v3779 = vunpack.c.l.b16 %v3714
      %v3780 = vunpack.c.l.b16 %v3718
      %v3781 = vunpack.c.l.b16 %v3722
      %v3782 = vunpack.c.l.b16 %v3726
      %v3783 = vunpack.c.l.b16 %v3730
      %v3784 = vunpack.c.l.b16 %v3734
      %v3785 = vunpack.c.l.b16 %v3738
      %v3786 = vunpack.c.l.b16 %v3742
      %v3787 = vunpack.c.l.b16 %v3746
      %v3788 = vunpack.c.l.b16 %v3750
      %v3789 = vunpack.c.l.b16 %v3754
      %v3790 = vunpack.c.l.b16 %v3758
      %v3791 = vpack.c.b16 %v3760, %v3759
      %v3792 = vpack.c.b16 %v3762, %v3761
      %v3793 = vpack.c.b16 %v3764, %v3763
      %v3794 = vpack.c.b16 %v3766, %v3765
      %v3795 = vpack.c.b16 %v3768, %v3767
      %v3796 = vpack.c.b16 %v3770, %v3769
      %v3797 = vpack.c.b16 %v3772, %v3771
      %v3798 = vpack.c.b16 %v3774, %v3773
      %v3799 = vpack.c.b16 %v3776, %v3775
      %v3800 = vpack.c.b16 %v3778, %v3777
      %v3801 = vpack.c.b16 %v3780, %v3779
      %v3802 = vpack.c.b16 %v3782, %v3781
      %v3803 = vpack.c.b16 %v3784, %v3783
      %v3804 = vpack.c.b16 %v3786, %v3785
      %v3805 = vpack.c.b16 %v3788, %v3787
      %v3806 = vpack.c.b16 %v3790, %v3789
      %3823 = vst [vmem:[#allocation3 + $0x28] sm:$0xff] %v3791
      %3824 = vst [vmem:[#allocation3 + $0x70] sm:$0xff] %v3792
      %3825 = vst [vmem:[#allocation3 + $0xb8] sm:$0xff] %v3793
      %3826 = vst [vmem:[#allocation3 + $0x100] sm:$0xff] %v3794
      %3827 = vst [vmem:[#allocation3 + $0x148] sm:$0xff] %v3795
      %3828 = vst [vmem:[#allocation3 + $0x190] sm:$0xff] %v3796
      %3829 = vst [vmem:[#allocation3 + $0x1d8] sm:$0xff] %v3797
      %3830 = vst [vmem:[#allocation3 + $0x220] sm:$0xff] %v3798
      %3831 = vst [vmem:[#allocation3 + $0x268] sm:$0xff] %v3799
      %3832 = vst [vmem:[#allocation3 + $0x2b0] sm:$0xff] %v3800
      %3833 = vst [vmem:[#allocation3 + $0x2f8] sm:$0xff] %v3801
      %3834 = vst [vmem:[#allocation3 + $0x340] sm:$0xff] %v3802
      %3835 = vst [vmem:[#allocation3 + $0x388] sm:$0xff] %v3803
      %3836 = vst [vmem:[#allocation3 + $0x3d0] sm:$0xff] %v3804
      %3837 = vst [vmem:[#allocation3 + $0x418] sm:$0xff] %v3805
      %3838 = vst [vmem:[#allocation3 + $0x460] sm:$0xff] %v3806
      %s3839 = scalar_lea.vmem [#allocation2], 16
      %v3840 = vld [vmem:[%s3839] sm:$0xf]
      %v3841 = vld [vmem:[%s3839 + $0x8] sm:$0xf]
      %v3842 = vld [vmem:[%s3839 + $0x10] sm:$0xf]
      %v3843 = vld [vmem:[%s3839 + $0x18] sm:$0xf]
      %v3844 = vld [vmem:[%s3839 + $0x20] sm:$0xf]
      %v3845 = vld [vmem:[%s3839 + $0x28] sm:$0xf]
      %v3846 = vld [vmem:[%s3839 + $0x30] sm:$0xf]
      %v3847 = vld [vmem:[%s3839 + $0x38] sm:$0xf]
      %v3848 = vld [vmem:[%s3839 + $0x50] sm:$0xf]
      %v3849 = vld [vmem:[%s3839 + $0x58] sm:$0xf]
      %v3850 = vld [vmem:[%s3839 + $0x60] sm:$0xf]
      %v3851 = vld [vmem:[%s3839 + $0x68] sm:$0xf]
      %v3852 = vld [vmem:[%s3839 + $0x70] sm:$0xf]
      %v3853 = vld [vmem:[%s3839 + $0x78] sm:$0xf]
      %v3854 = vld [vmem:[%s3839 + $0x80] sm:$0xf]
      %v3855 = vld [vmem:[%s3839 + $0x88] sm:$0xf]
      %v3856 = vld [vmem:[%s3839 + $0xa0] sm:$0xf]
      %v3857 = vld [vmem:[%s3839 + $0xa8] sm:$0xf]
      %v3858 = vld [vmem:[%s3839 + $0xb0] sm:$0xf]
      %v3859 = vld [vmem:[%s3839 + $0xb8] sm:$0xf]
      %v3860 = vld [vmem:[%s3839 + $0xc0] sm:$0xf]
      %v3861 = vld [vmem:[%s3839 + $0xc8] sm:$0xf]
      %v3862 = vld [vmem:[%s3839 + $0xd0] sm:$0xf]
      %v3863 = vld [vmem:[%s3839 + $0xd8] sm:$0xf]
      %v3864 = vld [vmem:[%s3839 + $0xf0] sm:$0xf]
      %v3865 = vld [vmem:[%s3839 + $0xf8] sm:$0xf]
      %v3866 = vld [vmem:[%s3839 + $0x100] sm:$0xf]
      %v3867 = vld [vmem:[%s3839 + $0x108] sm:$0xf]
      %v3868 = vld [vmem:[%s3839 + $0x110] sm:$0xf]
      %v3869 = vld [vmem:[%s3839 + $0x118] sm:$0xf]
      %v3870 = vld [vmem:[%s3839 + $0x120] sm:$0xf]
      %v3871 = vld [vmem:[%s3839 + $0x128] sm:$0xf]
      %v3904 = vunpack.c.l.b16 %v3840
      %v3905 = vunpack.c.l.b16 %v3841
      %v3906 = vunpack.c.l.b16 %v3842
      %v3907 = vunpack.c.l.b16 %v3843
      %v3908 = vunpack.c.l.b16 %v3844
      %v3909 = vunpack.c.l.b16 %v3845
      %v3910 = vunpack.c.l.b16 %v3846
      %v3911 = vunpack.c.l.b16 %v3847
      %v3912 = vunpack.c.l.b16 %v3848
      %v3913 = vunpack.c.l.b16 %v3849
      %v3914 = vunpack.c.l.b16 %v3850
      %v3915 = vunpack.c.l.b16 %v3851
      %v3916 = vunpack.c.l.b16 %v3852
      %v3917 = vunpack.c.l.b16 %v3853
      %v3918 = vunpack.c.l.b16 %v3854
      %v3919 = vunpack.c.l.b16 %v3855
      %v3920 = vunpack.c.l.b16 %v3856
      %v3921 = vunpack.c.l.b16 %v3857
      %v3922 = vunpack.c.l.b16 %v3858
      %v3923 = vunpack.c.l.b16 %v3859
      %v3924 = vunpack.c.l.b16 %v3860
      %v3925 = vunpack.c.l.b16 %v3861
      %v3926 = vunpack.c.l.b16 %v3862
      %v3927 = vunpack.c.l.b16 %v3863
      %v3928 = vunpack.c.l.b16 %v3864
      %v3929 = vunpack.c.l.b16 %v3865
      %v3930 = vunpack.c.l.b16 %v3866
      %v3931 = vunpack.c.l.b16 %v3867
      %v3932 = vunpack.c.l.b16 %v3868
      %v3933 = vunpack.c.l.b16 %v3869
      %v3934 = vunpack.c.l.b16 %v3870
      %v3935 = vunpack.c.l.b16 %v3871
      %v3936 = vpack.c.b16 %v3905, %v3904
      %v3937 = vpack.c.b16 %v3907, %v3906
      %v3938 = vpack.c.b16 %v3909, %v3908
      %v3939 = vpack.c.b16 %v3911, %v3910
      %v3940 = vpack.c.b16 %v3913, %v3912
      %v3941 = vpack.c.b16 %v3915, %v3914
      %v3942 = vpack.c.b16 %v3917, %v3916
      %v3943 = vpack.c.b16 %v3919, %v3918
      %v3944 = vpack.c.b16 %v3921, %v3920
      %v3945 = vpack.c.b16 %v3923, %v3922
      %v3946 = vpack.c.b16 %v3925, %v3924
      %v3947 = vpack.c.b16 %v3927, %v3926
      %v3948 = vpack.c.b16 %v3929, %v3928
      %v3949 = vpack.c.b16 %v3931, %v3930
      %v3950 = vpack.c.b16 %v3933, %v3932
      %v3951 = vpack.c.b16 %v3935, %v3934
      %3968 = vst [vmem:[#allocation3 + $0x30] sm:$0xff] %v3936
      %3969 = vst [vmem:[#allocation3 + $0x78] sm:$0xff] %v3937
      %3970 = vst [vmem:[#allocation3 + $0xc0] sm:$0xff] %v3938
      %3971 = vst [vmem:[#allocation3 + $0x108] sm:$0xff] %v3939
      %3972 = vst [vmem:[#allocation3 + $0x150] sm:$0xff] %v3940
      %3973 = vst [vmem:[#allocation3 + $0x198] sm:$0xff] %v3941
      %3974 = vst [vmem:[#allocation3 + $0x1e0] sm:$0xff] %v3942
      %3975 = vst [vmem:[#allocation3 + $0x228] sm:$0xff] %v3943
      %3976 = vst [vmem:[#allocation3 + $0x270] sm:$0xff] %v3944
      %3977 = vst [vmem:[#allocation3 + $0x2b8] sm:$0xff] %v3945
      %3978 = vst [vmem:[#allocation3 + $0x300] sm:$0xff] %v3946
      %3979 = vst [vmem:[#allocation3 + $0x348] sm:$0xff] %v3947
      %3980 = vst [vmem:[#allocation3 + $0x390] sm:$0xff] %v3948
      %3981 = vst [vmem:[#allocation3 + $0x3d8] sm:$0xff] %v3949
      %3982 = vst [vmem:[#allocation3 + $0x420] sm:$0xff] %v3950
      %3983 = vst [vmem:[#allocation3 + $0x468] sm:$0xff] %v3951
      %v3984 = vld [vmem:[%s3839] sm:$0xf]
      %v3985 = vld [vmem:[%s3839 + $0x4] sm:$0x1]
      %v3986 = vld [vmem:[%s3839 + $0x8] sm:$0xf]
      %v3987 = vld [vmem:[%s3839 + $0xc] sm:$0x1]
      %v3988 = vld [vmem:[%s3839 + $0x10] sm:$0xf]
      %v3989 = vld [vmem:[%s3839 + $0x14] sm:$0x1]
      %v3990 = vld [vmem:[%s3839 + $0x18] sm:$0xf]
      %v3991 = vld [vmem:[%s3839 + $0x1c] sm:$0x1]
      %v3992 = vld [vmem:[%s3839 + $0x20] sm:$0xf]
      %v3993 = vld [vmem:[%s3839 + $0x24] sm:$0x1]
      %v3994 = vld [vmem:[%s3839 + $0x28] sm:$0xf]
      %v3995 = vld [vmem:[%s3839 + $0x2c] sm:$0x1]
      %v3996 = vld [vmem:[%s3839 + $0x30] sm:$0xf]
      %v3997 = vld [vmem:[%s3839 + $0x34] sm:$0x1]
      %v3998 = vld [vmem:[%s3839 + $0x38] sm:$0xf]
      %v3999 = vld [vmem:[%s3839 + $0x3c] sm:$0x1]
      %v4000 = vld [vmem:[%s3839 + $0x50] sm:$0xf]
      %v4001 = vld [vmem:[%s3839 + $0x54] sm:$0x1]
      %v4002 = vld [vmem:[%s3839 + $0x58] sm:$0xf]
      %v4003 = vld [vmem:[%s3839 + $0x5c] sm:$0x1]
      %v4004 = vld [vmem:[%s3839 + $0x60] sm:$0xf]
      %v4005 = vld [vmem:[%s3839 + $0x64] sm:$0x1]
      %v4006 = vld [vmem:[%s3839 + $0x68] sm:$0xf]
      %v4007 = vld [vmem:[%s3839 + $0x6c] sm:$0x1]
      %v4008 = vld [vmem:[%s3839 + $0x70] sm:$0xf]
      %v4009 = vld [vmem:[%s3839 + $0x74] sm:$0x1]
      %v4010 = vld [vmem:[%s3839 + $0x78] sm:$0xf]
      %v4011 = vld [vmem:[%s3839 + $0x7c] sm:$0x1]
      %v4012 = vld [vmem:[%s3839 + $0x80] sm:$0xf]
      %v4013 = vld [vmem:[%s3839 + $0x84] sm:$0x1]
      %v4014 = vld [vmem:[%s3839 + $0x88] sm:$0xf]
      %v4015 = vld [vmem:[%s3839 + $0x8c] sm:$0x1]
      %v4016 = vld [vmem:[%s3839 + $0xa0] sm:$0xf]
      %v4017 = vld [vmem:[%s3839 + $0xa4] sm:$0x1]
      %v4018 = vld [vmem:[%s3839 + $0xa8] sm:$0xf]
      %v4019 = vld [vmem:[%s3839 + $0xac] sm:$0x1]
      %v4020 = vld [vmem:[%s3839 + $0xb0] sm:$0xf]
      %v4021 = vld [vmem:[%s3839 + $0xb4] sm:$0x1]
      %v4022 = vld [vmem:[%s3839 + $0xb8] sm:$0xf]
      %v4023 = vld [vmem:[%s3839 + $0xbc] sm:$0x1]
      %v4024 = vld [vmem:[%s3839 + $0xc0] sm:$0xf]
      %v4025 = vld [vmem:[%s3839 + $0xc4] sm:$0x1]
      %v4026 = vld [vmem:[%s3839 + $0xc8] sm:$0xf]
      %v4027 = vld [vmem:[%s3839 + $0xcc] sm:$0x1]
      %v4028 = vld [vmem:[%s3839 + $0xd0] sm:$0xf]
      %v4029 = vld [vmem:[%s3839 + $0xd4] sm:$0x1]
      %v4030 = vld [vmem:[%s3839 + $0xd8] sm:$0xf]
      %v4031 = vld [vmem:[%s3839 + $0xdc] sm:$0x1]
      %v4032 = vld [vmem:[%s3839 + $0xf0] sm:$0xf]
      %v4033 = vld [vmem:[%s3839 + $0xf4] sm:$0x1]
      %v4034 = vld [vmem:[%s3839 + $0xf8] sm:$0xf]
      %v4035 = vld [vmem:[%s3839 + $0xfc] sm:$0x1]
      %v4036 = vld [vmem:[%s3839 + $0x100] sm:$0xf]
      %v4037 = vld [vmem:[%s3839 + $0x104] sm:$0x1]
      %v4038 = vld [vmem:[%s3839 + $0x108] sm:$0xf]
      %v4039 = vld [vmem:[%s3839 + $0x10c] sm:$0x1]
      %v4040 = vld [vmem:[%s3839 + $0x110] sm:$0xf]
      %v4041 = vld [vmem:[%s3839 + $0x114] sm:$0x1]
      %v4042 = vld [vmem:[%s3839 + $0x118] sm:$0xf]
      %v4043 = vld [vmem:[%s3839 + $0x11c] sm:$0x1]
      %v4044 = vld [vmem:[%s3839 + $0x120] sm:$0xf]
      %v4045 = vld [vmem:[%s3839 + $0x124] sm:$0x1]
      %v4046 = vld [vmem:[%s3839 + $0x128] sm:$0xf]
      %v4047 = vld [vmem:[%s3839 + $0x12c] sm:$0x1]
      %v4049 = vshrl.u32 %v3984, 16
      %v4051 = vrot.slane %v4049, 4
      %v4052 = vshll.u32 %v3984, 16
      %v4054 = vrot.slane %v4052, 5
      %v4055 = vor.u32 %v4051, %v4054
      %v4056 = vrot.slane %v4055, 4
      %v4058 = vshll.u32 %v3985, 16
      %v4060 = vrot.slane %v4058, 5
      %v4061 = vsel %vm1899, %v4056, %v4060
      %v4063 = vshrl.u32 %v3986, 16
      %v4065 = vrot.slane %v4063, 4
      %v4066 = vshll.u32 %v3986, 16
      %v4068 = vrot.slane %v4066, 5
      %v4069 = vor.u32 %v4065, %v4068
      %v4070 = vrot.slane %v4069, 4
      %v4072 = vshll.u32 %v3987, 16
      %v4074 = vrot.slane %v4072, 5
      %v4075 = vsel %vm1899, %v4070, %v4074
      %v4077 = vshrl.u32 %v3988, 16
      %v4079 = vrot.slane %v4077, 4
      %v4080 = vshll.u32 %v3988, 16
      %v4082 = vrot.slane %v4080, 5
      %v4083 = vor.u32 %v4079, %v4082
      %v4084 = vrot.slane %v4083, 4
      %v4086 = vshll.u32 %v3989, 16
      %v4088 = vrot.slane %v4086, 5
      %v4089 = vsel %vm1899, %v4084, %v4088
      %v4091 = vshrl.u32 %v3990, 16
      %v4093 = vrot.slane %v4091, 4
      %v4094 = vshll.u32 %v3990, 16
      %v4096 = vrot.slane %v4094, 5
      %v4097 = vor.u32 %v4093, %v4096
      %v4098 = vrot.slane %v4097, 4
      %v4100 = vshll.u32 %v3991, 16
      %v4102 = vrot.slane %v4100, 5
      %v4103 = vsel %vm1899, %v4098, %v4102
      %v4105 = vshrl.u32 %v3992, 16
      %v4107 = vrot.slane %v4105, 4
      %v4108 = vshll.u32 %v3992, 16
      %v4110 = vrot.slane %v4108, 5
      %v4111 = vor.u32 %v4107, %v4110
      %v4112 = vrot.slane %v4111, 4
      %v4114 = vshll.u32 %v3993, 16
      %v4116 = vrot.slane %v4114, 5
      %v4117 = vsel %vm1899, %v4112, %v4116
      %v4119 = vshrl.u32 %v3994, 16
      %v4121 = vrot.slane %v4119, 4
      %v4122 = vshll.u32 %v3994, 16
      %v4124 = vrot.slane %v4122, 5
      %v4125 = vor.u32 %v4121, %v4124
      %v4126 = vrot.slane %v4125, 4
      %v4128 = vshll.u32 %v3995, 16
      %v4130 = vrot.slane %v4128, 5
      %v4131 = vsel %vm1899, %v4126, %v4130
      %v4133 = vshrl.u32 %v3996, 16
      %v4135 = vrot.slane %v4133, 4
      %v4136 = vshll.u32 %v3996, 16
      %v4138 = vrot.slane %v4136, 5
      %v4139 = vor.u32 %v4135, %v4138
      %v4140 = vrot.slane %v4139, 4
      %v4142 = vshll.u32 %v3997, 16
      %v4144 = vrot.slane %v4142, 5
      %v4145 = vsel %vm1899, %v4140, %v4144
      %v4147 = vshrl.u32 %v3998, 16
      %v4149 = vrot.slane %v4147, 4
      %v4150 = vshll.u32 %v3998, 16
      %v4152 = vrot.slane %v4150, 5
      %v4153 = vor.u32 %v4149, %v4152
      %v4154 = vrot.slane %v4153, 4
      %v4156 = vshll.u32 %v3999, 16
      %v4158 = vrot.slane %v4156, 5
      %v4159 = vsel %vm1899, %v4154, %v4158
      %v4161 = vshrl.u32 %v4000, 16
      %v4163 = vrot.slane %v4161, 4
      %v4164 = vshll.u32 %v4000, 16
      %v4166 = vrot.slane %v4164, 5
      %v4167 = vor.u32 %v4163, %v4166
      %v4168 = vrot.slane %v4167, 4
      %v4170 = vshll.u32 %v4001, 16
      %v4172 = vrot.slane %v4170, 5
      %v4173 = vsel %vm1899, %v4168, %v4172
      %v4175 = vshrl.u32 %v4002, 16
      %v4177 = vrot.slane %v4175, 4
      %v4178 = vshll.u32 %v4002, 16
      %v4180 = vrot.slane %v4178, 5
      %v4181 = vor.u32 %v4177, %v4180
      %v4182 = vrot.slane %v4181, 4
      %v4184 = vshll.u32 %v4003, 16
      %v4186 = vrot.slane %v4184, 5
      %v4187 = vsel %vm1899, %v4182, %v4186
      %v4189 = vshrl.u32 %v4004, 16
      %v4191 = vrot.slane %v4189, 4
      %v4192 = vshll.u32 %v4004, 16
      %v4194 = vrot.slane %v4192, 5
      %v4195 = vor.u32 %v4191, %v4194
      %v4196 = vrot.slane %v4195, 4
      %v4198 = vshll.u32 %v4005, 16
      %v4200 = vrot.slane %v4198, 5
      %v4201 = vsel %vm1899, %v4196, %v4200
      %v4203 = vshrl.u32 %v4006, 16
      %v4205 = vrot.slane %v4203, 4
      %v4206 = vshll.u32 %v4006, 16
      %v4208 = vrot.slane %v4206, 5
      %v4209 = vor.u32 %v4205, %v4208
      %v4210 = vrot.slane %v4209, 4
      %v4212 = vshll.u32 %v4007, 16
      %v4214 = vrot.slane %v4212, 5
      %v4215 = vsel %vm1899, %v4210, %v4214
      %v4217 = vshrl.u32 %v4008, 16
      %v4219 = vrot.slane %v4217, 4
      %v4220 = vshll.u32 %v4008, 16
      %v4222 = vrot.slane %v4220, 5
      %v4223 = vor.u32 %v4219, %v4222
      %v4224 = vrot.slane %v4223, 4
      %v4226 = vshll.u32 %v4009, 16
      %v4228 = vrot.slane %v4226, 5
      %v4229 = vsel %vm1899, %v4224, %v4228
      %v4231 = vshrl.u32 %v4010, 16
      %v4233 = vrot.slane %v4231, 4
      %v4234 = vshll.u32 %v4010, 16
      %v4236 = vrot.slane %v4234, 5
      %v4237 = vor.u32 %v4233, %v4236
      %v4238 = vrot.slane %v4237, 4
      %v4240 = vshll.u32 %v4011, 16
      %v4242 = vrot.slane %v4240, 5
      %v4243 = vsel %vm1899, %v4238, %v4242
      %v4245 = vshrl.u32 %v4012, 16
      %v4247 = vrot.slane %v4245, 4
      %v4248 = vshll.u32 %v4012, 16
      %v4250 = vrot.slane %v4248, 5
      %v4251 = vor.u32 %v4247, %v4250
      %v4252 = vrot.slane %v4251, 4
      %v4254 = vshll.u32 %v4013, 16
      %v4256 = vrot.slane %v4254, 5
      %v4257 = vsel %vm1899, %v4252, %v4256
      %v4259 = vshrl.u32 %v4014, 16
      %v4261 = vrot.slane %v4259, 4
      %v4262 = vshll.u32 %v4014, 16
      %v4264 = vrot.slane %v4262, 5
      %v4265 = vor.u32 %v4261, %v4264
      %v4266 = vrot.slane %v4265, 4
      %v4268 = vshll.u32 %v4015, 16
      %v4270 = vrot.slane %v4268, 5
      %v4271 = vsel %vm1899, %v4266, %v4270
      %v4273 = vshrl.u32 %v4016, 16
      %v4275 = vrot.slane %v4273, 4
      %v4276 = vshll.u32 %v4016, 16
      %v4278 = vrot.slane %v4276, 5
      %v4279 = vor.u32 %v4275, %v4278
      %v4280 = vrot.slane %v4279, 4
      %v4282 = vshll.u32 %v4017, 16
      %v4284 = vrot.slane %v4282, 5
      %v4285 = vsel %vm1899, %v4280, %v4284
      %v4287 = vshrl.u32 %v4018, 16
      %v4289 = vrot.slane %v4287, 4
      %v4290 = vshll.u32 %v4018, 16
      %v4292 = vrot.slane %v4290, 5
      %v4293 = vor.u32 %v4289, %v4292
      %v4294 = vrot.slane %v4293, 4
      %v4296 = vshll.u32 %v4019, 16
      %v4298 = vrot.slane %v4296, 5
      %v4299 = vsel %vm1899, %v4294, %v4298
      %v4301 = vshrl.u32 %v4020, 16
      %v4303 = vrot.slane %v4301, 4
      %v4304 = vshll.u32 %v4020, 16
      %v4306 = vrot.slane %v4304, 5
      %v4307 = vor.u32 %v4303, %v4306
      %v4308 = vrot.slane %v4307, 4
      %v4310 = vshll.u32 %v4021, 16
      %v4312 = vrot.slane %v4310, 5
      %v4313 = vsel %vm1899, %v4308, %v4312
      %v4315 = vshrl.u32 %v4022, 16
      %v4317 = vrot.slane %v4315, 4
      %v4318 = vshll.u32 %v4022, 16
      %v4320 = vrot.slane %v4318, 5
      %v4321 = vor.u32 %v4317, %v4320
      %v4322 = vrot.slane %v4321, 4
      %v4324 = vshll.u32 %v4023, 16
      %v4326 = vrot.slane %v4324, 5
      %v4327 = vsel %vm1899, %v4322, %v4326
      %v4329 = vshrl.u32 %v4024, 16
      %v4331 = vrot.slane %v4329, 4
      %v4332 = vshll.u32 %v4024, 16
      %v4334 = vrot.slane %v4332, 5
      %v4335 = vor.u32 %v4331, %v4334
      %v4336 = vrot.slane %v4335, 4
      %v4338 = vshll.u32 %v4025, 16
      %v4340 = vrot.slane %v4338, 5
      %v4341 = vsel %vm1899, %v4336, %v4340
      %v4343 = vshrl.u32 %v4026, 16
      %v4345 = vrot.slane %v4343, 4
      %v4346 = vshll.u32 %v4026, 16
      %v4348 = vrot.slane %v4346, 5
      %v4349 = vor.u32 %v4345, %v4348
      %v4350 = vrot.slane %v4349, 4
      %v4352 = vshll.u32 %v4027, 16
      %v4354 = vrot.slane %v4352, 5
      %v4355 = vsel %vm1899, %v4350, %v4354
      %v4357 = vshrl.u32 %v4028, 16
      %v4359 = vrot.slane %v4357, 4
      %v4360 = vshll.u32 %v4028, 16
      %v4362 = vrot.slane %v4360, 5
      %v4363 = vor.u32 %v4359, %v4362
      %v4364 = vrot.slane %v4363, 4
      %v4366 = vshll.u32 %v4029, 16
      %v4368 = vrot.slane %v4366, 5
      %v4369 = vsel %vm1899, %v4364, %v4368
      %v4371 = vshrl.u32 %v4030, 16
      %v4373 = vrot.slane %v4371, 4
      %v4374 = vshll.u32 %v4030, 16
      %v4376 = vrot.slane %v4374, 5
      %v4377 = vor.u32 %v4373, %v4376
      %v4378 = vrot.slane %v4377, 4
      %v4380 = vshll.u32 %v4031, 16
      %v4382 = vrot.slane %v4380, 5
      %v4383 = vsel %vm1899, %v4378, %v4382
      %v4385 = vshrl.u32 %v4032, 16
      %v4387 = vrot.slane %v4385, 4
      %v4388 = vshll.u32 %v4032, 16
      %v4390 = vrot.slane %v4388, 5
      %v4391 = vor.u32 %v4387, %v4390
      %v4392 = vrot.slane %v4391, 4
      %v4394 = vshll.u32 %v4033, 16
      %v4396 = vrot.slane %v4394, 5
      %v4397 = vsel %vm1899, %v4392, %v4396
      %v4399 = vshrl.u32 %v4034, 16
      %v4401 = vrot.slane %v4399, 4
      %v4402 = vshll.u32 %v4034, 16
      %v4404 = vrot.slane %v4402, 5
      %v4405 = vor.u32 %v4401, %v4404
      %v4406 = vrot.slane %v4405, 4
      %v4408 = vshll.u32 %v4035, 16
      %v4410 = vrot.slane %v4408, 5
      %v4411 = vsel %vm1899, %v4406, %v4410
      %v4413 = vshrl.u32 %v4036, 16
      %v4415 = vrot.slane %v4413, 4
      %v4416 = vshll.u32 %v4036, 16
      %v4418 = vrot.slane %v4416, 5
      %v4419 = vor.u32 %v4415, %v4418
      %v4420 = vrot.slane %v4419, 4
      %v4422 = vshll.u32 %v4037, 16
      %v4424 = vrot.slane %v4422, 5
      %v4425 = vsel %vm1899, %v4420, %v4424
      %v4427 = vshrl.u32 %v4038, 16
      %v4429 = vrot.slane %v4427, 4
      %v4430 = vshll.u32 %v4038, 16
      %v4432 = vrot.slane %v4430, 5
      %v4433 = vor.u32 %v4429, %v4432
      %v4434 = vrot.slane %v4433, 4
      %v4436 = vshll.u32 %v4039, 16
      %v4438 = vrot.slane %v4436, 5
      %v4439 = vsel %vm1899, %v4434, %v4438
      %v4441 = vshrl.u32 %v4040, 16
      %v4443 = vrot.slane %v4441, 4
      %v4444 = vshll.u32 %v4040, 16
      %v4446 = vrot.slane %v4444, 5
      %v4447 = vor.u32 %v4443, %v4446
      %v4448 = vrot.slane %v4447, 4
      %v4450 = vshll.u32 %v4041, 16
      %v4452 = vrot.slane %v4450, 5
      %v4453 = vsel %vm1899, %v4448, %v4452
      %v4455 = vshrl.u32 %v4042, 16
      %v4457 = vrot.slane %v4455, 4
      %v4458 = vshll.u32 %v4042, 16
      %v4460 = vrot.slane %v4458, 5
      %v4461 = vor.u32 %v4457, %v4460
      %v4462 = vrot.slane %v4461, 4
      %v4464 = vshll.u32 %v4043, 16
      %v4466 = vrot.slane %v4464, 5
      %v4467 = vsel %vm1899, %v4462, %v4466
      %v4469 = vshrl.u32 %v4044, 16
      %v4471 = vrot.slane %v4469, 4
      %v4472 = vshll.u32 %v4044, 16
      %v4474 = vrot.slane %v4472, 5
      %v4475 = vor.u32 %v4471, %v4474
      %v4476 = vrot.slane %v4475, 4
      %v4478 = vshll.u32 %v4045, 16
      %v4480 = vrot.slane %v4478, 5
      %v4481 = vsel %vm1899, %v4476, %v4480
      %v4483 = vshrl.u32 %v4046, 16
      %v4485 = vrot.slane %v4483, 4
      %v4486 = vshll.u32 %v4046, 16
      %v4488 = vrot.slane %v4486, 5
      %v4489 = vor.u32 %v4485, %v4488
      %v4490 = vrot.slane %v4489, 4
      %v4492 = vshll.u32 %v4047, 16
      %v4494 = vrot.slane %v4492, 5
      %v4495 = vsel %vm1899, %v4490, %v4494
      %v4496 = vunpack.c.l.b16 %v4061
      %v4497 = vunpack.c.l.b16 %v4075
      %v4498 = vunpack.c.l.b16 %v4089
      %v4499 = vunpack.c.l.b16 %v4103
      %v4500 = vunpack.c.l.b16 %v4117
      %v4501 = vunpack.c.l.b16 %v4131
      %v4502 = vunpack.c.l.b16 %v4145
      %v4503 = vunpack.c.l.b16 %v4159
      %v4504 = vunpack.c.l.b16 %v4173
      %v4505 = vunpack.c.l.b16 %v4187
      %v4506 = vunpack.c.l.b16 %v4201
      %v4507 = vunpack.c.l.b16 %v4215
      %v4508 = vunpack.c.l.b16 %v4229
      %v4509 = vunpack.c.l.b16 %v4243
      %v4510 = vunpack.c.l.b16 %v4257
      %v4511 = vunpack.c.l.b16 %v4271
      %v4512 = vunpack.c.l.b16 %v4285
      %v4513 = vunpack.c.l.b16 %v4299
      %v4514 = vunpack.c.l.b16 %v4313
      %v4515 = vunpack.c.l.b16 %v4327
      %v4516 = vunpack.c.l.b16 %v4341
      %v4517 = vunpack.c.l.b16 %v4355
      %v4518 = vunpack.c.l.b16 %v4369
      %v4519 = vunpack.c.l.b16 %v4383
      %v4520 = vunpack.c.l.b16 %v4397
      %v4521 = vunpack.c.l.b16 %v4411
      %v4522 = vunpack.c.l.b16 %v4425
      %v4523 = vunpack.c.l.b16 %v4439
      %v4524 = vunpack.c.l.b16 %v4453
      %v4525 = vunpack.c.l.b16 %v4467
      %v4526 = vunpack.c.l.b16 %v4481
      %v4527 = vunpack.c.l.b16 %v4495
      %v4528 = vpack.c.b16 %v4497, %v4496
      %v4529 = vpack.c.b16 %v4499, %v4498
      %v4530 = vpack.c.b16 %v4501, %v4500
      %v4531 = vpack.c.b16 %v4503, %v4502
      %v4532 = vpack.c.b16 %v4505, %v4504
      %v4533 = vpack.c.b16 %v4507, %v4506
      %v4534 = vpack.c.b16 %v4509, %v4508
      %v4535 = vpack.c.b16 %v4511, %v4510
      %v4536 = vpack.c.b16 %v4513, %v4512
      %v4537 = vpack.c.b16 %v4515, %v4514
      %v4538 = vpack.c.b16 %v4517, %v4516
      %v4539 = vpack.c.b16 %v4519, %v4518
      %v4540 = vpack.c.b16 %v4521, %v4520
      %v4541 = vpack.c.b16 %v4523, %v4522
      %v4542 = vpack.c.b16 %v4525, %v4524
      %v4543 = vpack.c.b16 %v4527, %v4526
      %4560 = vst [vmem:[#allocation3 + $0x38] sm:$0xff] %v4528
      %4561 = vst [vmem:[#allocation3 + $0x80] sm:$0xff] %v4529
      %4562 = vst [vmem:[#allocation3 + $0xc8] sm:$0xff] %v4530
      %4563 = vst [vmem:[#allocation3 + $0x110] sm:$0xff] %v4531
      %4564 = vst [vmem:[#allocation3 + $0x158] sm:$0xff] %v4532
      %4565 = vst [vmem:[#allocation3 + $0x1a0] sm:$0xff] %v4533
      %4566 = vst [vmem:[#allocation3 + $0x1e8] sm:$0xff] %v4534
      %4567 = vst [vmem:[#allocation3 + $0x230] sm:$0xff] %v4535
      %4568 = vst [vmem:[#allocation3 + $0x278] sm:$0xff] %v4536
      %4569 = vst [vmem:[#allocation3 + $0x2c0] sm:$0xff] %v4537
      %4570 = vst [vmem:[#allocation3 + $0x308] sm:$0xff] %v4538
      %4571 = vst [vmem:[#allocation3 + $0x350] sm:$0xff] %v4539
      %4572 = vst [vmem:[#allocation3 + $0x398] sm:$0xff] %v4540
      %4573 = vst [vmem:[#allocation3 + $0x3e0] sm:$0xff] %v4541
      %4574 = vst [vmem:[#allocation3 + $0x428] sm:$0xff] %v4542
      %4575 = vst [vmem:[#allocation3 + $0x470] sm:$0xff] %v4543
      %v4576 = vld [vmem:[%s3839] sm:$0xe]
      %v4577 = vld [vmem:[%s3839 + $0x4] sm:$0x1]
      %v4578 = vld [vmem:[%s3839 + $0x8] sm:$0xe]
      %v4579 = vld [vmem:[%s3839 + $0xc] sm:$0x1]
      %v4580 = vld [vmem:[%s3839 + $0x10] sm:$0xe]
      %v4581 = vld [vmem:[%s3839 + $0x14] sm:$0x1]
      %v4582 = vld [vmem:[%s3839 + $0x18] sm:$0xe]
      %v4583 = vld [vmem:[%s3839 + $0x1c] sm:$0x1]
      %v4584 = vld [vmem:[%s3839 + $0x20] sm:$0xe]
      %v4585 = vld [vmem:[%s3839 + $0x24] sm:$0x1]
      %v4586 = vld [vmem:[%s3839 + $0x28] sm:$0xe]
      %v4587 = vld [vmem:[%s3839 + $0x2c] sm:$0x1]
      %v4588 = vld [vmem:[%s3839 + $0x30] sm:$0xe]
      %v4589 = vld [vmem:[%s3839 + $0x34] sm:$0x1]
      %v4590 = vld [vmem:[%s3839 + $0x38] sm:$0xe]
      %v4591 = vld [vmem:[%s3839 + $0x3c] sm:$0x1]
      %v4592 = vld [vmem:[%s3839 + $0x50] sm:$0xe]
      %v4593 = vld [vmem:[%s3839 + $0x54] sm:$0x1]
      %v4594 = vld [vmem:[%s3839 + $0x58] sm:$0xe]
      %v4595 = vld [vmem:[%s3839 + $0x5c] sm:$0x1]
      %v4596 = vld [vmem:[%s3839 + $0x60] sm:$0xe]
      %v4597 = vld [vmem:[%s3839 + $0x64] sm:$0x1]
      %v4598 = vld [vmem:[%s3839 + $0x68] sm:$0xe]
      %v4599 = vld [vmem:[%s3839 + $0x6c] sm:$0x1]
      %v4600 = vld [vmem:[%s3839 + $0x70] sm:$0xe]
      %v4601 = vld [vmem:[%s3839 + $0x74] sm:$0x1]
      %v4602 = vld [vmem:[%s3839 + $0x78] sm:$0xe]
      %v4603 = vld [vmem:[%s3839 + $0x7c] sm:$0x1]
      %v4604 = vld [vmem:[%s3839 + $0x80] sm:$0xe]
      %v4605 = vld [vmem:[%s3839 + $0x84] sm:$0x1]
      %v4606 = vld [vmem:[%s3839 + $0x88] sm:$0xe]
      %v4607 = vld [vmem:[%s3839 + $0x8c] sm:$0x1]
      %v4608 = vld [vmem:[%s3839 + $0xa0] sm:$0xe]
      %v4609 = vld [vmem:[%s3839 + $0xa4] sm:$0x1]
      %v4610 = vld [vmem:[%s3839 + $0xa8] sm:$0xe]
      %v4611 = vld [vmem:[%s3839 + $0xac] sm:$0x1]
      %v4612 = vld [vmem:[%s3839 + $0xb0] sm:$0xe]
      %v4613 = vld [vmem:[%s3839 + $0xb4] sm:$0x1]
      %v4614 = vld [vmem:[%s3839 + $0xb8] sm:$0xe]
      %v4615 = vld [vmem:[%s3839 + $0xbc] sm:$0x1]
      %v4616 = vld [vmem:[%s3839 + $0xc0] sm:$0xe]
      %v4617 = vld [vmem:[%s3839 + $0xc4] sm:$0x1]
      %v4618 = vld [vmem:[%s3839 + $0xc8] sm:$0xe]
      %v4619 = vld [vmem:[%s3839 + $0xcc] sm:$0x1]
      %v4620 = vld [vmem:[%s3839 + $0xd0] sm:$0xe]
      %v4621 = vld [vmem:[%s3839 + $0xd4] sm:$0x1]
      %v4622 = vld [vmem:[%s3839 + $0xd8] sm:$0xe]
      %v4623 = vld [vmem:[%s3839 + $0xdc] sm:$0x1]
      %v4624 = vld [vmem:[%s3839 + $0xf0] sm:$0xe]
      %v4625 = vld [vmem:[%s3839 + $0xf4] sm:$0x1]
      %v4626 = vld [vmem:[%s3839 + $0xf8] sm:$0xe]
      %v4627 = vld [vmem:[%s3839 + $0xfc] sm:$0x1]
      %v4628 = vld [vmem:[%s3839 + $0x100] sm:$0xe]
      %v4629 = vld [vmem:[%s3839 + $0x104] sm:$0x1]
      %v4630 = vld [vmem:[%s3839 + $0x108] sm:$0xe]
      %v4631 = vld [vmem:[%s3839 + $0x10c] sm:$0x1]
      %v4632 = vld [vmem:[%s3839 + $0x110] sm:$0xe]
      %v4633 = vld [vmem:[%s3839 + $0x114] sm:$0x1]
      %v4634 = vld [vmem:[%s3839 + $0x118] sm:$0xe]
      %v4635 = vld [vmem:[%s3839 + $0x11c] sm:$0x1]
      %v4636 = vld [vmem:[%s3839 + $0x120] sm:$0xe]
      %v4637 = vld [vmem:[%s3839 + $0x124] sm:$0x1]
      %v4638 = vld [vmem:[%s3839 + $0x128] sm:$0xe]
      %v4639 = vld [vmem:[%s3839 + $0x12c] sm:$0x1]
      %v4704 = vrot.slane %v4576, 5
      %v4705 = vrot.slane %v4704, 4
      %v4706 = vrot.slane %v4577, 5
      %v4707 = vsel %vm2558, %v4705, %v4706
      %v4708 = vrot.slane %v4578, 5
      %v4709 = vrot.slane %v4708, 4
      %v4710 = vrot.slane %v4579, 5
      %v4711 = vsel %vm2558, %v4709, %v4710
      %v4712 = vrot.slane %v4580, 5
      %v4713 = vrot.slane %v4712, 4
      %v4714 = vrot.slane %v4581, 5
      %v4715 = vsel %vm2558, %v4713, %v4714
      %v4716 = vrot.slane %v4582, 5
      %v4717 = vrot.slane %v4716, 4
      %v4718 = vrot.slane %v4583, 5
      %v4719 = vsel %vm2558, %v4717, %v4718
      %v4720 = vrot.slane %v4584, 5
      %v4721 = vrot.slane %v4720, 4
      %v4722 = vrot.slane %v4585, 5
      %v4723 = vsel %vm2558, %v4721, %v4722
      %v4724 = vrot.slane %v4586, 5
      %v4725 = vrot.slane %v4724, 4
      %v4726 = vrot.slane %v4587, 5
      %v4727 = vsel %vm2558, %v4725, %v4726
      %v4728 = vrot.slane %v4588, 5
      %v4729 = vrot.slane %v4728, 4
      %v4730 = vrot.slane %v4589, 5
      %v4731 = vsel %vm2558, %v4729, %v4730
      %v4732 = vrot.slane %v4590, 5
      %v4733 = vrot.slane %v4732, 4
      %v4734 = vrot.slane %v4591, 5
      %v4735 = vsel %vm2558, %v4733, %v4734
      %v4736 = vrot.slane %v4592, 5
      %v4737 = vrot.slane %v4736, 4
      %v4738 = vrot.slane %v4593, 5
      %v4739 = vsel %vm2558, %v4737, %v4738
      %v4740 = vrot.slane %v4594, 5
      %v4741 = vrot.slane %v4740, 4
      %v4742 = vrot.slane %v4595, 5
      %v4743 = vsel %vm2558, %v4741, %v4742
      %v4744 = vrot.slane %v4596, 5
      %v4745 = vrot.slane %v4744, 4
      %v4746 = vrot.slane %v4597, 5
      %v4747 = vsel %vm2558, %v4745, %v4746
      %v4748 = vrot.slane %v4598, 5
      %v4749 = vrot.slane %v4748, 4
      %v4750 = vrot.slane %v4599, 5
      %v4751 = vsel %vm2558, %v4749, %v4750
      %v4752 = vrot.slane %v4600, 5
      %v4753 = vrot.slane %v4752, 4
      %v4754 = vrot.slane %v4601, 5
      %v4755 = vsel %vm2558, %v4753, %v4754
      %v4756 = vrot.slane %v4602, 5
      %v4757 = vrot.slane %v4756, 4
      %v4758 = vrot.slane %v4603, 5
      %v4759 = vsel %vm2558, %v4757, %v4758
      %v4760 = vrot.slane %v4604, 5
      %v4761 = vrot.slane %v4760, 4
      %v4762 = vrot.slane %v4605, 5
      %v4763 = vsel %vm2558, %v4761, %v4762
      %v4764 = vrot.slane %v4606, 5
      %v4765 = vrot.slane %v4764, 4
      %v4766 = vrot.slane %v4607, 5
      %v4767 = vsel %vm2558, %v4765, %v4766
      %v4768 = vrot.slane %v4608, 5
      %v4769 = vrot.slane %v4768, 4
      %v4770 = vrot.slane %v4609, 5
      %v4771 = vsel %vm2558, %v4769, %v4770
      %v4772 = vrot.slane %v4610, 5
      %v4773 = vrot.slane %v4772, 4
      %v4774 = vrot.slane %v4611, 5
      %v4775 = vsel %vm2558, %v4773, %v4774
      %v4776 = vrot.slane %v4612, 5
      %v4777 = vrot.slane %v4776, 4
      %v4778 = vrot.slane %v4613, 5
      %v4779 = vsel %vm2558, %v4777, %v4778
      %v4780 = vrot.slane %v4614, 5
      %v4781 = vrot.slane %v4780, 4
      %v4782 = vrot.slane %v4615, 5
      %v4783 = vsel %vm2558, %v4781, %v4782
      %v4784 = vrot.slane %v4616, 5
      %v4785 = vrot.slane %v4784, 4
      %v4786 = vrot.slane %v4617, 5
      %v4787 = vsel %vm2558, %v4785, %v4786
      %v4788 = vrot.slane %v4618, 5
      %v4789 = vrot.slane %v4788, 4
      %v4790 = vrot.slane %v4619, 5
      %v4791 = vsel %vm2558, %v4789, %v4790
      %v4792 = vrot.slane %v4620, 5
      %v4793 = vrot.slane %v4792, 4
      %v4794 = vrot.slane %v4621, 5
      %v4795 = vsel %vm2558, %v4793, %v4794
      %v4796 = vrot.slane %v4622, 5
      %v4797 = vrot.slane %v4796, 4
      %v4798 = vrot.slane %v4623, 5
      %v4799 = vsel %vm2558, %v4797, %v4798
      %v4800 = vrot.slane %v4624, 5
      %v4801 = vrot.slane %v4800, 4
      %v4802 = vrot.slane %v4625, 5
      %v4803 = vsel %vm2558, %v4801, %v4802
      %v4804 = vrot.slane %v4626, 5
      %v4805 = vrot.slane %v4804, 4
      %v4806 = vrot.slane %v4627, 5
      %v4807 = vsel %vm2558, %v4805, %v4806
      %v4808 = vrot.slane %v4628, 5
      %v4809 = vrot.slane %v4808, 4
      %v4810 = vrot.slane %v4629, 5
      %v4811 = vsel %vm2558, %v4809, %v4810
      %v4812 = vrot.slane %v4630, 5
      %v4813 = vrot.slane %v4812, 4
      %v4814 = vrot.slane %v4631, 5
      %v4815 = vsel %vm2558, %v4813, %v4814
      %v4816 = vrot.slane %v4632, 5
      %v4817 = vrot.slane %v4816, 4
      %v4818 = vrot.slane %v4633, 5
      %v4819 = vsel %vm2558, %v4817, %v4818
      %v4820 = vrot.slane %v4634, 5
      %v4821 = vrot.slane %v4820, 4
      %v4822 = vrot.slane %v4635, 5
      %v4823 = vsel %vm2558, %v4821, %v4822
      %v4824 = vrot.slane %v4636, 5
      %v4825 = vrot.slane %v4824, 4
      %v4826 = vrot.slane %v4637, 5
      %v4827 = vsel %vm2558, %v4825, %v4826
      %v4828 = vrot.slane %v4638, 5
      %v4829 = vrot.slane %v4828, 4
      %v4830 = vrot.slane %v4639, 5
      %v4831 = vsel %vm2558, %v4829, %v4830
      %v4832 = vunpack.c.l.b16 %v4707
      %v4833 = vunpack.c.l.b16 %v4711
      %v4834 = vunpack.c.l.b16 %v4715
      %v4835 = vunpack.c.l.b16 %v4719
      %v4836 = vunpack.c.l.b16 %v4723
      %v4837 = vunpack.c.l.b16 %v4727
      %v4838 = vunpack.c.l.b16 %v4731
      %v4839 = vunpack.c.l.b16 %v4735
      %v4840 = vunpack.c.l.b16 %v4739
      %v4841 = vunpack.c.l.b16 %v4743
      %v4842 = vunpack.c.l.b16 %v4747
      %v4843 = vunpack.c.l.b16 %v4751
      %v4844 = vunpack.c.l.b16 %v4755
      %v4845 = vunpack.c.l.b16 %v4759
      %v4846 = vunpack.c.l.b16 %v4763
      %v4847 = vunpack.c.l.b16 %v4767
      %v4848 = vunpack.c.l.b16 %v4771
      %v4849 = vunpack.c.l.b16 %v4775
      %v4850 = vunpack.c.l.b16 %v4779
      %v4851 = vunpack.c.l.b16 %v4783
      %v4852 = vunpack.c.l.b16 %v4787
      %v4853 = vunpack.c.l.b16 %v4791
      %v4854 = vunpack.c.l.b16 %v4795
      %v4855 = vunpack.c.l.b16 %v4799
      %v4856 = vunpack.c.l.b16 %v4803
      %v4857 = vunpack.c.l.b16 %v4807
      %v4858 = vunpack.c.l.b16 %v4811
      %v4859 = vunpack.c.l.b16 %v4815
      %v4860 = vunpack.c.l.b16 %v4819
      %v4861 = vunpack.c.l.b16 %v4823
      %v4862 = vunpack.c.l.b16 %v4827
      %v4863 = vunpack.c.l.b16 %v4831
      %v4864 = vpack.c.b16 %v4833, %v4832
      %v4865 = vpack.c.b16 %v4835, %v4834
      %v4866 = vpack.c.b16 %v4837, %v4836
      %v4867 = vpack.c.b16 %v4839, %v4838
      %v4868 = vpack.c.b16 %v4841, %v4840
      %v4869 = vpack.c.b16 %v4843, %v4842
      %v4870 = vpack.c.b16 %v4845, %v4844
      %v4871 = vpack.c.b16 %v4847, %v4846
      %v4872 = vpack.c.b16 %v4849, %v4848
      %v4873 = vpack.c.b16 %v4851, %v4850
      %v4874 = vpack.c.b16 %v4853, %v4852
      %v4875 = vpack.c.b16 %v4855, %v4854
      %v4876 = vpack.c.b16 %v4857, %v4856
      %v4877 = vpack.c.b16 %v4859, %v4858
      %v4878 = vpack.c.b16 %v4861, %v4860
      %v4879 = vpack.c.b16 %v4863, %v4862
      %4896 = vst [vmem:[#allocation3 + $0x40] sm:$0xff] %v4864
      %4897 = vst [vmem:[#allocation3 + $0x88] sm:$0xff] %v4865
      %4898 = vst [vmem:[#allocation3 + $0xd0] sm:$0xff] %v4866
      %4899 = vst [vmem:[#allocation3 + $0x118] sm:$0xff] %v4867
      %4900 = vst [vmem:[#allocation3 + $0x160] sm:$0xff] %v4868
      %4901 = vst [vmem:[#allocation3 + $0x1a8] sm:$0xff] %v4869
      %4902 = vst [vmem:[#allocation3 + $0x1f0] sm:$0xff] %v4870
      %4903 = vst [vmem:[#allocation3 + $0x238] sm:$0xff] %v4871
      %4904 = vst [vmem:[#allocation3 + $0x280] sm:$0xff] %v4872
      %4905 = vst [vmem:[#allocation3 + $0x2c8] sm:$0xff] %v4873
      %4906 = vst [vmem:[#allocation3 + $0x310] sm:$0xff] %v4874
      %4907 = vst [vmem:[#allocation3 + $0x358] sm:$0xff] %v4875
      %4908 = vst [vmem:[#allocation3 + $0x3a0] sm:$0xff] %v4876
      %4909 = vst [vmem:[#allocation3 + $0x3e8] sm:$0xff] %v4877
      %4910 = vst [vmem:[#allocation3 + $0x430] sm:$0xff] %v4878
      %4911 = vst [vmem:[#allocation3 + $0x478] sm:$0xff] %v4879
      %v4912 = vld [vmem:[#allocation3] sm:$0xff]
      %v4913 = vld [vmem:[#allocation3 + $0x8] sm:$0xff]
      %v4914 = vld [vmem:[#allocation3 + $0x10] sm:$0xff]
      %v4915 = vld [vmem:[#allocation3 + $0x18] sm:$0xff]
      %v4916 = vld [vmem:[#allocation3 + $0x20] sm:$0xff]
      %v4917 = vld [vmem:[#allocation3 + $0x28] sm:$0xff]
      %v4918 = vld [vmem:[#allocation3 + $0x30] sm:$0xff]
      %v4919 = vld [vmem:[#allocation3 + $0x38] sm:$0xff]
      %v4920 = vld [vmem:[#allocation3 + $0x40] sm:$0xff]
      %v4921 = vld [vmem:[#allocation3 + $0x48] sm:$0xff]
      %v4922 = vld [vmem:[#allocation3 + $0x50] sm:$0xff]
      %v4923 = vld [vmem:[#allocation3 + $0x58] sm:$0xff]
      %v4924 = vld [vmem:[#allocation3 + $0x60] sm:$0xff]
      %v4925 = vld [vmem:[#allocation3 + $0x68] sm:$0xff]
      %v4926 = vld [vmem:[#allocation3 + $0x70] sm:$0xff]
      %v4927 = vld [vmem:[#allocation3 + $0x78] sm:$0xff]
      %v4928 = vld [vmem:[#allocation3 + $0x80] sm:$0xff]
      %v4929 = vld [vmem:[#allocation3 + $0x88] sm:$0xff]
      %v4930 = vld [vmem:[#allocation3 + $0x90] sm:$0xff]
      %v4931 = vld [vmem:[#allocation3 + $0x98] sm:$0xff]
      %v4932 = vld [vmem:[#allocation3 + $0xa0] sm:$0xff]
      %v4933 = vld [vmem:[#allocation3 + $0xa8] sm:$0xff]
      %v4934 = vld [vmem:[#allocation3 + $0xb0] sm:$0xff]
      %v4935 = vld [vmem:[#allocation3 + $0xb8] sm:$0xff]
      %v4936 = vld [vmem:[#allocation3 + $0xc0] sm:$0xff]
      %v4937 = vld [vmem:[#allocation3 + $0xc8] sm:$0xff]
      %v4938 = vld [vmem:[#allocation3 + $0xd0] sm:$0xff]
      %v4939 = vld [vmem:[#allocation3 + $0xd8] sm:$0xff]
      %v4940 = vld [vmem:[#allocation3 + $0xe0] sm:$0xff]
      %v4941 = vld [vmem:[#allocation3 + $0xe8] sm:$0xff]
      %v4942 = vld [vmem:[#allocation3 + $0xf0] sm:$0xff]
      %v4943 = vld [vmem:[#allocation3 + $0xf8] sm:$0xff]
      %v4944 = vld [vmem:[#allocation3 + $0x100] sm:$0xff]
      %v4945 = vld [vmem:[#allocation3 + $0x108] sm:$0xff]
      %v4946 = vld [vmem:[#allocation3 + $0x110] sm:$0xff]
      %v4947 = vld [vmem:[#allocation3 + $0x118] sm:$0xff]
      %v4948 = vld [vmem:[#allocation3 + $0x120] sm:$0xff]
      %v4949 = vld [vmem:[#allocation3 + $0x128] sm:$0xff]
      %v4950 = vld [vmem:[#allocation3 + $0x130] sm:$0xff]
      %v4951 = vld [vmem:[#allocation3 + $0x138] sm:$0xff]
      %v4952 = vld [vmem:[#allocation3 + $0x140] sm:$0xff]
      %v4953 = vld [vmem:[#allocation3 + $0x148] sm:$0xff]
      %v4954 = vld [vmem:[#allocation3 + $0x150] sm:$0xff]
      %v4955 = vld [vmem:[#allocation3 + $0x158] sm:$0xff]
      %v4956 = vld [vmem:[#allocation3 + $0x160] sm:$0xff]
      %v4957 = vld [vmem:[#allocation3 + $0x168] sm:$0xff]
      %v4958 = vld [vmem:[#allocation3 + $0x170] sm:$0xff]
      %v4959 = vld [vmem:[#allocation3 + $0x178] sm:$0xff]
      %v4960 = vld [vmem:[#allocation3 + $0x180] sm:$0xff]
      %v4961 = vld [vmem:[#allocation3 + $0x188] sm:$0xff]
      %v4962 = vld [vmem:[#allocation3 + $0x190] sm:$0xff]
      %v4963 = vld [vmem:[#allocation3 + $0x198] sm:$0xff]
      %v4964 = vld [vmem:[#allocation3 + $0x1a0] sm:$0xff]
      %v4965 = vld [vmem:[#allocation3 + $0x1a8] sm:$0xff]
      %v4966 = vld [vmem:[#allocation3 + $0x1b0] sm:$0xff]
      %v4967 = vld [vmem:[#allocation3 + $0x1b8] sm:$0xff]
      %v4968 = vld [vmem:[#allocation3 + $0x1c0] sm:$0xff]
      %v4969 = vld [vmem:[#allocation3 + $0x1c8] sm:$0xff]
      %v4970 = vld [vmem:[#allocation3 + $0x1d0] sm:$0xff]
      %v4971 = vld [vmem:[#allocation3 + $0x1d8] sm:$0xff]
      %v4972 = vld [vmem:[#allocation3 + $0x1e0] sm:$0xff]
      %v4973 = vld [vmem:[#allocation3 + $0x1e8] sm:$0xff]
      %v4974 = vld [vmem:[#allocation3 + $0x1f0] sm:$0xff]
      %v4975 = vld [vmem:[#allocation3 + $0x1f8] sm:$0xff]
      %v4976 = vld [vmem:[#allocation3 + $0x200] sm:$0xff]
      %v4977 = vld [vmem:[#allocation3 + $0x208] sm:$0xff]
      %v4978 = vld [vmem:[#allocation3 + $0x210] sm:$0xff]
      %v4979 = vld [vmem:[#allocation3 + $0x218] sm:$0xff]
      %v4980 = vld [vmem:[#allocation3 + $0x220] sm:$0xff]
      %v4981 = vld [vmem:[#allocation3 + $0x228] sm:$0xff]
      %v4982 = vld [vmem:[#allocation3 + $0x230] sm:$0xff]
      %v4983 = vld [vmem:[#allocation3 + $0x238] sm:$0xff]
      %v4984 = vld [vmem:[#allocation3 + $0x240] sm:$0xff]
      %v4985 = vld [vmem:[#allocation3 + $0x248] sm:$0xff]
      %v4986 = vld [vmem:[#allocation3 + $0x250] sm:$0xff]
      %v4987 = vld [vmem:[#allocation3 + $0x258] sm:$0xff]
      %v4988 = vld [vmem:[#allocation3 + $0x260] sm:$0xff]
      %v4989 = vld [vmem:[#allocation3 + $0x268] sm:$0xff]
      %v4990 = vld [vmem:[#allocation3 + $0x270] sm:$0xff]
      %v4991 = vld [vmem:[#allocation3 + $0x278] sm:$0xff]
      %v4992 = vld [vmem:[#allocation3 + $0x280] sm:$0xff]
      %v4993 = vld [vmem:[#allocation3 + $0x288] sm:$0xff]
      %v4994 = vld [vmem:[#allocation3 + $0x290] sm:$0xff]
      %v4995 = vld [vmem:[#allocation3 + $0x298] sm:$0xff]
      %v4996 = vld [vmem:[#allocation3 + $0x2a0] sm:$0xff]
      %v4997 = vld [vmem:[#allocation3 + $0x2a8] sm:$0xff]
      %v4998 = vld [vmem:[#allocation3 + $0x2b0] sm:$0xff]
      %v4999 = vld [vmem:[#allocation3 + $0x2b8] sm:$0xff]
      %v5000 = vld [vmem:[#allocation3 + $0x2c0] sm:$0xff]
      %v5001 = vld [vmem:[#allocation3 + $0x2c8] sm:$0xff]
      %v5002 = vld [vmem:[#allocation3 + $0x2d0] sm:$0xff]
      %v5003 = vld [vmem:[#allocation3 + $0x2d8] sm:$0xff]
      %v5004 = vld [vmem:[#allocation3 + $0x2e0] sm:$0xff]
      %v5005 = vld [vmem:[#allocation3 + $0x2e8] sm:$0xff]
      %v5006 = vld [vmem:[#allocation3 + $0x2f0] sm:$0xff]
      %v5007 = vld [vmem:[#allocation3 + $0x2f8] sm:$0xff]
      %v5008 = vld [vmem:[#allocation3 + $0x300] sm:$0xff]
      %v5009 = vld [vmem:[#allocation3 + $0x308] sm:$0xff]
      %v5010 = vld [vmem:[#allocation3 + $0x310] sm:$0xff]
      %v5011 = vld [vmem:[#allocation3 + $0x318] sm:$0xff]
      %v5012 = vld [vmem:[#allocation3 + $0x320] sm:$0xff]
      %v5013 = vld [vmem:[#allocation3 + $0x328] sm:$0xff]
      %v5014 = vld [vmem:[#allocation3 + $0x330] sm:$0xff]
      %v5015 = vld [vmem:[#allocation3 + $0x338] sm:$0xff]
      %v5016 = vld [vmem:[#allocation3 + $0x340] sm:$0xff]
      %v5017 = vld [vmem:[#allocation3 + $0x348] sm:$0xff]
      %v5018 = vld [vmem:[#allocation3 + $0x350] sm:$0xff]
      %v5019 = vld [vmem:[#allocation3 + $0x358] sm:$0xff]
      %v5020 = vld [vmem:[#allocation3 + $0x360] sm:$0xff]
      %v5021 = vld [vmem:[#allocation3 + $0x368] sm:$0xff]
      %v5022 = vld [vmem:[#allocation3 + $0x370] sm:$0xff]
      %v5023 = vld [vmem:[#allocation3 + $0x378] sm:$0xff]
      %v5024 = vld [vmem:[#allocation3 + $0x380] sm:$0xff]
      %v5025 = vld [vmem:[#allocation3 + $0x388] sm:$0xff]
      %v5026 = vld [vmem:[#allocation3 + $0x390] sm:$0xff]
      %v5027 = vld [vmem:[#allocation3 + $0x398] sm:$0xff]
      %v5028 = vld [vmem:[#allocation3 + $0x3a0] sm:$0xff]
      %v5029 = vld [vmem:[#allocation3 + $0x3a8] sm:$0xff]
      %v5030 = vld [vmem:[#allocation3 + $0x3b0] sm:$0xff]
      %v5031 = vld [vmem:[#allocation3 + $0x3b8] sm:$0xff]
      %v5032 = vld [vmem:[#allocation3 + $0x3c0] sm:$0xff]
      %v5033 = vld [vmem:[#allocation3 + $0x3c8] sm:$0xff]
      %v5034 = vld [vmem:[#allocation3 + $0x3d0] sm:$0xff]
      %v5035 = vld [vmem:[#allocation3 + $0x3d8] sm:$0xff]
      %v5036 = vld [vmem:[#allocation3 + $0x3e0] sm:$0xff]
      %v5037 = vld [vmem:[#allocation3 + $0x3e8] sm:$0xff]
      %v5038 = vld [vmem:[#allocation3 + $0x3f0] sm:$0xff]
      %v5039 = vld [vmem:[#allocation3 + $0x3f8] sm:$0xff]
      %v5040 = vld [vmem:[#allocation3 + $0x400] sm:$0xff]
      %v5041 = vld [vmem:[#allocation3 + $0x408] sm:$0xff]
      %v5042 = vld [vmem:[#allocation3 + $0x410] sm:$0xff]
      %v5043 = vld [vmem:[#allocation3 + $0x418] sm:$0xff]
      %v5044 = vld [vmem:[#allocation3 + $0x420] sm:$0xff]
      %v5045 = vld [vmem:[#allocation3 + $0x428] sm:$0xff]
      %v5046 = vld [vmem:[#allocation3 + $0x430] sm:$0xff]
      %v5047 = vld [vmem:[#allocation3 + $0x438] sm:$0xff]
      %v5048 = vld [vmem:[#allocation3 + $0x440] sm:$0xff]
      %v5049 = vld [vmem:[#allocation3 + $0x448] sm:$0xff]
      %v5050 = vld [vmem:[#allocation3 + $0x450] sm:$0xff]
      %v5051 = vld [vmem:[#allocation3 + $0x458] sm:$0xff]
      %v5052 = vld [vmem:[#allocation3 + $0x460] sm:$0xff]
      %v5053 = vld [vmem:[#allocation3 + $0x468] sm:$0xff]
      %v5054 = vld [vmem:[#allocation3 + $0x470] sm:$0xff]
      %v5055 = vld [vmem:[#allocation3 + $0x478] sm:$0xff]
      %v5056 = vld [vmem:[%s4] sm:$0xf]
      %v5057 = vld [vmem:[%s4 + $0x4] sm:$0xf]
      %v5058 = vld [vmem:[%s4 + $0x8] sm:$0xf]
      %v5059 = vld [vmem:[%s4 + $0xc] sm:$0xf]
      %v5060 = vld [vmem:[%s4 + $0x10] sm:$0xf]
      %v5061 = vld [vmem:[%s4 + $0x14] sm:$0xf]
      %v5062 = vld [vmem:[%s4 + $0x18] sm:$0xf]
      %v5063 = vld [vmem:[%s4 + $0x1c] sm:$0xf]
      %v5064 = vld [vmem:[%s4 + $0x20] sm:$0xf]
      %v5065 = vld [vmem:[%s4 + $0x24] sm:$0xf]
      %v5066 = vld [vmem:[%s4 + $0x28] sm:$0xf]
      %v5067 = vld [vmem:[%s4 + $0x2c] sm:$0xf]
      %v5068 = vld [vmem:[%s4 + $0x30] sm:$0xf]
      %v5069 = vld [vmem:[%s4 + $0x34] sm:$0xf]
      %v5070 = vld [vmem:[%s4 + $0x38] sm:$0xf]
      %v5071 = vld [vmem:[%s4 + $0x3c] sm:$0xf]
      %v5072 = vld [vmem:[%s4 + $0x40] sm:$0xf]
      %v5073 = vld [vmem:[%s4 + $0x44] sm:$0xf]
      %v5074 = vld [vmem:[%s4 + $0x48] sm:$0xf]
      %v5075 = vld [vmem:[%s4 + $0x4c] sm:$0xf]
      %v5076 = vld [vmem:[%s4 + $0x50] sm:$0xf]
      %v5077 = vld [vmem:[%s4 + $0x54] sm:$0xf]
      %v5078 = vld [vmem:[%s4 + $0x58] sm:$0xf]
      %v5079 = vld [vmem:[%s4 + $0x5c] sm:$0xf]
      %v5080 = vld [vmem:[%s4 + $0x60] sm:$0xf]
      %v5081 = vld [vmem:[%s4 + $0x64] sm:$0xf]
      %v5082 = vld [vmem:[%s4 + $0x68] sm:$0xf]
      %v5083 = vld [vmem:[%s4 + $0x6c] sm:$0xf]
      %v5084 = vld [vmem:[%s4 + $0x70] sm:$0xf]
      %v5085 = vld [vmem:[%s4 + $0x74] sm:$0xf]
      %v5086 = vld [vmem:[%s4 + $0x78] sm:$0xf]
      %v5087 = vld [vmem:[%s4 + $0x7c] sm:$0xf]
      %v5088 = vld [vmem:[%s4 + $0x80] sm:$0xf]
      %v5089 = vld [vmem:[%s4 + $0x84] sm:$0xf]
      %v5090 = vld [vmem:[%s4 + $0x88] sm:$0xf]
      %v5091 = vld [vmem:[%s4 + $0x8c] sm:$0xf]
      %v5092 = vld [vmem:[%s4 + $0x90] sm:$0xf]
      %v5093 = vld [vmem:[%s4 + $0x94] sm:$0xf]
      %v5094 = vld [vmem:[%s4 + $0x98] sm:$0xf]
      %v5095 = vld [vmem:[%s4 + $0x9c] sm:$0xf]
      %v5096 = vld [vmem:[%s4 + $0xa0] sm:$0xf]
      %v5097 = vld [vmem:[%s4 + $0xa4] sm:$0xf]
      %v5098 = vld [vmem:[%s4 + $0xa8] sm:$0xf]
      %v5099 = vld [vmem:[%s4 + $0xac] sm:$0xf]
      %v5100 = vld [vmem:[%s4 + $0xb0] sm:$0xf]
      %v5101 = vld [vmem:[%s4 + $0xb4] sm:$0xf]
      %v5102 = vld [vmem:[%s4 + $0xb8] sm:$0xf]
      %v5103 = vld [vmem:[%s4 + $0xbc] sm:$0xf]
      %v5104 = vld [vmem:[%s4 + $0xc0] sm:$0xf]
      %v5105 = vld [vmem:[%s4 + $0xc4] sm:$0xf]
      %v5106 = vld [vmem:[%s4 + $0xc8] sm:$0xf]
      %v5107 = vld [vmem:[%s4 + $0xcc] sm:$0xf]
      %v5108 = vld [vmem:[%s4 + $0xd0] sm:$0xf]
      %v5109 = vld [vmem:[%s4 + $0xd4] sm:$0xf]
      %v5110 = vld [vmem:[%s4 + $0xd8] sm:$0xf]
      %v5111 = vld [vmem:[%s4 + $0xdc] sm:$0xf]
      %v5112 = vld [vmem:[%s4 + $0xe0] sm:$0xf]
      %v5113 = vld [vmem:[%s4 + $0xe4] sm:$0xf]
      %v5114 = vld [vmem:[%s4 + $0xe8] sm:$0xf]
      %v5115 = vld [vmem:[%s4 + $0xec] sm:$0xf]
      %v5116 = vld [vmem:[%s4 + $0xf0] sm:$0xf]
      %v5117 = vld [vmem:[%s4 + $0xf4] sm:$0xf]
      %v5118 = vld [vmem:[%s4 + $0xf8] sm:$0xf]
      %v5119 = vld [vmem:[%s4 + $0xfc] sm:$0xf]
      %v5120 = vld [vmem:[%s4 + $0x100] sm:$0xf]
      %v5121 = vld [vmem:[%s4 + $0x104] sm:$0xf]
      %v5122 = vld [vmem:[%s4 + $0x108] sm:$0xf]
      %v5123 = vld [vmem:[%s4 + $0x10c] sm:$0xf]
      %v5124 = vld [vmem:[%s4 + $0x110] sm:$0xf]
      %v5125 = vld [vmem:[%s4 + $0x114] sm:$0xf]
      %v5126 = vld [vmem:[%s4 + $0x118] sm:$0xf]
      %v5127 = vld [vmem:[%s4 + $0x11c] sm:$0xf]
      %v5128 = vld [vmem:[%s4 + $0x120] sm:$0xf]
      %v5129 = vld [vmem:[%s4 + $0x124] sm:$0xf]
      %v5130 = vld [vmem:[%s4 + $0x128] sm:$0xf]
      %v5131 = vld [vmem:[%s4 + $0x12c] sm:$0xf]
      %v5132 = vld [vmem:[%s4 + $0x130] sm:$0xf]
      %v5133 = vld [vmem:[%s4 + $0x134] sm:$0xf]
      %v5134 = vld [vmem:[%s4 + $0x138] sm:$0xf]
      %v5135 = vld [vmem:[%s4 + $0x13c] sm:$0xf]
      %v5136 = vld [vmem:[%s4 + $0x140] sm:$0xf]
      %v5137 = vld [vmem:[%s4 + $0x144] sm:$0xf]
      %v5138 = vld [vmem:[%s4 + $0x148] sm:$0xf]
      %v5139 = vld [vmem:[%s4 + $0x14c] sm:$0xf]
      %v5140 = vld [vmem:[%s4 + $0x150] sm:$0xf]
      %v5141 = vld [vmem:[%s4 + $0x154] sm:$0xf]
      %v5142 = vld [vmem:[%s4 + $0x158] sm:$0xf]
      %v5143 = vld [vmem:[%s4 + $0x15c] sm:$0xf]
      %v5144 = vld [vmem:[%s4 + $0x160] sm:$0xf]
      %v5145 = vld [vmem:[%s4 + $0x164] sm:$0xf]
      %v5146 = vld [vmem:[%s4 + $0x168] sm:$0xf]
      %v5147 = vld [vmem:[%s4 + $0x16c] sm:$0xf]
      %v5148 = vld [vmem:[%s4 + $0x170] sm:$0xf]
      %v5149 = vld [vmem:[%s4 + $0x174] sm:$0xf]
      %v5150 = vld [vmem:[%s4 + $0x178] sm:$0xf]
      %v5151 = vld [vmem:[%s4 + $0x17c] sm:$0xf]
      %v5152 = vld [vmem:[%s4 + $0x180] sm:$0xf]
      %v5153 = vld [vmem:[%s4 + $0x184] sm:$0xf]
      %v5154 = vld [vmem:[%s4 + $0x188] sm:$0xf]
      %v5155 = vld [vmem:[%s4 + $0x18c] sm:$0xf]
      %v5156 = vld [vmem:[%s4 + $0x190] sm:$0xf]
      %v5157 = vld [vmem:[%s4 + $0x194] sm:$0xf]
      %v5158 = vld [vmem:[%s4 + $0x198] sm:$0xf]
      %v5159 = vld [vmem:[%s4 + $0x19c] sm:$0xf]
      %v5160 = vld [vmem:[%s4 + $0x1a0] sm:$0xf]
      %v5161 = vld [vmem:[%s4 + $0x1a4] sm:$0xf]
      %v5162 = vld [vmem:[%s4 + $0x1a8] sm:$0xf]
      %v5163 = vld [vmem:[%s4 + $0x1ac] sm:$0xf]
      %v5164 = vld [vmem:[%s4 + $0x1b0] sm:$0xf]
      %v5165 = vld [vmem:[%s4 + $0x1b4] sm:$0xf]
      %v5166 = vld [vmem:[%s4 + $0x1b8] sm:$0xf]
      %v5167 = vld [vmem:[%s4 + $0x1bc] sm:$0xf]
      %v5168 = vld [vmem:[%s4 + $0x1c0] sm:$0xf]
      %v5169 = vld [vmem:[%s4 + $0x1c4] sm:$0xf]
      %v5170 = vld [vmem:[%s4 + $0x1c8] sm:$0xf]
      %v5171 = vld [vmem:[%s4 + $0x1cc] sm:$0xf]
      %v5172 = vld [vmem:[%s4 + $0x1d0] sm:$0xf]
      %v5173 = vld [vmem:[%s4 + $0x1d4] sm:$0xf]
      %v5174 = vld [vmem:[%s4 + $0x1d8] sm:$0xf]
      %v5175 = vld [vmem:[%s4 + $0x1dc] sm:$0xf]
      %v5176 = vld [vmem:[%s4 + $0x1e0] sm:$0xf]
      %v5177 = vld [vmem:[%s4 + $0x1e4] sm:$0xf]
      %v5178 = vld [vmem:[%s4 + $0x1e8] sm:$0xf]
      %v5179 = vld [vmem:[%s4 + $0x1ec] sm:$0xf]
      %v5180 = vld [vmem:[%s4 + $0x1f0] sm:$0xf]
      %v5181 = vld [vmem:[%s4 + $0x1f4] sm:$0xf]
      %v5182 = vld [vmem:[%s4 + $0x1f8] sm:$0xf]
      %v5183 = vld [vmem:[%s4 + $0x1fc] sm:$0xf]
      %v5184 = vld [vmem:[%s4 + $0x200] sm:$0xf]
      %v5185 = vld [vmem:[%s4 + $0x204] sm:$0xf]
      %v5186 = vld [vmem:[%s4 + $0x208] sm:$0xf]
      %v5187 = vld [vmem:[%s4 + $0x20c] sm:$0xf]
      %v5188 = vld [vmem:[%s4 + $0x210] sm:$0xf]
      %v5189 = vld [vmem:[%s4 + $0x214] sm:$0xf]
      %v5190 = vld [vmem:[%s4 + $0x218] sm:$0xf]
      %v5191 = vld [vmem:[%s4 + $0x21c] sm:$0xf]
      %v5192 = vld [vmem:[%s4 + $0x220] sm:$0xf]
      %v5193 = vld [vmem:[%s4 + $0x224] sm:$0xf]
      %v5194 = vld [vmem:[%s4 + $0x228] sm:$0xf]
      %v5195 = vld [vmem:[%s4 + $0x22c] sm:$0xf]
      %v5196 = vld [vmem:[%s4 + $0x230] sm:$0xf]
      %v5197 = vld [vmem:[%s4 + $0x234] sm:$0xf]
      %v5198 = vld [vmem:[%s4 + $0x238] sm:$0xf]
      %v5199 = vld [vmem:[%s4 + $0x23c] sm:$0xf]
      %v5344 = vunpack.c.l.b16 %v5056
      %v5345 = vunpack.c.l.b16 %v5057
      %v5346 = vunpack.c.l.b16 %v5058
      %v5347 = vunpack.c.l.b16 %v5059
      %v5348 = vunpack.c.l.b16 %v5060
      %v5349 = vunpack.c.l.b16 %v5061
      %v5350 = vunpack.c.l.b16 %v5062
      %v5351 = vunpack.c.l.b16 %v5063
      %v5352 = vunpack.c.l.b16 %v5064
      %v5353 = vunpack.c.l.b16 %v5065
      %v5354 = vunpack.c.l.b16 %v5066
      %v5355 = vunpack.c.l.b16 %v5067
      %v5356 = vunpack.c.l.b16 %v5068
      %v5357 = vunpack.c.l.b16 %v5069
      %v5358 = vunpack.c.l.b16 %v5070
      %v5359 = vunpack.c.l.b16 %v5071
      %v5360 = vunpack.c.l.b16 %v5072
      %v5361 = vunpack.c.l.b16 %v5073
      %v5362 = vunpack.c.l.b16 %v5074
      %v5363 = vunpack.c.l.b16 %v5075
      %v5364 = vunpack.c.l.b16 %v5076
      %v5365 = vunpack.c.l.b16 %v5077
      %v5366 = vunpack.c.l.b16 %v5078
      %v5367 = vunpack.c.l.b16 %v5079
      %v5368 = vunpack.c.l.b16 %v5080
      %v5369 = vunpack.c.l.b16 %v5081
      %v5370 = vunpack.c.l.b16 %v5082
      %v5371 = vunpack.c.l.b16 %v5083
      %v5372 = vunpack.c.l.b16 %v5084
      %v5373 = vunpack.c.l.b16 %v5085
      %v5374 = vunpack.c.l.b16 %v5086
      %v5375 = vunpack.c.l.b16 %v5087
      %v5376 = vunpack.c.l.b16 %v5088
      %v5377 = vunpack.c.l.b16 %v5089
      %v5378 = vunpack.c.l.b16 %v5090
      %v5379 = vunpack.c.l.b16 %v5091
      %v5380 = vunpack.c.l.b16 %v5092
      %v5381 = vunpack.c.l.b16 %v5093
      %v5382 = vunpack.c.l.b16 %v5094
      %v5383 = vunpack.c.l.b16 %v5095
      %v5384 = vunpack.c.l.b16 %v5096
      %v5385 = vunpack.c.l.b16 %v5097
      %v5386 = vunpack.c.l.b16 %v5098
      %v5387 = vunpack.c.l.b16 %v5099
      %v5388 = vunpack.c.l.b16 %v5100
      %v5389 = vunpack.c.l.b16 %v5101
      %v5390 = vunpack.c.l.b16 %v5102
      %v5391 = vunpack.c.l.b16 %v5103
      %v5392 = vunpack.c.l.b16 %v5104
      %v5393 = vunpack.c.l.b16 %v5105
      %v5394 = vunpack.c.l.b16 %v5106
      %v5395 = vunpack.c.l.b16 %v5107
      %v5396 = vunpack.c.l.b16 %v5108
      %v5397 = vunpack.c.l.b16 %v5109
      %v5398 = vunpack.c.l.b16 %v5110
      %v5399 = vunpack.c.l.b16 %v5111
      %v5400 = vunpack.c.l.b16 %v5112
      %v5401 = vunpack.c.l.b16 %v5113
      %v5402 = vunpack.c.l.b16 %v5114
      %v5403 = vunpack.c.l.b16 %v5115
      %v5404 = vunpack.c.l.b16 %v5116
      %v5405 = vunpack.c.l.b16 %v5117
      %v5406 = vunpack.c.l.b16 %v5118
      %v5407 = vunpack.c.l.b16 %v5119
      %v5408 = vunpack.c.l.b16 %v5120
      %v5409 = vunpack.c.l.b16 %v5121
      %v5410 = vunpack.c.l.b16 %v5122
      %v5411 = vunpack.c.l.b16 %v5123
      %v5412 = vunpack.c.l.b16 %v5124
      %v5413 = vunpack.c.l.b16 %v5125
      %v5414 = vunpack.c.l.b16 %v5126
      %v5415 = vunpack.c.l.b16 %v5127
      %v5416 = vunpack.c.l.b16 %v5128
      %v5417 = vunpack.c.l.b16 %v5129
      %v5418 = vunpack.c.l.b16 %v5130
      %v5419 = vunpack.c.l.b16 %v5131
      %v5420 = vunpack.c.l.b16 %v5132
      %v5421 = vunpack.c.l.b16 %v5133
      %v5422 = vunpack.c.l.b16 %v5134
      %v5423 = vunpack.c.l.b16 %v5135
      %v5424 = vunpack.c.l.b16 %v5136
      %v5425 = vunpack.c.l.b16 %v5137
      %v5426 = vunpack.c.l.b16 %v5138
      %v5427 = vunpack.c.l.b16 %v5139
      %v5428 = vunpack.c.l.b16 %v5140
      %v5429 = vunpack.c.l.b16 %v5141
      %v5430 = vunpack.c.l.b16 %v5142
      %v5431 = vunpack.c.l.b16 %v5143
      %v5432 = vunpack.c.l.b16 %v5144
      %v5433 = vunpack.c.l.b16 %v5145
      %v5434 = vunpack.c.l.b16 %v5146
      %v5435 = vunpack.c.l.b16 %v5147
      %v5436 = vunpack.c.l.b16 %v5148
      %v5437 = vunpack.c.l.b16 %v5149
      %v5438 = vunpack.c.l.b16 %v5150
      %v5439 = vunpack.c.l.b16 %v5151
      %v5440 = vunpack.c.l.b16 %v5152
      %v5441 = vunpack.c.l.b16 %v5153
      %v5442 = vunpack.c.l.b16 %v5154
      %v5443 = vunpack.c.l.b16 %v5155
      %v5444 = vunpack.c.l.b16 %v5156
      %v5445 = vunpack.c.l.b16 %v5157
      %v5446 = vunpack.c.l.b16 %v5158
      %v5447 = vunpack.c.l.b16 %v5159
      %v5448 = vunpack.c.l.b16 %v5160
      %v5449 = vunpack.c.l.b16 %v5161
      %v5450 = vunpack.c.l.b16 %v5162
      %v5451 = vunpack.c.l.b16 %v5163
      %v5452 = vunpack.c.l.b16 %v5164
      %v5453 = vunpack.c.l.b16 %v5165
      %v5454 = vunpack.c.l.b16 %v5166
      %v5455 = vunpack.c.l.b16 %v5167
      %v5456 = vunpack.c.l.b16 %v5168
      %v5457 = vunpack.c.l.b16 %v5169
      %v5458 = vunpack.c.l.b16 %v5170
      %v5459 = vunpack.c.l.b16 %v5171
      %v5460 = vunpack.c.l.b16 %v5172
      %v5461 = vunpack.c.l.b16 %v5173
      %v5462 = vunpack.c.l.b16 %v5174
      %v5463 = vunpack.c.l.b16 %v5175
      %v5464 = vunpack.c.l.b16 %v5176
      %v5465 = vunpack.c.l.b16 %v5177
      %v5466 = vunpack.c.l.b16 %v5178
      %v5467 = vunpack.c.l.b16 %v5179
      %v5468 = vunpack.c.l.b16 %v5180
      %v5469 = vunpack.c.l.b16 %v5181
      %v5470 = vunpack.c.l.b16 %v5182
      %v5471 = vunpack.c.l.b16 %v5183
      %v5472 = vunpack.c.l.b16 %v5184
      %v5473 = vunpack.c.l.b16 %v5185
      %v5474 = vunpack.c.l.b16 %v5186
      %v5475 = vunpack.c.l.b16 %v5187
      %v5476 = vunpack.c.l.b16 %v5188
      %v5477 = vunpack.c.l.b16 %v5189
      %v5478 = vunpack.c.l.b16 %v5190
      %v5479 = vunpack.c.l.b16 %v5191
      %v5480 = vunpack.c.l.b16 %v5192
      %v5481 = vunpack.c.l.b16 %v5193
      %v5482 = vunpack.c.l.b16 %v5194
      %v5483 = vunpack.c.l.b16 %v5195
      %v5484 = vunpack.c.l.b16 %v5196
      %v5485 = vunpack.c.l.b16 %v5197
      %v5486 = vunpack.c.l.b16 %v5198
      %v5487 = vunpack.c.l.b16 %v5199
      %v5488 = vpack.c.b16 %v5345, %v5344
      %v5489 = vpack.c.b16 %v5347, %v5346
      %v5490 = vpack.c.b16 %v5349, %v5348
      %v5491 = vpack.c.b16 %v5351, %v5350
      %v5492 = vpack.c.b16 %v5353, %v5352
      %v5493 = vpack.c.b16 %v5355, %v5354
      %v5494 = vpack.c.b16 %v5357, %v5356
      %v5495 = vpack.c.b16 %v5359, %v5358
      %v5496 = vpack.c.b16 %v5361, %v5360
      %v5497 = vpack.c.b16 %v5363, %v5362
      %v5498 = vpack.c.b16 %v5365, %v5364
      %v5499 = vpack.c.b16 %v5367, %v5366
      %v5500 = vpack.c.b16 %v5369, %v5368
      %v5501 = vpack.c.b16 %v5371, %v5370
      %v5502 = vpack.c.b16 %v5373, %v5372
      %v5503 = vpack.c.b16 %v5375, %v5374
      %v5504 = vpack.c.b16 %v5377, %v5376
      %v5505 = vpack.c.b16 %v5379, %v5378
      %v5506 = vpack.c.b16 %v5381, %v5380
      %v5507 = vpack.c.b16 %v5383, %v5382
      %v5508 = vpack.c.b16 %v5385, %v5384
      %v5509 = vpack.c.b16 %v5387, %v5386
      %v5510 = vpack.c.b16 %v5389, %v5388
      %v5511 = vpack.c.b16 %v5391, %v5390
      %v5512 = vpack.c.b16 %v5393, %v5392
      %v5513 = vpack.c.b16 %v5395, %v5394
      %v5514 = vpack.c.b16 %v5397, %v5396
      %v5515 = vpack.c.b16 %v5399, %v5398
      %v5516 = vpack.c.b16 %v5401, %v5400
      %v5517 = vpack.c.b16 %v5403, %v5402
      %v5518 = vpack.c.b16 %v5405, %v5404
      %v5519 = vpack.c.b16 %v5407, %v5406
      %v5520 = vpack.c.b16 %v5409, %v5408
      %v5521 = vpack.c.b16 %v5411, %v5410
      %v5522 = vpack.c.b16 %v5413, %v5412
      %v5523 = vpack.c.b16 %v5415, %v5414
      %v5524 = vpack.c.b16 %v5417, %v5416
      %v5525 = vpack.c.b16 %v5419, %v5418
      %v5526 = vpack.c.b16 %v5421, %v5420
      %v5527 = vpack.c.b16 %v5423, %v5422
      %v5528 = vpack.c.b16 %v5425, %v5424
      %v5529 = vpack.c.b16 %v5427, %v5426
      %v5530 = vpack.c.b16 %v5429, %v5428
      %v5531 = vpack.c.b16 %v5431, %v5430
      %v5532 = vpack.c.b16 %v5433, %v5432
      %v5533 = vpack.c.b16 %v5435, %v5434
      %v5534 = vpack.c.b16 %v5437, %v5436
      %v5535 = vpack.c.b16 %v5439, %v5438
      %v5536 = vpack.c.b16 %v5441, %v5440
      %v5537 = vpack.c.b16 %v5443, %v5442
      %v5538 = vpack.c.b16 %v5445, %v5444
      %v5539 = vpack.c.b16 %v5447, %v5446
      %v5540 = vpack.c.b16 %v5449, %v5448
      %v5541 = vpack.c.b16 %v5451, %v5450
      %v5542 = vpack.c.b16 %v5453, %v5452
      %v5543 = vpack.c.b16 %v5455, %v5454
      %v5544 = vpack.c.b16 %v5457, %v5456
      %v5545 = vpack.c.b16 %v5459, %v5458
      %v5546 = vpack.c.b16 %v5461, %v5460
      %v5547 = vpack.c.b16 %v5463, %v5462
      %v5548 = vpack.c.b16 %v5465, %v5464
      %v5549 = vpack.c.b16 %v5467, %v5466
      %v5550 = vpack.c.b16 %v5469, %v5468
      %v5551 = vpack.c.b16 %v5471, %v5470
      %v5552 = vpack.c.b16 %v5473, %v5472
      %v5553 = vpack.c.b16 %v5475, %v5474
      %v5554 = vpack.c.b16 %v5477, %v5476
      %v5555 = vpack.c.b16 %v5479, %v5478
      %v5556 = vpack.c.b16 %v5481, %v5480
      %v5557 = vpack.c.b16 %v5483, %v5482
      %v5558 = vpack.c.b16 %v5485, %v5484
      %v5559 = vpack.c.b16 %v5487, %v5486
      %5632 = vmatprep.subr.bf16.mxu0 0
      %5633 = vmatpush1.bf16.msra.mxu0 %v5488
      %5634 = vmatprep.subr.bf16.mxu0 0
      %5635 = vmatpush1.bf16.msra.mxu0 %v5489
      %5636 = vmatprep.subr.bf16.mxu0 0
      %5637 = vmatpush1.bf16.msra.mxu0 %v5490
      %5638 = vmatprep.subr.bf16.mxu0 0
      %5639 = vmatpush1.bf16.msra.mxu0 %v5491
      %5640 = vmatprep.subr.bf16.mxu0 0
      %5641 = vmatpush1.bf16.msra.mxu0 %v5492
      %5642 = vmatprep.subr.bf16.mxu0 0
      %5643 = vmatpush1.bf16.msra.mxu0 %v5493
      %5644 = vmatprep.subr.bf16.mxu0 0
      %5645 = vmatpush1.bf16.msra.mxu0 %v5494
      %5646 = vmatprep.subr.bf16.mxu0 0
      %5647 = vmatpush1.bf16.msra.mxu0 %v5495
      %5648 = vmatprep.subr.bf16.mxu0 0
      %5649 = vmatpush1.bf16.msra.mxu0 %v5496
      %5650 = vmatprep.subr.bf16.mxu0 0
      %5651 = vmatpush1.bf16.msra.mxu0 %v5497
      %5652 = vmatprep.subr.bf16.mxu0 0
      %5653 = vmatpush1.bf16.msra.mxu0 %v5498
      %5654 = vmatprep.subr.bf16.mxu0 0
      %5655 = vmatpush1.bf16.msra.mxu0 %v5499
      %5656 = vmatprep.subr.bf16.mxu0 0
      %5657 = vmatpush1.bf16.msra.mxu0 %v5500
      %5658 = vmatprep.subr.bf16.mxu0 0
      %5659 = vmatpush1.bf16.msra.mxu0 %v5501
      %5660 = vmatprep.subr.bf16.mxu0 0
      %5661 = vmatpush1.bf16.msra.mxu0 %v5502
      %5662 = vmatprep.subr.bf16.mxu0 0
      %5663 = vmatpush1.bf16.msra.mxu0 %v5503
      %5664 = vmatprep.mubr.bf16.mxu0 %v4913
      %5665 = vmatmul.mubr.bf16.gmra.mrb[0].mxu0 %v4912
      %v5666 = vpop.f32.mrb[0].mxu0
      %v5667 = vadd.f32 0.0, %v5666
      %v5668 = vpop.f32.mrb[0].mxu0
      %v5669 = vpop.f32.mrb[0].mxu0
      %v5670 = vadd.f32 0.0, %v5669
      %v5671 = vpop.f32.mrb[0].mxu0
      %5672 = vmatprep.mubr.bf16.mxu0 %v4922
      %5673 = vmatmul.mubr.bf16.gmra.mrb[0].mxu0 %v4921
      %v5674 = vpop.f32.mrb[0].mxu0
      %v5675 = vadd.f32 0.0, %v5674
      %v5676 = vpop.f32.mrb[0].mxu0
      %v5677 = vpop.f32.mrb[0].mxu0
      %v5678 = vadd.f32 0.0, %v5677
      %v5679 = vpop.f32.mrb[0].mxu0
      %5680 = vmatprep.mubr.bf16.mxu0 %v4931
      %5681 = vmatmul.mubr.bf16.gmra.mrb[0].mxu0 %v4930
      %v5682 = vpop.f32.mrb[0].mxu0
      %v5683 = vadd.f32 0.0, %v5682
      %v5684 = vpop.f32.mrb[0].mxu0
      %v5685 = vpop.f32.mrb[0].mxu0
      %v5686 = vadd.f32 0.0, %v5685
      %v5687 = vpop.f32.mrb[0].mxu0
      %5688 = vmatprep.mubr.bf16.mxu0 %v4940
      %5689 = vmatmul.mubr.bf16.gmra.mrb[0].mxu0 %v4939
      %v5690 = vpop.f32.mrb[0].mxu0
      %v5691 = vadd.f32 0.0, %v5690
      %v5692 = vpop.f32.mrb[0].mxu0
      %v5693 = vpop.f32.mrb[0].mxu0
      %v5694 = vadd.f32 0.0, %v5693
      %v5695 = vpop.f32.mrb[0].mxu0
      %5696 = vmatprep.mubr.bf16.mxu0 %v4949
      %5697 = vmatmul.mubr.bf16.gmra.mrb[0].mxu0 %v4948
      %v5698 = vpop.f32.mrb[0].mxu0
      %v5699 = vadd.f32 0.0, %v5698
      %v5700 = vpop.f32.mrb[0].mxu0
      %v5701 = vpop.f32.mrb[0].mxu0
      %v5702 = vadd.f32 0.0, %v5701
      %v5703 = vpop.f32.mrb[0].mxu0
      %5704 = vmatprep.mubr.bf16.mxu0 %v4958
      %5705 = vmatmul.mubr.bf16.gmra.mrb[0].mxu0 %v4957
      %v5706 = vpop.f32.mrb[0].mxu0
      %v5707 = vadd.f32 0.0, %v5706
      %v5708 = vpop.f32.mrb[0].mxu0
      %v5709 = vpop.f32.mrb[0].mxu0
      %v5710 = vadd.f32 0.0, %v5709
      %v5711 = vpop.f32.mrb[0].mxu0
      %5712 = vmatprep.mubr.bf16.mxu0 %v4967
      %5713 = vmatmul.mubr.bf16.gmra.mrb[0].mxu0 %v4966
      %v5714 = vpop.f32.mrb[0].mxu0
      %v5715 = vadd.f32 0.0, %v5714
      %v5716 = vpop.f32.mrb[0].mxu0
      %v5717 = vpop.f32.mrb[0].mxu0
      %v5718 = vadd.f32 0.0, %v5717
      %v5719 = vpop.f32.mrb[0].mxu0
      %5720 = vmatprep.mubr.bf16.mxu0 %v4976
      %5721 = vmatmul.mubr.bf16.gmra.mrb[0].mxu0 %v4975
      %v5722 = vpop.f32.mrb[0].mxu0
      %v5723 = vadd.f32 0.0, %v5722
      %v5724 = vpop.f32.mrb[0].mxu0
      %v5725 = vpop.f32.mrb[0].mxu0
      %v5726 = vadd.f32 0.0, %v5725
      %v5727 = vpop.f32.mrb[0].mxu0
      %5728 = vmatprep.mubr.bf16.mxu0 %v4985
      %5729 = vmatmul.mubr.bf16.gmra.mrb[0].mxu0 %v4984
      %v5730 = vpop.f32.mrb[0].mxu0
      %v5731 = vadd.f32 0.0, %v5730
      %v5732 = vpop.f32.mrb[0].mxu0
      %v5733 = vpop.f32.mrb[0].mxu0
      %v5734 = vadd.f32 0.0, %v5733
      %v5735 = vpop.f32.mrb[0].mxu0
      %5736 = vmatprep.mubr.bf16.mxu0 %v4994
      %5737 = vmatmul.mubr.bf16.gmra.mrb[0].mxu0 %v4993
      %v5738 = vpop.f32.mrb[0].mxu0
      %v5739 = vadd.f32 0.0, %v5738
      %v5740 = vpop.f32.mrb[0].mxu0
      %v5741 = vpop.f32.mrb[0].mxu0
      %v5742 = vadd.f32 0.0, %v5741
      %v5743 = vpop.f32.mrb[0].mxu0
      %5744 = vmatprep.mubr.bf16.mxu0 %v5003
      %5745 = vmatmul.mubr.bf16.gmra.mrb[0].mxu0 %v5002
      %v5746 = vpop.f32.mrb[0].mxu0
      %v5747 = vadd.f32 0.0, %v5746
      %v5748 = vpop.f32.mrb[0].mxu0
      %v5749 = vpop.f32.mrb[0].mxu0
      %v5750 = vadd.f32 0.0, %v5749
      %v5751 = vpop.f32.mrb[0].mxu0
      %5752 = vmatprep.mubr.bf16.mxu0 %v5012
      %5753 = vmatmul.mubr.bf16.gmra.mrb[0].mxu0 %v5011
      %v5754 = vpop.f32.mrb[0].mxu0
      %v5755 = vadd.f32 0.0, %v5754
      %v5756 = vpop.f32.mrb[0].mxu0
      %v5757 = vpop.f32.mrb[0].mxu0
      %v5758 = vadd.f32 0.0, %v5757
      %v5759 = vpop.f32.mrb[0].mxu0
      %5760 = vmatprep.mubr.bf16.mxu0 %v5021
      %5761 = vmatmul.mubr.bf16.gmra.mrb[0].mxu0 %v5020
      %v5762 = vpop.f32.mrb[0].mxu0
      %v5763 = vadd.f32 0.0, %v5762
      %v5764 = vpop.f32.mrb[0].mxu0
      %v5765 = vpop.f32.mrb[0].mxu0
      %v5766 = vadd.f32 0.0, %v5765
      %v5767 = vpop.f32.mrb[0].mxu0
      %5768 = vmatprep.mubr.bf16.mxu0 %v5030
      %5769 = vmatmul.mubr.bf16.gmra.mrb[0].mxu0 %v5029
      %v5770 = vpop.f32.mrb[0].mxu0
      %v5771 = vadd.f32 0.0, %v5770
      %v5772 = vpop.f32.mrb[0].mxu0
      %v5773 = vpop.f32.mrb[0].mxu0
      %v5774 = vadd.f32 0.0, %v5773
      %v5775 = vpop.f32.mrb[0].mxu0
      %5776 = vmatprep.mubr.bf16.mxu0 %v5039
      %5777 = vmatmul.mubr.bf16.gmra.mrb[0].mxu0 %v5038
      %v5778 = vpop.f32.mrb[0].mxu0
      %v5779 = vadd.f32 0.0, %v5778
      %v5780 = vpop.f32.mrb[0].mxu0
      %v5781 = vpop.f32.mrb[0].mxu0
      %v5782 = vadd.f32 0.0, %v5781
      %v5783 = vpop.f32.mrb[0].mxu0
      %5784 = vmatprep.mubr.bf16.mxu0 %v5048
      %5785 = vmatmul.mubr.bf16.gmra.mrb[0].mxu0 %v5047
      %v5786 = vpop.f32.mrb[0].mxu0
      %v5787 = vadd.f32 0.0, %v5786
      %v5788 = vpop.f32.mrb[0].mxu0
      %v5789 = vpop.f32.mrb[0].mxu0
      %v5790 = vadd.f32 0.0, %v5789
      %v5791 = vpop.f32.mrb[0].mxu0
      %5792 = vdwg.mxu0
      %5793 = vmatprep.subr.bf16.mxu0 0
      %5794 = vmatpush1.bf16.msra.mxu0 %v5504
      %5795 = vmatprep.subr.bf16.mxu0 0
      %5796 = vmatpush1.bf16.msra.mxu0 %v5505
      %5797 = vmatprep.subr.bf16.mxu0 0
      %5798 = vmatpush1.bf16.msra.mxu0 %v5506
      %5799 = vmatprep.subr.bf16.mxu0 0
      %5800 = vmatpush1.bf16.msra.mxu0 %v5507
      %5801 = vmatprep.subr.bf16.mxu0 0
      %5802 = vmatpush1.bf16.msra.mxu0 %v5508
      %5803 = vmatprep.subr.bf16.mxu0 0
      %5804 = vmatpush1.bf16.msra.mxu0 %v5509
      %5805 = vmatprep.subr.bf16.mxu0 0
      %5806 = vmatpush1.bf16.msra.mxu0 %v5510
      %5807 = vmatprep.subr.bf16.mxu0 0
      %5808 = vmatpush1.bf16.msra.mxu0 %v5511
      %5809 = vmatprep.subr.bf16.mxu0 0
      %5810 = vmatpush1.bf16.msra.mxu0 %v5512
      %5811 = vmatprep.subr.bf16.mxu0 0
      %5812 = vmatpush1.bf16.msra.mxu0 %v5513
      %5813 = vmatprep.subr.bf16.mxu0 0
      %5814 = vmatpush1.bf16.msra.mxu0 %v5514
      %5815 = vmatprep.subr.bf16.mxu0 0
      %5816 = vmatpush1.bf16.msra.mxu0 %v5515
      %5817 = vmatprep.subr.bf16.mxu0 0
      %5818 = vmatpush1.bf16.msra.mxu0 %v5516
      %5819 = vmatprep.subr.bf16.mxu0 0
      %5820 = vmatpush1.bf16.msra.mxu0 %v5517
      %5821 = vmatprep.subr.bf16.mxu0 0
      %5822 = vmatpush1.bf16.msra.mxu0 %v5518
      %5823 = vmatprep.subr.bf16.mxu0 0
      %5824 = vmatpush1.bf16.msra.mxu0 %v5519
      %5825 = vmatprep.mubr.bf16.mxu0 %v4915
      %5826 = vmatmul.mubr.bf16.gmra.mrb[0].mxu0 %v4914
      %v5827 = vpop.f32.mrb[0].mxu0
      %v5828 = vadd.f32 %v5667, %v5827
      %v5829 = vpop.f32.mrb[0].mxu0
      %v5830 = vpop.f32.mrb[0].mxu0
      %v5831 = vadd.f32 %v5670, %v5830
      %v5832 = vpop.f32.mrb[0].mxu0
      %5833 = vmatprep.mubr.bf16.mxu0 %v4924
      %5834 = vmatmul.mubr.bf16.gmra.mrb[0].mxu0 %v4923
      %v5835 = vpop.f32.mrb[0].mxu0
      %v5836 = vadd.f32 %v5675, %v5835
      %v5837 = vpop.f32.mrb[0].mxu0
      %v5838 = vpop.f32.mrb[0].mxu0
      %v5839 = vadd.f32 %v5678, %v5838
      %v5840 = vpop.f32.mrb[0].mxu0
      %5841 = vmatprep.mubr.bf16.mxu0 %v4933
      %5842 = vmatmul.mubr.bf16.gmra.mrb[0].mxu0 %v4932
      %v5843 = vpop.f32.mrb[0].mxu0
      %v5844 = vadd.f32 %v5683, %v5843
      %v5845 = vpop.f32.mrb[0].mxu0
      %v5846 = vpop.f32.mrb[0].mxu0
      %v5847 = vadd.f32 %v5686, %v5846
      %v5848 = vpop.f32.mrb[0].mxu0
      %5849 = vmatprep.mubr.bf16.mxu0 %v4942
      %5850 = vmatmul.mubr.bf16.gmra.mrb[0].mxu0 %v4941
      %v5851 = vpop.f32.mrb[0].mxu0
      %v5852 = vadd.f32 %v5691, %v5851
      %v5853 = vpop.f32.mrb[0].mxu0
      %v5854 = vpop.f32.mrb[0].mxu0
      %v5855 = vadd.f32 %v5694, %v5854
      %v5856 = vpop.f32.mrb[0].mxu0
      %5857 = vmatprep.mubr.bf16.mxu0 %v4951
      %5858 = vmatmul.mubr.bf16.gmra.mrb[0].mxu0 %v4950
      %v5859 = vpop.f32.mrb[0].mxu0
      %v5860 = vadd.f32 %v5699, %v5859
      %v5861 = vpop.f32.mrb[0].mxu0
      %v5862 = vpop.f32.mrb[0].mxu0
      %v5863 = vadd.f32 %v5702, %v5862
      %v5864 = vpop.f32.mrb[0].mxu0
      %5865 = vmatprep.mubr.bf16.mxu0 %v4960
      %5866 = vmatmul.mubr.bf16.gmra.mrb[0].mxu0 %v4959
      %v5867 = vpop.f32.mrb[0].mxu0
      %v5868 = vadd.f32 %v5707, %v5867
      %v5869 = vpop.f32.mrb[0].mxu0
      %v5870 = vpop.f32.mrb[0].mxu0
      %v5871 = vadd.f32 %v5710, %v5870
      %v5872 = vpop.f32.mrb[0].mxu0
      %5873 = vmatprep.mubr.bf16.mxu0 %v4969
      %5874 = vmatmul.mubr.bf16.gmra.mrb[0].mxu0 %v4968
      %v5875 = vpop.f32.mrb[0].mxu0
      %v5876 = vadd.f32 %v5715, %v5875
      %v5877 = vpop.f32.mrb[0].mxu0
      %v5878 = vpop.f32.mrb[0].mxu0
      %v5879 = vadd.f32 %v5718, %v5878
      %v5880 = vpop.f32.mrb[0].mxu0
      %5881 = vmatprep.mubr.bf16.mxu0 %v4978
      %5882 = vmatmul.mubr.bf16.gmra.mrb[0].mxu0 %v4977
      %v5883 = vpop.f32.mrb[0].mxu0
      %v5884 = vadd.f32 %v5723, %v5883
      %v5885 = vpop.f32.mrb[0].mxu0
      %v5886 = vpop.f32.mrb[0].mxu0
      %v5887 = vadd.f32 %v5726, %v5886
      %v5888 = vpop.f32.mrb[0].mxu0
      %5889 = vmatprep.mubr.bf16.mxu0 %v4987
      %5890 = vmatmul.mubr.bf16.gmra.mrb[0].mxu0 %v4986
      %v5891 = vpop.f32.mrb[0].mxu0
      %v5892 = vadd.f32 %v5731, %v5891
      %v5893 = vpop.f32.mrb[0].mxu0
      %v5894 = vpop.f32.mrb[0].mxu0
      %v5895 = vadd.f32 %v5734, %v5894
      %v5896 = vpop.f32.mrb[0].mxu0
      %5897 = vmatprep.mubr.bf16.mxu0 %v4996
      %5898 = vmatmul.mubr.bf16.gmra.mrb[0].mxu0 %v4995
      %v5899 = vpop.f32.mrb[0].mxu0
      %v5900 = vadd.f32 %v5739, %v5899
      %v5901 = vpop.f32.mrb[0].mxu0
      %v5902 = vpop.f32.mrb[0].mxu0
      %v5903 = vadd.f32 %v5742, %v5902
      %v5904 = vpop.f32.mrb[0].mxu0
      %5905 = vmatprep.mubr.bf16.mxu0 %v5005
      %5906 = vmatmul.mubr.bf16.gmra.mrb[0].mxu0 %v5004
      %v5907 = vpop.f32.mrb[0].mxu0
      %v5908 = vadd.f32 %v5747, %v5907
      %v5909 = vpop.f32.mrb[0].mxu0
      %v5910 = vpop.f32.mrb[0].mxu0
      %v5911 = vadd.f32 %v5750, %v5910
      %v5912 = vpop.f32.mrb[0].mxu0
      %5913 = vmatprep.mubr.bf16.mxu0 %v5014
      %5914 = vmatmul.mubr.bf16.gmra.mrb[0].mxu0 %v5013
      %v5915 = vpop.f32.mrb[0].mxu0
      %v5916 = vadd.f32 %v5755, %v5915
      %v5917 = vpop.f32.mrb[0].mxu0
      %v5918 = vpop.f32.mrb[0].mxu0
      %v5919 = vadd.f32 %v5758, %v5918
      %v5920 = vpop.f32.mrb[0].mxu0
      %5921 = vmatprep.mubr.bf16.mxu0 %v5023
      %5922 = vmatmul.mubr.bf16.gmra.mrb[0].mxu0 %v5022
      %v5923 = vpop.f32.mrb[0].mxu0
      %v5924 = vadd.f32 %v5763, %v5923
      %v5925 = vpop.f32.mrb[0].mxu0
      %v5926 = vpop.f32.mrb[0].mxu0
      %v5927 = vadd.f32 %v5766, %v5926
      %v5928 = vpop.f32.mrb[0].mxu0
      %5929 = vmatprep.mubr.bf16.mxu0 %v5032
      %5930 = vmatmul.mubr.bf16.gmra.mrb[0].mxu0 %v5031
      %v5931 = vpop.f32.mrb[0].mxu0
      %v5932 = vadd.f32 %v5771, %v5931
      %v5933 = vpop.f32.mrb[0].mxu0
      %v5934 = vpop.f32.mrb[0].mxu0
      %v5935 = vadd.f32 %v5774, %v5934
      %v5936 = vpop.f32.mrb[0].mxu0
      %5937 = vmatprep.mubr.bf16.mxu0 %v5041
      %5938 = vmatmul.mubr.bf16.gmra.mrb[0].mxu0 %v5040
      %v5939 = vpop.f32.mrb[0].mxu0
      %v5940 = vadd.f32 %v5779, %v5939
      %v5941 = vpop.f32.mrb[0].mxu0
      %v5942 = vpop.f32.mrb[0].mxu0
      %v5943 = vadd.f32 %v5782, %v5942
      %v5944 = vpop.f32.mrb[0].mxu0
      %5945 = vmatprep.mubr.bf16.mxu0 %v5050
      %5946 = vmatmul.mubr.bf16.gmra.mrb[0].mxu0 %v5049
      %v5947 = vpop.f32.mrb[0].mxu0
      %v5948 = vadd.f32 %v5787, %v5947
      %v5949 = vpop.f32.mrb[0].mxu0
      %v5950 = vpop.f32.mrb[0].mxu0
      %v5951 = vadd.f32 %v5790, %v5950
      %v5952 = vpop.f32.mrb[0].mxu0
      %5953 = vdwg.mxu0
      %5954 = vmatprep.subr.bf16.mxu0 0
      %5955 = vmatpush1.bf16.msra.mxu0 %v5520
      %5956 = vmatprep.subr.bf16.mxu0 0
      %5957 = vmatpush1.bf16.msra.mxu0 %v5521
      %5958 = vmatprep.subr.bf16.mxu0 0
      %5959 = vmatpush1.bf16.msra.mxu0 %v5522
      %5960 = vmatprep.subr.bf16.mxu0 0
      %5961 = vmatpush1.bf16.msra.mxu0 %v5523
      %5962 = vmatprep.subr.bf16.mxu0 0
      %5963 = vmatpush1.bf16.msra.mxu0 %v5524
      %5964 = vmatprep.subr.bf16.mxu0 0
      %5965 = vmatpush1.bf16.msra.mxu0 %v5525
      %5966 = vmatprep.subr.bf16.mxu0 0
      %5967 = vmatpush1.bf16.msra.mxu0 %v5526
      %5968 = vmatprep.subr.bf16.mxu0 0
      %5969 = vmatpush1.bf16.msra.mxu0 %v5527
      %5970 = vmatprep.subr.bf16.mxu0 0
      %5971 = vmatpush1.bf16.msra.mxu0 %v5528
      %5972 = vmatprep.subr.bf16.mxu0 0
      %5973 = vmatpush1.bf16.msra.mxu0 %v5529
      %5974 = vmatprep.subr.bf16.mxu0 0
      %5975 = vmatpush1.bf16.msra.mxu0 %v5530
      %5976 = vmatprep.subr.bf16.mxu0 0
      %5977 = vmatpush1.bf16.msra.mxu0 %v5531
      %5978 = vmatprep.subr.bf16.mxu0 0
      %5979 = vmatpush1.bf16.msra.mxu0 %v5532
      %5980 = vmatprep.subr.bf16.mxu0 0
      %5981 = vmatpush1.bf16.msra.mxu0 %v5533
      %5982 = vmatprep.subr.bf16.mxu0 0
      %5983 = vmatpush1.bf16.msra.mxu0 %v5534
      %5984 = vmatprep.subr.bf16.mxu0 0
      %5985 = vmatpush1.bf16.msra.mxu0 %v5535
      %5986 = vmatprep.mubr.bf16.mxu0 %v4917
      %5987 = vmatmul.mubr.bf16.gmra.mrb[0].mxu0 %v4916
      %v5988 = vpop.f32.mrb[0].mxu0
      %v5989 = vadd.f32 %v5828, %v5988
      %v5990 = vpop.f32.mrb[0].mxu0
      %v5991 = vpop.f32.mrb[0].mxu0
      %v5992 = vadd.f32 %v5831, %v5991
      %v5993 = vpop.f32.mrb[0].mxu0
      %5994 = vmatprep.mubr.bf16.mxu0 %v4926
      %5995 = vmatmul.mubr.bf16.gmra.mrb[0].mxu0 %v4925
      %v5996 = vpop.f32.mrb[0].mxu0
      %v5997 = vadd.f32 %v5836, %v5996
      %v5998 = vpop.f32.mrb[0].mxu0
      %v5999 = vpop.f32.mrb[0].mxu0
      %v6000 = vadd.f32 %v5839, %v5999
      %v6001 = vpop.f32.mrb[0].mxu0
      %6002 = vmatprep.mubr.bf16.mxu0 %v4935
      %6003 = vmatmul.mubr.bf16.gmra.mrb[0].mxu0 %v4934
      %v6004 = vpop.f32.mrb[0].mxu0
      %v6005 = vadd.f32 %v5844, %v6004
      %v6006 = vpop.f32.mrb[0].mxu0
      %v6007 = vpop.f32.mrb[0].mxu0
      %v6008 = vadd.f32 %v5847, %v6007
      %v6009 = vpop.f32.mrb[0].mxu0
      %6010 = vmatprep.mubr.bf16.mxu0 %v4944
      %6011 = vmatmul.mubr.bf16.gmra.mrb[0].mxu0 %v4943
      %v6012 = vpop.f32.mrb[0].mxu0
      %v6013 = vadd.f32 %v5852, %v6012
      %v6014 = vpop.f32.mrb[0].mxu0
      %v6015 = vpop.f32.mrb[0].mxu0
      %v6016 = vadd.f32 %v5855, %v6015
      %v6017 = vpop.f32.mrb[0].mxu0
      %6018 = vmatprep.mubr.bf16.mxu0 %v4953
      %6019 = vmatmul.mubr.bf16.gmra.mrb[0].mxu0 %v4952
      %v6020 = vpop.f32.mrb[0].mxu0
      %v6021 = vadd.f32 %v5860, %v6020
      %v6022 = vpop.f32.mrb[0].mxu0
      %v6023 = vpop.f32.mrb[0].mxu0
      %v6024 = vadd.f32 %v5863, %v6023
      %v6025 = vpop.f32.mrb[0].mxu0
      %6026 = vmatprep.mubr.bf16.mxu0 %v4962
      %6027 = vmatmul.mubr.bf16.gmra.mrb[0].mxu0 %v4961
      %v6028 = vpop.f32.mrb[0].mxu0
      %v6029 = vadd.f32 %v5868, %v6028
      %v6030 = vpop.f32.mrb[0].mxu0
      %v6031 = vpop.f32.mrb[0].mxu0
      %v6032 = vadd.f32 %v5871, %v6031
      %v6033 = vpop.f32.mrb[0].mxu0
      %6034 = vmatprep.mubr.bf16.mxu0 %v4971
      %6035 = vmatmul.mubr.bf16.gmra.mrb[0].mxu0 %v4970
      %v6036 = vpop.f32.mrb[0].mxu0
      %v6037 = vadd.f32 %v5876, %v6036
      %v6038 = vpop.f32.mrb[0].mxu0
      %v6039 = vpop.f32.mrb[0].mxu0
      %v6040 = vadd.f32 %v5879, %v6039
      %v6041 = vpop.f32.mrb[0].mxu0
      %6042 = vmatprep.mubr.bf16.mxu0 %v4980
      %6043 = vmatmul.mubr.bf16.gmra.mrb[0].mxu0 %v4979
      %v6044 = vpop.f32.mrb[0].mxu0
      %v6045 = vadd.f32 %v5884, %v6044
      %v6046 = vpop.f32.mrb[0].mxu0
      %v6047 = vpop.f32.mrb[0].mxu0
      %v6048 = vadd.f32 %v5887, %v6047
      %v6049 = vpop.f32.mrb[0].mxu0
      %6050 = vmatprep.mubr.bf16.mxu0 %v4989
      %6051 = vmatmul.mubr.bf16.gmra.mrb[0].mxu0 %v4988
      %v6052 = vpop.f32.mrb[0].mxu0
      %v6053 = vadd.f32 %v5892, %v6052
      %v6054 = vpop.f32.mrb[0].mxu0
      %v6055 = vpop.f32.mrb[0].mxu0
      %v6056 = vadd.f32 %v5895, %v6055
      %v6057 = vpop.f32.mrb[0].mxu0
      %6058 = vmatprep.mubr.bf16.mxu0 %v4998
      %6059 = vmatmul.mubr.bf16.gmra.mrb[0].mxu0 %v4997
      %v6060 = vpop.f32.mrb[0].mxu0
      %v6061 = vadd.f32 %v5900, %v6060
      %v6062 = vpop.f32.mrb[0].mxu0
      %v6063 = vpop.f32.mrb[0].mxu0
      %v6064 = vadd.f32 %v5903, %v6063
      %v6065 = vpop.f32.mrb[0].mxu0
      %6066 = vmatprep.mubr.bf16.mxu0 %v5007
      %6067 = vmatmul.mubr.bf16.gmra.mrb[0].mxu0 %v5006
      %v6068 = vpop.f32.mrb[0].mxu0
      %v6069 = vadd.f32 %v5908, %v6068
      %v6070 = vpop.f32.mrb[0].mxu0
      %v6071 = vpop.f32.mrb[0].mxu0
      %v6072 = vadd.f32 %v5911, %v6071
      %v6073 = vpop.f32.mrb[0].mxu0
      %6074 = vmatprep.mubr.bf16.mxu0 %v5016
      %6075 = vmatmul.mubr.bf16.gmra.mrb[0].mxu0 %v5015
      %v6076 = vpop.f32.mrb[0].mxu0
      %v6077 = vadd.f32 %v5916, %v6076
      %v6078 = vpop.f32.mrb[0].mxu0
      %v6079 = vpop.f32.mrb[0].mxu0
      %v6080 = vadd.f32 %v5919, %v6079
      %v6081 = vpop.f32.mrb[0].mxu0
      %6082 = vmatprep.mubr.bf16.mxu0 %v5025
      %6083 = vmatmul.mubr.bf16.gmra.mrb[0].mxu0 %v5024
      %v6084 = vpop.f32.mrb[0].mxu0
      %v6085 = vadd.f32 %v5924, %v6084
      %v6086 = vpop.f32.mrb[0].mxu0
      %v6087 = vpop.f32.mrb[0].mxu0
      %v6088 = vadd.f32 %v5927, %v6087
      %v6089 = vpop.f32.mrb[0].mxu0
      %6090 = vmatprep.mubr.bf16.mxu0 %v5034
      %6091 = vmatmul.mubr.bf16.gmra.mrb[0].mxu0 %v5033
      %v6092 = vpop.f32.mrb[0].mxu0
      %v6093 = vadd.f32 %v5932, %v6092
      %v6094 = vpop.f32.mrb[0].mxu0
      %v6095 = vpop.f32.mrb[0].mxu0
      %v6096 = vadd.f32 %v5935, %v6095
      %v6097 = vpop.f32.mrb[0].mxu0
      %6098 = vmatprep.mubr.bf16.mxu0 %v5043
      %6099 = vmatmul.mubr.bf16.gmra.mrb[0].mxu0 %v5042
      %v6100 = vpop.f32.mrb[0].mxu0
      %v6101 = vadd.f32 %v5940, %v6100
      %v6102 = vpop.f32.mrb[0].mxu0
      %v6103 = vpop.f32.mrb[0].mxu0
      %v6104 = vadd.f32 %v5943, %v6103
      %v6105 = vpop.f32.mrb[0].mxu0
      %6106 = vmatprep.mubr.bf16.mxu0 %v5052
      %6107 = vmatmul.mubr.bf16.gmra.mrb[0].mxu0 %v5051
      %v6108 = vpop.f32.mrb[0].mxu0
      %v6109 = vadd.f32 %v5948, %v6108
      %v6110 = vpop.f32.mrb[0].mxu0
      %v6111 = vpop.f32.mrb[0].mxu0
      %v6112 = vadd.f32 %v5951, %v6111
      %v6113 = vpop.f32.mrb[0].mxu0
      %6114 = vdwg.mxu0
      %6115 = vmatprep.subr.bf16.mxu0 0
      %6116 = vmatpush1.bf16.msra.mxu0 %v5536
      %6117 = vmatprep.subr.bf16.mxu0 0
      %6118 = vmatpush1.bf16.msra.mxu0 %v5537
      %6119 = vmatprep.subr.bf16.mxu0 0
      %6120 = vmatpush1.bf16.msra.mxu0 %v5538
      %6121 = vmatprep.subr.bf16.mxu0 0
      %6122 = vmatpush1.bf16.msra.mxu0 %v5539
      %6123 = vmatprep.subr.bf16.mxu0 0
      %6124 = vmatpush1.bf16.msra.mxu0 %v5540
      %6125 = vmatprep.subr.bf16.mxu0 0
      %6126 = vmatpush1.bf16.msra.mxu0 %v5541
      %6127 = vmatprep.subr.bf16.mxu0 0
      %6128 = vmatpush1.bf16.msra.mxu0 %v5542
      %6129 = vmatprep.subr.bf16.mxu0 0
      %6130 = vmatpush1.bf16.msra.mxu0 %v5543
      %6131 = vmatprep.subr.bf16.mxu0 0
      %6132 = vmatpush1.bf16.msra.mxu0 %v5544
      %6133 = vmatprep.subr.bf16.mxu0 0
      %6134 = vmatpush1.bf16.msra.mxu0 %v5545
      %6135 = vmatprep.subr.bf16.mxu0 0
      %6136 = vmatpush1.bf16.msra.mxu0 %v5546
      %6137 = vmatprep.subr.bf16.mxu0 0
      %6138 = vmatpush1.bf16.msra.mxu0 %v5547
      %6139 = vmatprep.subr.bf16.mxu0 0
      %6140 = vmatpush1.bf16.msra.mxu0 %v5548
      %6141 = vmatprep.subr.bf16.mxu0 0
      %6142 = vmatpush1.bf16.msra.mxu0 %v5549
      %6143 = vmatprep.subr.bf16.mxu0 0
      %6144 = vmatpush1.bf16.msra.mxu0 %v5550
      %6145 = vmatprep.subr.bf16.mxu0 0
      %6146 = vmatpush1.bf16.msra.mxu0 %v5551
      %6147 = vmatprep.mubr.bf16.mxu0 %v4919
      %6148 = vmatmul.mubr.bf16.gmra.mrb[0].mxu0 %v4918
      %v6149 = vpop.f32.mrb[0].mxu0
      %v6150 = vadd.f32 %v5989, %v6149
      %v6151 = vpop.f32.mrb[0].mxu0
      %v6152 = vpop.f32.mrb[0].mxu0
      %v6153 = vadd.f32 %v5992, %v6152
      %v6154 = vpop.f32.mrb[0].mxu0
      %6155 = vmatprep.mubr.bf16.mxu0 %v4928
      %6156 = vmatmul.mubr.bf16.gmra.mrb[0].mxu0 %v4927
      %v6157 = vpop.f32.mrb[0].mxu0
      %v6158 = vadd.f32 %v5997, %v6157
      %v6159 = vpop.f32.mrb[0].mxu0
      %v6160 = vpop.f32.mrb[0].mxu0
      %v6161 = vadd.f32 %v6000, %v6160
      %v6162 = vpop.f32.mrb[0].mxu0
      %6163 = vmatprep.mubr.bf16.mxu0 %v4937
      %6164 = vmatmul.mubr.bf16.gmra.mrb[0].mxu0 %v4936
      %v6165 = vpop.f32.mrb[0].mxu0
      %v6166 = vadd.f32 %v6005, %v6165
      %v6167 = vpop.f32.mrb[0].mxu0
      %v6168 = vpop.f32.mrb[0].mxu0
      %v6169 = vadd.f32 %v6008, %v6168
      %v6170 = vpop.f32.mrb[0].mxu0
      %6171 = vmatprep.mubr.bf16.mxu0 %v4946
      %6172 = vmatmul.mubr.bf16.gmra.mrb[0].mxu0 %v4945
      %v6173 = vpop.f32.mrb[0].mxu0
      %v6174 = vadd.f32 %v6013, %v6173
      %v6175 = vpop.f32.mrb[0].mxu0
      %v6176 = vpop.f32.mrb[0].mxu0
      %v6177 = vadd.f32 %v6016, %v6176
      %v6178 = vpop.f32.mrb[0].mxu0
      %6179 = vmatprep.mubr.bf16.mxu0 %v4955
      %6180 = vmatmul.mubr.bf16.gmra.mrb[0].mxu0 %v4954
      %v6181 = vpop.f32.mrb[0].mxu0
      %v6182 = vadd.f32 %v6021, %v6181
      %v6183 = vpop.f32.mrb[0].mxu0
      %v6184 = vpop.f32.mrb[0].mxu0
      %v6185 = vadd.f32 %v6024, %v6184
      %v6186 = vpop.f32.mrb[0].mxu0
      %6187 = vmatprep.mubr.bf16.mxu0 %v4964
      %6188 = vmatmul.mubr.bf16.gmra.mrb[0].mxu0 %v4963
      %v6189 = vpop.f32.mrb[0].mxu0
      %v6190 = vadd.f32 %v6029, %v6189
      %v6191 = vpop.f32.mrb[0].mxu0
      %v6192 = vpop.f32.mrb[0].mxu0
      %v6193 = vadd.f32 %v6032, %v6192
      %v6194 = vpop.f32.mrb[0].mxu0
      %6195 = vmatprep.mubr.bf16.mxu0 %v4973
      %6196 = vmatmul.mubr.bf16.gmra.mrb[0].mxu0 %v4972
      %v6197 = vpop.f32.mrb[0].mxu0
      %v6198 = vadd.f32 %v6037, %v6197
      %v6199 = vpop.f32.mrb[0].mxu0
      %v6200 = vpop.f32.mrb[0].mxu0
      %v6201 = vadd.f32 %v6040, %v6200
      %v6202 = vpop.f32.mrb[0].mxu0
      %6203 = vmatprep.mubr.bf16.mxu0 %v4982
      %6204 = vmatmul.mubr.bf16.gmra.mrb[0].mxu0 %v4981
      %v6205 = vpop.f32.mrb[0].mxu0
      %v6206 = vadd.f32 %v6045, %v6205
      %v6207 = vpop.f32.mrb[0].mxu0
      %v6208 = vpop.f32.mrb[0].mxu0
      %v6209 = vadd.f32 %v6048, %v6208
      %v6210 = vpop.f32.mrb[0].mxu0
      %6211 = vmatprep.mubr.bf16.mxu0 %v4991
      %6212 = vmatmul.mubr.bf16.gmra.mrb[0].mxu0 %v4990
      %v6213 = vpop.f32.mrb[0].mxu0
      %v6214 = vadd.f32 %v6053, %v6213
      %v6215 = vpop.f32.mrb[0].mxu0
      %v6216 = vpop.f32.mrb[0].mxu0
      %v6217 = vadd.f32 %v6056, %v6216
      %v6218 = vpop.f32.mrb[0].mxu0
      %6219 = vmatprep.mubr.bf16.mxu0 %v5000
      %6220 = vmatmul.mubr.bf16.gmra.mrb[0].mxu0 %v4999
      %v6221 = vpop.f32.mrb[0].mxu0
      %v6222 = vadd.f32 %v6061, %v6221
      %v6223 = vpop.f32.mrb[0].mxu0
      %v6224 = vpop.f32.mrb[0].mxu0
      %v6225 = vadd.f32 %v6064, %v6224
      %v6226 = vpop.f32.mrb[0].mxu0
      %6227 = vmatprep.mubr.bf16.mxu0 %v5009
      %6228 = vmatmul.mubr.bf16.gmra.mrb[0].mxu0 %v5008
      %v6229 = vpop.f32.mrb[0].mxu0
      %v6230 = vadd.f32 %v6069, %v6229
      %v6231 = vpop.f32.mrb[0].mxu0
      %v6232 = vpop.f32.mrb[0].mxu0
      %v6233 = vadd.f32 %v6072, %v6232
      %v6234 = vpop.f32.mrb[0].mxu0
      %6235 = vmatprep.mubr.bf16.mxu0 %v5018
      %6236 = vmatmul.mubr.bf16.gmra.mrb[0].mxu0 %v5017
      %v6237 = vpop.f32.mrb[0].mxu0
      %v6238 = vadd.f32 %v6077, %v6237
      %v6239 = vpop.f32.mrb[0].mxu0
      %v6240 = vpop.f32.mrb[0].mxu0
      %v6241 = vadd.f32 %v6080, %v6240
      %v6242 = vpop.f32.mrb[0].mxu0
      %6243 = vmatprep.mubr.bf16.mxu0 %v5027
      %6244 = vmatmul.mubr.bf16.gmra.mrb[0].mxu0 %v5026
      %v6245 = vpop.f32.mrb[0].mxu0
      %v6246 = vadd.f32 %v6085, %v6245
      %v6247 = vpop.f32.mrb[0].mxu0
      %v6248 = vpop.f32.mrb[0].mxu0
      %v6249 = vadd.f32 %v6088, %v6248
      %v6250 = vpop.f32.mrb[0].mxu0
      %6251 = vmatprep.mubr.bf16.mxu0 %v5036
      %6252 = vmatmul.mubr.bf16.gmra.mrb[0].mxu0 %v5035
      %v6253 = vpop.f32.mrb[0].mxu0
      %v6254 = vadd.f32 %v6093, %v6253
      %v6255 = vpop.f32.mrb[0].mxu0
      %v6256 = vpop.f32.mrb[0].mxu0
      %v6257 = vadd.f32 %v6096, %v6256
      %v6258 = vpop.f32.mrb[0].mxu0
      %6259 = vmatprep.mubr.bf16.mxu0 %v5045
      %6260 = vmatmul.mubr.bf16.gmra.mrb[0].mxu0 %v5044
      %v6261 = vpop.f32.mrb[0].mxu0
      %v6262 = vadd.f32 %v6101, %v6261
      %v6263 = vpop.f32.mrb[0].mxu0
      %v6264 = vpop.f32.mrb[0].mxu0
      %v6265 = vadd.f32 %v6104, %v6264
      %v6266 = vpop.f32.mrb[0].mxu0
      %6267 = vmatprep.mubr.bf16.mxu0 %v5054
      %6268 = vmatmul.mubr.bf16.gmra.mrb[0].mxu0 %v5053
      %v6269 = vpop.f32.mrb[0].mxu0
      %v6270 = vadd.f32 %v6109, %v6269
      %v6271 = vpop.f32.mrb[0].mxu0
      %v6272 = vpop.f32.mrb[0].mxu0
      %v6273 = vadd.f32 %v6112, %v6272
      %v6274 = vpop.f32.mrb[0].mxu0
      %6275 = vdwg.mxu0
      %6276 = vmatprep.subr.bf16.mxu0 0
      %6277 = vmatpush1.bf16.msra.mxu0 %v5552
      %6278 = vmatprep.subr.bf16.mxu0 0
      %6279 = vmatpush1.bf16.msra.mxu0 %v5553
      %6280 = vmatprep.subr.bf16.mxu0 0
      %6281 = vmatpush1.bf16.msra.mxu0 %v5554
      %6282 = vmatprep.subr.bf16.mxu0 0
      %6283 = vmatpush1.bf16.msra.mxu0 %v5555
      %6284 = vmatprep.subr.bf16.mxu0 0
      %6285 = vmatpush1.bf16.msra.mxu0 %v5556
      %6286 = vmatprep.subr.bf16.mxu0 0
      %6287 = vmatpush1.bf16.msra.mxu0 %v5557
      %6288 = vmatprep.subr.bf16.mxu0 0
      %6289 = vmatpush1.bf16.msra.mxu0 %v5558
      %6290 = vmatprep.subr.bf16.mxu0 0
      %6291 = vmatpush1.bf16.msra.mxu0 %v5559
      %6292 = vmatprep.subr.bf16.mxu0 0
      %6293 = vmatpush1.bf16.msra.mxu0 0
      %6294 = vmatprep.subr.bf16.mxu0 0
      %6295 = vmatpush1.bf16.msra.mxu0 0
      %6296 = vmatprep.subr.bf16.mxu0 0
      %6297 = vmatpush1.bf16.msra.mxu0 0
      %6298 = vmatprep.subr.bf16.mxu0 0
      %6299 = vmatpush1.bf16.msra.mxu0 0
      %6300 = vmatprep.subr.bf16.mxu0 0
      %6301 = vmatpush1.bf16.msra.mxu0 0
      %6302 = vmatprep.subr.bf16.mxu0 0
      %6303 = vmatpush1.bf16.msra.mxu0 0
      %6304 = vmatprep.subr.bf16.mxu0 0
      %6305 = vmatpush1.bf16.msra.mxu0 0
      %6306 = vmatprep.subr.bf16.mxu0 0
      %6307 = vmatpush1.bf16.msra.mxu0 0
      %6308 = vmatprep.mubr.bf16.mxu0 0
      %6309 = vmatmul.mubr.bf16.gmra.mrb[0].mxu0 %v4920
      %v6310 = vpop.f32.mrb[0].mxu0
      %v6311 = vadd.f32 %v6150, %v6310
      %v6312 = vpop.f32.mrb[0].mxu0
      %v6313 = vpop.f32.mrb[0].mxu0
      %v6314 = vadd.f32 %v6153, %v6313
      %v6315 = vpop.f32.mrb[0].mxu0
      %6316 = vmatprep.mubr.bf16.mxu0 0
      %6317 = vmatmul.mubr.bf16.gmra.mrb[0].mxu0 %v4929
      %v6318 = vpop.f32.mrb[0].mxu0
      %v6319 = vadd.f32 %v6158, %v6318
      %v6320 = vpop.f32.mrb[0].mxu0
      %v6321 = vpop.f32.mrb[0].mxu0
      %v6322 = vadd.f32 %v6161, %v6321
      %v6323 = vpop.f32.mrb[0].mxu0
      %6324 = vmatprep.mubr.bf16.mxu0 0
      %6325 = vmatmul.mubr.bf16.gmra.mrb[0].mxu0 %v4938
      %v6326 = vpop.f32.mrb[0].mxu0
      %v6327 = vadd.f32 %v6166, %v6326
      %v6328 = vpop.f32.mrb[0].mxu0
      %v6329 = vpop.f32.mrb[0].mxu0
      %v6330 = vadd.f32 %v6169, %v6329
      %v6331 = vpop.f32.mrb[0].mxu0
      %6332 = vmatprep.mubr.bf16.mxu0 0
      %6333 = vmatmul.mubr.bf16.gmra.mrb[0].mxu0 %v4947
      %v6334 = vpop.f32.mrb[0].mxu0
      %v6335 = vadd.f32 %v6174, %v6334
      %v6336 = vpop.f32.mrb[0].mxu0
      %v6337 = vpop.f32.mrb[0].mxu0
      %v6338 = vadd.f32 %v6177, %v6337
      %v6339 = vpop.f32.mrb[0].mxu0
      %6340 = vmatprep.mubr.bf16.mxu0 0
      %6341 = vmatmul.mubr.bf16.gmra.mrb[0].mxu0 %v4956
      %v6342 = vpop.f32.mrb[0].mxu0
      %v6343 = vadd.f32 %v6182, %v6342
      %v6344 = vpop.f32.mrb[0].mxu0
      %v6345 = vpop.f32.mrb[0].mxu0
      %v6346 = vadd.f32 %v6185, %v6345
      %v6347 = vpop.f32.mrb[0].mxu0
      %6348 = vmatprep.mubr.bf16.mxu0 0
      %6349 = vmatmul.mubr.bf16.gmra.mrb[0].mxu0 %v4965
      %v6350 = vpop.f32.mrb[0].mxu0
      %v6351 = vadd.f32 %v6190, %v6350
      %v6352 = vpop.f32.mrb[0].mxu0
      %v6353 = vpop.f32.mrb[0].mxu0
      %v6354 = vadd.f32 %v6193, %v6353
      %v6355 = vpop.f32.mrb[0].mxu0
      %6356 = vmatprep.mubr.bf16.mxu0 0
      %6357 = vmatmul.mubr.bf16.gmra.mrb[0].mxu0 %v4974
      %v6358 = vpop.f32.mrb[0].mxu0
      %v6359 = vadd.f32 %v6198, %v6358
      %v6360 = vpop.f32.mrb[0].mxu0
      %v6361 = vpop.f32.mrb[0].mxu0
      %v6362 = vadd.f32 %v6201, %v6361
      %v6363 = vpop.f32.mrb[0].mxu0
      %6364 = vmatprep.mubr.bf16.mxu0 0
      %6365 = vmatmul.mubr.bf16.gmra.mrb[0].mxu0 %v4983
      %v6366 = vpop.f32.mrb[0].mxu0
      %v6367 = vadd.f32 %v6206, %v6366
      %v6368 = vpop.f32.mrb[0].mxu0
      %v6369 = vpop.f32.mrb[0].mxu0
      %v6370 = vadd.f32 %v6209, %v6369
      %v6371 = vpop.f32.mrb[0].mxu0
      %6372 = vmatprep.mubr.bf16.mxu0 0
      %6373 = vmatmul.mubr.bf16.gmra.mrb[0].mxu0 %v4992
      %v6374 = vpop.f32.mrb[0].mxu0
      %v6375 = vadd.f32 %v6214, %v6374
      %v6376 = vpop.f32.mrb[0].mxu0
      %v6377 = vpop.f32.mrb[0].mxu0
      %v6378 = vadd.f32 %v6217, %v6377
      %v6379 = vpop.f32.mrb[0].mxu0
      %6380 = vmatprep.mubr.bf16.mxu0 0
      %6381 = vmatmul.mubr.bf16.gmra.mrb[0].mxu0 %v5001
      %v6382 = vpop.f32.mrb[0].mxu0
      %v6383 = vadd.f32 %v6222, %v6382
      %v6384 = vpop.f32.mrb[0].mxu0
      %v6385 = vpop.f32.mrb[0].mxu0
      %v6386 = vadd.f32 %v6225, %v6385
      %v6387 = vpop.f32.mrb[0].mxu0
      %6388 = vmatprep.mubr.bf16.mxu0 0
      %6389 = vmatmul.mubr.bf16.gmra.mrb[0].mxu0 %v5010
      %v6390 = vpop.f32.mrb[0].mxu0
      %v6391 = vadd.f32 %v6230, %v6390
      %v6392 = vpop.f32.mrb[0].mxu0
      %v6393 = vpop.f32.mrb[0].mxu0
      %v6394 = vadd.f32 %v6233, %v6393
      %v6395 = vpop.f32.mrb[0].mxu0
      %6396 = vmatprep.mubr.bf16.mxu0 0
      %6397 = vmatmul.mubr.bf16.gmra.mrb[0].mxu0 %v5019
      %v6398 = vpop.f32.mrb[0].mxu0
      %v6399 = vadd.f32 %v6238, %v6398
      %v6400 = vpop.f32.mrb[0].mxu0
      %v6401 = vpop.f32.mrb[0].mxu0
      %v6402 = vadd.f32 %v6241, %v6401
      %v6403 = vpop.f32.mrb[0].mxu0
      %6404 = vmatprep.mubr.bf16.mxu0 0
      %6405 = vmatmul.mubr.bf16.gmra.mrb[0].mxu0 %v5028
      %v6406 = vpop.f32.mrb[0].mxu0
      %v6407 = vadd.f32 %v6246, %v6406
      %v6408 = vpop.f32.mrb[0].mxu0
      %v6409 = vpop.f32.mrb[0].mxu0
      %v6410 = vadd.f32 %v6249, %v6409
      %v6411 = vpop.f32.mrb[0].mxu0
      %6412 = vmatprep.mubr.bf16.mxu0 0
      %6413 = vmatmul.mubr.bf16.gmra.mrb[0].mxu0 %v5037
      %v6414 = vpop.f32.mrb[0].mxu0
      %v6415 = vadd.f32 %v6254, %v6414
      %v6416 = vpop.f32.mrb[0].mxu0
      %v6417 = vpop.f32.mrb[0].mxu0
      %v6418 = vadd.f32 %v6257, %v6417
      %v6419 = vpop.f32.mrb[0].mxu0
      %6420 = vmatprep.mubr.bf16.mxu0 0
      %6421 = vmatmul.mubr.bf16.gmra.mrb[0].mxu0 %v5046
      %v6422 = vpop.f32.mrb[0].mxu0
      %v6423 = vadd.f32 %v6262, %v6422
      %v6424 = vpop.f32.mrb[0].mxu0
      %v6425 = vpop.f32.mrb[0].mxu0
      %v6426 = vadd.f32 %v6265, %v6425
      %v6427 = vpop.f32.mrb[0].mxu0
      %6428 = vmatprep.mubr.bf16.mxu0 0
      %6429 = vmatmul.mubr.bf16.gmra.mrb[0].mxu0 %v5055
      %v6430 = vpop.f32.mrb[0].mxu0
      %v6431 = vadd.f32 %v6270, %v6430
      %v6432 = vpop.f32.mrb[0].mxu0
      %v6433 = vpop.f32.mrb[0].mxu0
      %v6434 = vadd.f32 %v6273, %v6433
      %v6435 = vpop.f32.mrb[0].mxu0
      %6436 = vdwg.mxu0
      %v6437 = vld [vmem:[%s5] sm:$0x1]
      %v6439 = vlaneseq
      %v6440 = vshrl.u32 %v6439, 7
      %v6441 = vsub.s32 0, %v6440
      %v6442 = vrot.slane %v6437, %v6441
      %v6444 = vmul.f32 %v6311, %v6442
      %v6445 = vmul.f32 %v6314, %v6442
      %v6446 = vmul.f32 %v6319, %v6442
      %v6447 = vmul.f32 %v6322, %v6442
      %v6448 = vmul.f32 %v6327, %v6442
      %v6449 = vmul.f32 %v6330, %v6442
      %v6450 = vmul.f32 %v6335, %v6442
      %v6451 = vmul.f32 %v6338, %v6442
      %v6452 = vmul.f32 %v6343, %v6442
      %v6453 = vmul.f32 %v6346, %v6442
      %v6454 = vmul.f32 %v6351, %v6442
      %v6455 = vmul.f32 %v6354, %v6442
      %v6456 = vmul.f32 %v6359, %v6442
      %v6457 = vmul.f32 %v6362, %v6442
      %v6458 = vmul.f32 %v6367, %v6442
      %v6459 = vmul.f32 %v6370, %v6442
      %v6460 = vmul.f32 %v6375, %v6442
      %v6461 = vmul.f32 %v6378, %v6442
      %v6462 = vmul.f32 %v6383, %v6442
      %v6463 = vmul.f32 %v6386, %v6442
      %v6464 = vmul.f32 %v6391, %v6442
      %v6465 = vmul.f32 %v6394, %v6442
      %v6466 = vmul.f32 %v6399, %v6442
      %v6467 = vmul.f32 %v6402, %v6442
      %v6468 = vmul.f32 %v6407, %v6442
      %v6469 = vmul.f32 %v6410, %v6442
      %v6470 = vmul.f32 %v6415, %v6442
      %v6471 = vmul.f32 %v6418, %v6442
      %v6472 = vmul.f32 %v6423, %v6442
      %v6473 = vmul.f32 %v6426, %v6442
      %v6474 = vmul.f32 %v6431, %v6442
      %v6475 = vmul.f32 %v6434, %v6442
      %v6476 = vld [vmem:[%s6] sm:$0x1]
      %v6478 = vlaneseq
      %v6479 = vshrl.u32 %v6478, 7
      %v6480 = vsub.s32 0, %v6479
      %v6481 = vrot.slane %v6476, %v6480
      %v6483 = vadd.f32 %v6444, %v6481
      %v6484 = vadd.f32 %v6445, %v6481
      %v6485 = vadd.f32 %v6446, %v6481
      %v6486 = vadd.f32 %v6447, %v6481
      %v6487 = vadd.f32 %v6448, %v6481
      %v6488 = vadd.f32 %v6449, %v6481
      %v6489 = vadd.f32 %v6450, %v6481
      %v6490 = vadd.f32 %v6451, %v6481
      %v6491 = vadd.f32 %v6452, %v6481
      %v6492 = vadd.f32 %v6453, %v6481
      %v6493 = vadd.f32 %v6454, %v6481
      %v6494 = vadd.f32 %v6455, %v6481
      %v6495 = vadd.f32 %v6456, %v6481
      %v6496 = vadd.f32 %v6457, %v6481
      %v6497 = vadd.f32 %v6458, %v6481
      %v6498 = vadd.f32 %v6459, %v6481
      %v6499 = vadd.f32 %v6460, %v6481
      %v6500 = vadd.f32 %v6461, %v6481
      %v6501 = vadd.f32 %v6462, %v6481
      %v6502 = vadd.f32 %v6463, %v6481
      %v6503 = vadd.f32 %v6464, %v6481
      %v6504 = vadd.f32 %v6465, %v6481
      %v6505 = vadd.f32 %v6466, %v6481
      %v6506 = vadd.f32 %v6467, %v6481
      %v6507 = vadd.f32 %v6468, %v6481
      %v6508 = vadd.f32 %v6469, %v6481
      %v6509 = vadd.f32 %v6470, %v6481
      %v6510 = vadd.f32 %v6471, %v6481
      %v6511 = vadd.f32 %v6472, %v6481
      %v6512 = vadd.f32 %v6473, %v6481
      %v6513 = vadd.f32 %v6474, %v6481
      %v6514 = vadd.f32 %v6475, %v6481
      %v6515 = vmax.f32 %v6483, 0.0
      %v6516 = vmax.f32 %v6484, 0.0
      %v6517 = vmax.f32 %v6485, 0.0
      %v6518 = vmax.f32 %v6486, 0.0
      %v6519 = vmax.f32 %v6487, 0.0
      %v6520 = vmax.f32 %v6488, 0.0
      %v6521 = vmax.f32 %v6489, 0.0
      %v6522 = vmax.f32 %v6490, 0.0
      %v6523 = vmax.f32 %v6491, 0.0
      %v6524 = vmax.f32 %v6492, 0.0
      %v6525 = vmax.f32 %v6493, 0.0
      %v6526 = vmax.f32 %v6494, 0.0
      %v6527 = vmax.f32 %v6495, 0.0
      %v6528 = vmax.f32 %v6496, 0.0
      %v6529 = vmax.f32 %v6497, 0.0
      %v6530 = vmax.f32 %v6498, 0.0
      %v6531 = vmax.f32 %v6499, 0.0
      %v6532 = vmax.f32 %v6500, 0.0
      %v6533 = vmax.f32 %v6501, 0.0
      %v6534 = vmax.f32 %v6502, 0.0
      %v6535 = vmax.f32 %v6503, 0.0
      %v6536 = vmax.f32 %v6504, 0.0
      %v6537 = vmax.f32 %v6505, 0.0
      %v6538 = vmax.f32 %v6506, 0.0
      %v6539 = vmax.f32 %v6507, 0.0
      %v6540 = vmax.f32 %v6508, 0.0
      %v6541 = vmax.f32 %v6509, 0.0
      %v6542 = vmax.f32 %v6510, 0.0
      %v6543 = vmax.f32 %v6511, 0.0
      %v6544 = vmax.f32 %v6512, 0.0
      %v6545 = vmax.f32 %v6513, 0.0
      %v6546 = vmax.f32 %v6514, 0.0
      %v6547 = vpack.c.bf16 %v6516, %v6515
      %v6548 = vpack.c.bf16 %v6518, %v6517
      %v6549 = vpack.c.bf16 %v6520, %v6519
      %v6550 = vpack.c.bf16 %v6522, %v6521
      %v6551 = vpack.c.bf16 %v6524, %v6523
      %v6552 = vpack.c.bf16 %v6526, %v6525
      %v6553 = vpack.c.bf16 %v6528, %v6527
      %v6554 = vpack.c.bf16 %v6530, %v6529
      %v6555 = vpack.c.bf16 %v6532, %v6531
      %v6556 = vpack.c.bf16 %v6534, %v6533
      %v6557 = vpack.c.bf16 %v6536, %v6535
      %v6558 = vpack.c.bf16 %v6538, %v6537
      %v6559 = vpack.c.bf16 %v6540, %v6539
      %v6560 = vpack.c.bf16 %v6542, %v6541
      %v6561 = vpack.c.bf16 %v6544, %v6543
      %v6562 = vpack.c.bf16 %v6546, %v6545
      %v6563 = vld [vmem:[%s7] sm:$0xf]
      %v6564 = vld [vmem:[%s7 + $0x4] sm:$0xf]
      %v6565 = vld [vmem:[%s7 + $0x8] sm:$0xf]
      %v6566 = vld [vmem:[%s7 + $0xc] sm:$0xf]
      %v6567 = vld [vmem:[%s7 + $0x10] sm:$0xf]
      %v6568 = vld [vmem:[%s7 + $0x14] sm:$0xf]
      %v6569 = vld [vmem:[%s7 + $0x18] sm:$0xf]
      %v6570 = vld [vmem:[%s7 + $0x1c] sm:$0xf]
      %v6571 = vld [vmem:[%s7 + $0x20] sm:$0xf]
      %v6572 = vld [vmem:[%s7 + $0x24] sm:$0xf]
      %v6573 = vld [vmem:[%s7 + $0x28] sm:$0xf]
      %v6574 = vld [vmem:[%s7 + $0x2c] sm:$0xf]
      %v6575 = vld [vmem:[%s7 + $0x30] sm:$0xf]
      %v6576 = vld [vmem:[%s7 + $0x34] sm:$0xf]
      %v6577 = vld [vmem:[%s7 + $0x38] sm:$0xf]
      %v6578 = vld [vmem:[%s7 + $0x3c] sm:$0xf]
      %v6595 = vunpack.c.l.b16 %v6563
      %v6596 = vunpack.c.l.b16 %v6564
      %v6597 = vunpack.c.l.b16 %v6565
      %v6598 = vunpack.c.l.b16 %v6566
      %v6599 = vunpack.c.l.b16 %v6567
      %v6600 = vunpack.c.l.b16 %v6568
      %v6601 = vunpack.c.l.b16 %v6569
      %v6602 = vunpack.c.l.b16 %v6570
      %v6603 = vunpack.c.l.b16 %v6571
      %v6604 = vunpack.c.l.b16 %v6572
      %v6605 = vunpack.c.l.b16 %v6573
      %v6606 = vunpack.c.l.b16 %v6574
      %v6607 = vunpack.c.l.b16 %v6575
      %v6608 = vunpack.c.l.b16 %v6576
      %v6609 = vunpack.c.l.b16 %v6577
      %v6610 = vunpack.c.l.b16 %v6578
      %v6611 = vpack.c.b16 %v6596, %v6595
      %v6612 = vpack.c.b16 %v6598, %v6597
      %v6613 = vpack.c.b16 %v6600, %v6599
      %v6614 = vpack.c.b16 %v6602, %v6601
      %v6615 = vpack.c.b16 %v6604, %v6603
      %v6616 = vpack.c.b16 %v6606, %v6605
      %v6617 = vpack.c.b16 %v6608, %v6607
      %v6618 = vpack.c.b16 %v6610, %v6609
      %6627 = vmatprep.subr.bf16.mxu0 0
      %6628 = vmatpush1.bf16.msra.mxu0 %v6611
      %6629 = vmatprep.subr.bf16.mxu0 0
      %6630 = vmatpush1.bf16.msra.mxu0 %v6612
      %6631 = vmatprep.subr.bf16.mxu0 0
      %6632 = vmatpush1.bf16.msra.mxu0 %v6613
      %6633 = vmatprep.subr.bf16.mxu0 0
      %6634 = vmatpush1.bf16.msra.mxu0 %v6614
      %6635 = vmatprep.subr.bf16.mxu0 0
      %6636 = vmatpush1.bf16.msra.mxu0 %v6615
      %6637 = vmatprep.subr.bf16.mxu0 0
      %6638 = vmatpush1.bf16.msra.mxu0 %v6616
      %6639 = vmatprep.subr.bf16.mxu0 0
      %6640 = vmatpush1.bf16.msra.mxu0 %v6617
      %6641 = vmatprep.subr.bf16.mxu0 0
      %6642 = vmatpush1.bf16.msra.mxu0 %v6618
      %6643 = vmatprep.subr.bf16.mxu0 0
      %6644 = vmatpush1.bf16.msra.mxu0 0
      %6645 = vmatprep.subr.bf16.mxu0 0
      %6646 = vmatpush1.bf16.msra.mxu0 0
      %6647 = vmatprep.subr.bf16.mxu0 0
      %6648 = vmatpush1.bf16.msra.mxu0 0
      %6649 = vmatprep.subr.bf16.mxu0 0
      %6650 = vmatpush1.bf16.msra.mxu0 0
      %6651 = vmatprep.subr.bf16.mxu0 0
      %6652 = vmatpush1.bf16.msra.mxu0 0
      %6653 = vmatprep.subr.bf16.mxu0 0
      %6654 = vmatpush1.bf16.msra.mxu0 0
      %6655 = vmatprep.subr.bf16.mxu0 0
      %6656 = vmatpush1.bf16.msra.mxu0 0
      %6657 = vmatprep.subr.bf16.mxu0 0
      %6658 = vmatpush1.bf16.msra.mxu0 0
      %6659 = vmatprep.mubr.bf16.mxu0 0
      %6660 = vmatmul.mubr.bf16.gmra.mrb[0].mxu0 %v6547
      %v6661 = vpop.f32.mrb[0].mxu0
      %v6662 = vadd.f32 0.0, %v6661
      %v6663 = vpop.f32.mrb[0].mxu0
      %v6664 = vpop.f32.mrb[0].mxu0
      %v6665 = vadd.f32 0.0, %v6664
      %v6666 = vpop.f32.mrb[0].mxu0
      %6667 = vmatprep.mubr.bf16.mxu0 0
      %6668 = vmatmul.mubr.bf16.gmra.mrb[0].mxu0 %v6548
      %v6669 = vpop.f32.mrb[0].mxu0
      %v6670 = vadd.f32 0.0, %v6669
      %v6671 = vpop.f32.mrb[0].mxu0
      %v6672 = vpop.f32.mrb[0].mxu0
      %v6673 = vadd.f32 0.0, %v6672
      %v6674 = vpop.f32.mrb[0].mxu0
      %6675 = vmatprep.mubr.bf16.mxu0 0
      %6676 = vmatmul.mubr.bf16.gmra.mrb[0].mxu0 %v6549
      %v6677 = vpop.f32.mrb[0].mxu0
      %v6678 = vadd.f32 0.0, %v6677
      %v6679 = vpop.f32.mrb[0].mxu0
      %v6680 = vpop.f32.mrb[0].mxu0
      %v6681 = vadd.f32 0.0, %v6680
      %v6682 = vpop.f32.mrb[0].mxu0
      %6683 = vmatprep.mubr.bf16.mxu0 0
      %6684 = vmatmul.mubr.bf16.gmra.mrb[0].mxu0 %v6550
      %v6685 = vpop.f32.mrb[0].mxu0
      %v6686 = vadd.f32 0.0, %v6685
      %v6687 = vpop.f32.mrb[0].mxu0
      %v6688 = vpop.f32.mrb[0].mxu0
      %v6689 = vadd.f32 0.0, %v6688
      %v6690 = vpop.f32.mrb[0].mxu0
      %6691 = vmatprep.mubr.bf16.mxu0 0
      %6692 = vmatmul.mubr.bf16.gmra.mrb[0].mxu0 %v6551
      %v6693 = vpop.f32.mrb[0].mxu0
      %v6694 = vadd.f32 0.0, %v6693
      %v6695 = vpop.f32.mrb[0].mxu0
      %v6696 = vpop.f32.mrb[0].mxu0
      %v6697 = vadd.f32 0.0, %v6696
      %v6698 = vpop.f32.mrb[0].mxu0
      %6699 = vmatprep.mubr.bf16.mxu0 0
      %6700 = vmatmul.mubr.bf16.gmra.mrb[0].mxu0 %v6552
      %v6701 = vpop.f32.mrb[0].mxu0
      %v6702 = vadd.f32 0.0, %v6701
      %v6703 = vpop.f32.mrb[0].mxu0
      %v6704 = vpop.f32.mrb[0].mxu0
      %v6705 = vadd.f32 0.0, %v6704
      %v6706 = vpop.f32.mrb[0].mxu0
      %6707 = vmatprep.mubr.bf16.mxu0 0
      %6708 = vmatmul.mubr.bf16.gmra.mrb[0].mxu0 %v6553
      %v6709 = vpop.f32.mrb[0].mxu0
      %v6710 = vadd.f32 0.0, %v6709
      %v6711 = vpop.f32.mrb[0].mxu0
      %v6712 = vpop.f32.mrb[0].mxu0
      %v6713 = vadd.f32 0.0, %v6712
      %v6714 = vpop.f32.mrb[0].mxu0
      %6715 = vmatprep.mubr.bf16.mxu0 0
      %6716 = vmatmul.mubr.bf16.gmra.mrb[0].mxu0 %v6554
      %v6717 = vpop.f32.mrb[0].mxu0
      %v6718 = vadd.f32 0.0, %v6717
      %v6719 = vpop.f32.mrb[0].mxu0
      %v6720 = vpop.f32.mrb[0].mxu0
      %v6721 = vadd.f32 0.0, %v6720
      %v6722 = vpop.f32.mrb[0].mxu0
      %6723 = vmatprep.mubr.bf16.mxu0 0
      %6724 = vmatmul.mubr.bf16.gmra.mrb[0].mxu0 %v6555
      %v6725 = vpop.f32.mrb[0].mxu0
      %v6726 = vadd.f32 0.0, %v6725
      %v6727 = vpop.f32.mrb[0].mxu0
      %v6728 = vpop.f32.mrb[0].mxu0
      %v6729 = vadd.f32 0.0, %v6728
      %v6730 = vpop.f32.mrb[0].mxu0
      %6731 = vmatprep.mubr.bf16.mxu0 0
      %6732 = vmatmul.mubr.bf16.gmra.mrb[0].mxu0 %v6556
      %v6733 = vpop.f32.mrb[0].mxu0
      %v6734 = vadd.f32 0.0, %v6733
      %v6735 = vpop.f32.mrb[0].mxu0
      %v6736 = vpop.f32.mrb[0].mxu0
      %v6737 = vadd.f32 0.0, %v6736
      %v6738 = vpop.f32.mrb[0].mxu0
      %6739 = vmatprep.mubr.bf16.mxu0 0
      %6740 = vmatmul.mubr.bf16.gmra.mrb[0].mxu0 %v6557
      %v6741 = vpop.f32.mrb[0].mxu0
      %v6742 = vadd.f32 0.0, %v6741
      %v6743 = vpop.f32.mrb[0].mxu0
      %v6744 = vpop.f32.mrb[0].mxu0
      %v6745 = vadd.f32 0.0, %v6744
      %v6746 = vpop.f32.mrb[0].mxu0
      %6747 = vmatprep.mubr.bf16.mxu0 0
      %6748 = vmatmul.mubr.bf16.gmra.mrb[0].mxu0 %v6558
      %v6749 = vpop.f32.mrb[0].mxu0
      %v6750 = vadd.f32 0.0, %v6749
      %v6751 = vpop.f32.mrb[0].mxu0
      %v6752 = vpop.f32.mrb[0].mxu0
      %v6753 = vadd.f32 0.0, %v6752
      %v6754 = vpop.f32.mrb[0].mxu0
      %6755 = vmatprep.mubr.bf16.mxu0 0
      %6756 = vmatmul.mubr.bf16.gmra.mrb[0].mxu0 %v6559
      %v6757 = vpop.f32.mrb[0].mxu0
      %v6758 = vadd.f32 0.0, %v6757
      %v6759 = vpop.f32.mrb[0].mxu0
      %v6760 = vpop.f32.mrb[0].mxu0
      %v6761 = vadd.f32 0.0, %v6760
      %v6762 = vpop.f32.mrb[0].mxu0
      %6763 = vmatprep.mubr.bf16.mxu0 0
      %6764 = vmatmul.mubr.bf16.gmra.mrb[0].mxu0 %v6560
      %v6765 = vpop.f32.mrb[0].mxu0
      %v6766 = vadd.f32 0.0, %v6765
      %v6767 = vpop.f32.mrb[0].mxu0
      %v6768 = vpop.f32.mrb[0].mxu0
      %v6769 = vadd.f32 0.0, %v6768
      %v6770 = vpop.f32.mrb[0].mxu0
      %6771 = vmatprep.mubr.bf16.mxu0 0
      %6772 = vmatmul.mubr.bf16.gmra.mrb[0].mxu0 %v6561
      %v6773 = vpop.f32.mrb[0].mxu0
      %v6774 = vadd.f32 0.0, %v6773
      %v6775 = vpop.f32.mrb[0].mxu0
      %v6776 = vpop.f32.mrb[0].mxu0
      %v6777 = vadd.f32 0.0, %v6776
      %v6778 = vpop.f32.mrb[0].mxu0
      %6779 = vmatprep.mubr.bf16.mxu0 0
      %6780 = vmatmul.mubr.bf16.gmra.mrb[0].mxu0 %v6562
      %v6781 = vpop.f32.mrb[0].mxu0
      %v6782 = vadd.f32 0.0, %v6781
      %v6783 = vpop.f32.mrb[0].mxu0
      %v6784 = vpop.f32.mrb[0].mxu0
      %v6785 = vadd.f32 0.0, %v6784
      %v6786 = vpop.f32.mrb[0].mxu0
      %6787 = vdwg.mxu0
      %v6788 = vld [vmem:[%s8] sm:$0x1]
      %v6790 = vlaneseq
      %v6791 = vshrl.u32 %v6790, 7
      %v6792 = vsub.s32 0, %v6791
      %v6793 = vrot.slane %v6788, %v6792
      %v6795 = vmul.f32 %v6662, %v6793
      %v6796 = vmul.f32 %v6665, %v6793
      %v6797 = vmul.f32 %v6670, %v6793
      %v6798 = vmul.f32 %v6673, %v6793
      %v6799 = vmul.f32 %v6678, %v6793
      %v6800 = vmul.f32 %v6681, %v6793
      %v6801 = vmul.f32 %v6686, %v6793
      %v6802 = vmul.f32 %v6689, %v6793
      %v6803 = vmul.f32 %v6694, %v6793
      %v6804 = vmul.f32 %v6697, %v6793
      %v6805 = vmul.f32 %v6702, %v6793
      %v6806 = vmul.f32 %v6705, %v6793
      %v6807 = vmul.f32 %v6710, %v6793
      %v6808 = vmul.f32 %v6713, %v6793
      %v6809 = vmul.f32 %v6718, %v6793
      %v6810 = vmul.f32 %v6721, %v6793
      %v6811 = vmul.f32 %v6726, %v6793
      %v6812 = vmul.f32 %v6729, %v6793
      %v6813 = vmul.f32 %v6734, %v6793
      %v6814 = vmul.f32 %v6737, %v6793
      %v6815 = vmul.f32 %v6742, %v6793
      %v6816 = vmul.f32 %v6745, %v6793
      %v6817 = vmul.f32 %v6750, %v6793
      %v6818 = vmul.f32 %v6753, %v6793
      %v6819 = vmul.f32 %v6758, %v6793
      %v6820 = vmul.f32 %v6761, %v6793
      %v6821 = vmul.f32 %v6766, %v6793
      %v6822 = vmul.f32 %v6769, %v6793
      %v6823 = vmul.f32 %v6774, %v6793
      %v6824 = vmul.f32 %v6777, %v6793
      %v6825 = vmul.f32 %v6782, %v6793
      %v6826 = vmul.f32 %v6785, %v6793
      %v6827 = vld [vmem:[%s9] sm:$0x1]
      %v6829 = vlaneseq
      %v6830 = vshrl.u32 %v6829, 7
      %v6831 = vsub.s32 0, %v6830
      %v6832 = vrot.slane %v6827, %v6831
      %v6834 = vadd.f32 %v6795, %v6832
      %v6835 = vadd.f32 %v6796, %v6832
      %v6836 = vadd.f32 %v6797, %v6832
      %v6837 = vadd.f32 %v6798, %v6832
      %v6838 = vadd.f32 %v6799, %v6832
      %v6839 = vadd.f32 %v6800, %v6832
      %v6840 = vadd.f32 %v6801, %v6832
      %v6841 = vadd.f32 %v6802, %v6832
      %v6842 = vadd.f32 %v6803, %v6832
      %v6843 = vadd.f32 %v6804, %v6832
      %v6844 = vadd.f32 %v6805, %v6832
      %v6845 = vadd.f32 %v6806, %v6832
      %v6846 = vadd.f32 %v6807, %v6832
      %v6847 = vadd.f32 %v6808, %v6832
      %v6848 = vadd.f32 %v6809, %v6832
      %v6849 = vadd.f32 %v6810, %v6832
      %v6850 = vadd.f32 %v6811, %v6832
      %v6851 = vadd.f32 %v6812, %v6832
      %v6852 = vadd.f32 %v6813, %v6832
      %v6853 = vadd.f32 %v6814, %v6832
      %v6854 = vadd.f32 %v6815, %v6832
      %v6855 = vadd.f32 %v6816, %v6832
      %v6856 = vadd.f32 %v6817, %v6832
      %v6857 = vadd.f32 %v6818, %v6832
      %v6858 = vadd.f32 %v6819, %v6832
      %v6859 = vadd.f32 %v6820, %v6832
      %v6860 = vadd.f32 %v6821, %v6832
      %v6861 = vadd.f32 %v6822, %v6832
      %v6862 = vadd.f32 %v6823, %v6832
      %v6863 = vadd.f32 %v6824, %v6832
      %v6864 = vadd.f32 %v6825, %v6832
      %v6865 = vadd.f32 %v6826, %v6832
      %v6866 = vunpack.c.l.bf16 %v369
      %v6867 = vunpack.c.l.bf16 %v370
      %v6868 = vunpack.c.l.bf16 %v371
      %v6869 = vunpack.c.l.bf16 %v372
      %v6870 = vunpack.c.l.bf16 %v373
      %v6871 = vunpack.c.l.bf16 %v374
      %v6872 = vunpack.c.l.bf16 %v375
      %v6873 = vunpack.c.l.bf16 %v376
      %v6874 = vunpack.c.l.bf16 %v377
      %v6875 = vunpack.c.l.bf16 %v378
      %v6876 = vunpack.c.l.bf16 %v379
      %v6877 = vunpack.c.l.bf16 %v380
      %v6878 = vunpack.c.l.bf16 %v381
      %v6879 = vunpack.c.l.bf16 %v382
      %v6880 = vunpack.c.l.bf16 %v383
      %v6881 = vunpack.c.l.bf16 %v384
      %v6882 = vunpack.c.l.bf16 %v385
      %v6883 = vunpack.c.l.bf16 %v386
      %v6884 = vunpack.c.l.bf16 %v387
      %v6885 = vunpack.c.l.bf16 %v388
      %v6886 = vunpack.c.l.bf16 %v389
      %v6887 = vunpack.c.l.bf16 %v390
      %v6888 = vunpack.c.l.bf16 %v391
      %v6889 = vunpack.c.l.bf16 %v392
      %v6890 = vunpack.c.l.bf16 %v393
      %v6891 = vunpack.c.l.bf16 %v394
      %v6892 = vunpack.c.l.bf16 %v395
      %v6893 = vunpack.c.l.bf16 %v396
      %v6894 = vunpack.c.l.bf16 %v397
      %v6895 = vunpack.c.l.bf16 %v398
      %v6896 = vunpack.c.l.bf16 %v399
      %v6897 = vunpack.c.l.bf16 %v400
      %v6898 = vadd.f32 %v6834, %v6866
      %v6899 = vadd.f32 %v6835, %v6867
      %v6900 = vadd.f32 %v6836, %v6868
      %v6901 = vadd.f32 %v6837, %v6869
      %v6902 = vadd.f32 %v6838, %v6870
      %v6903 = vadd.f32 %v6839, %v6871
      %v6904 = vadd.f32 %v6840, %v6872
      %v6905 = vadd.f32 %v6841, %v6873
      %v6906 = vadd.f32 %v6842, %v6874
      %v6907 = vadd.f32 %v6843, %v6875
      %v6908 = vadd.f32 %v6844, %v6876
      %v6909 = vadd.f32 %v6845, %v6877
      %v6910 = vadd.f32 %v6846, %v6878
      %v6911 = vadd.f32 %v6847, %v6879
      %v6912 = vadd.f32 %v6848, %v6880
      %v6913 = vadd.f32 %v6849, %v6881
      %v6914 = vadd.f32 %v6850, %v6882
      %v6915 = vadd.f32 %v6851, %v6883
      %v6916 = vadd.f32 %v6852, %v6884
      %v6917 = vadd.f32 %v6853, %v6885
      %v6918 = vadd.f32 %v6854, %v6886
      %v6919 = vadd.f32 %v6855, %v6887
      %v6920 = vadd.f32 %v6856, %v6888
      %v6921 = vadd.f32 %v6857, %v6889
      %v6922 = vadd.f32 %v6858, %v6890
      %v6923 = vadd.f32 %v6859, %v6891
      %v6924 = vadd.f32 %v6860, %v6892
      %v6925 = vadd.f32 %v6861, %v6893
      %v6926 = vadd.f32 %v6862, %v6894
      %v6927 = vadd.f32 %v6863, %v6895
      %v6928 = vadd.f32 %v6864, %v6896
      %v6929 = vadd.f32 %v6865, %v6897
      %v6930 = vmax.f32 %v6898, 0.0
      %v6931 = vmax.f32 %v6899, 0.0
      %v6932 = vmax.f32 %v6900, 0.0
      %v6933 = vmax.f32 %v6901, 0.0
      %v6934 = vmax.f32 %v6902, 0.0
      %v6935 = vmax.f32 %v6903, 0.0
      %v6936 = vmax.f32 %v6904, 0.0
      %v6937 = vmax.f32 %v6905, 0.0
      %v6938 = vmax.f32 %v6906, 0.0
      %v6939 = vmax.f32 %v6907, 0.0
      %v6940 = vmax.f32 %v6908, 0.0
      %v6941 = vmax.f32 %v6909, 0.0
      %v6942 = vmax.f32 %v6910, 0.0
      %v6943 = vmax.f32 %v6911, 0.0
      %v6944 = vmax.f32 %v6912, 0.0
      %v6945 = vmax.f32 %v6913, 0.0
      %v6946 = vmax.f32 %v6914, 0.0
      %v6947 = vmax.f32 %v6915, 0.0
      %v6948 = vmax.f32 %v6916, 0.0
      %v6949 = vmax.f32 %v6917, 0.0
      %v6950 = vmax.f32 %v6918, 0.0
      %v6951 = vmax.f32 %v6919, 0.0
      %v6952 = vmax.f32 %v6920, 0.0
      %v6953 = vmax.f32 %v6921, 0.0
      %v6954 = vmax.f32 %v6922, 0.0
      %v6955 = vmax.f32 %v6923, 0.0
      %v6956 = vmax.f32 %v6924, 0.0
      %v6957 = vmax.f32 %v6925, 0.0
      %v6958 = vmax.f32 %v6926, 0.0
      %v6959 = vmax.f32 %v6927, 0.0
      %v6960 = vmax.f32 %v6928, 0.0
      %v6961 = vmax.f32 %v6929, 0.0
      %v6962 = vpack.c.bf16 %v6930, %v6930
      %v6963 = vpack.c.bf16 %v6931, %v6931
      %v6964 = vpack.c.bf16 %v6932, %v6932
      %v6965 = vpack.c.bf16 %v6933, %v6933
      %v6966 = vpack.c.bf16 %v6934, %v6934
      %v6967 = vpack.c.bf16 %v6935, %v6935
      %v6968 = vpack.c.bf16 %v6936, %v6936
      %v6969 = vpack.c.bf16 %v6937, %v6937
      %v6970 = vpack.c.bf16 %v6938, %v6938
      %v6971 = vpack.c.bf16 %v6939, %v6939
      %v6972 = vpack.c.bf16 %v6940, %v6940
      %v6973 = vpack.c.bf16 %v6941, %v6941
      %v6974 = vpack.c.bf16 %v6942, %v6942
      %v6975 = vpack.c.bf16 %v6943, %v6943
      %v6976 = vpack.c.bf16 %v6944, %v6944
      %v6977 = vpack.c.bf16 %v6945, %v6945
      %v6978 = vpack.c.bf16 %v6946, %v6946
      %v6979 = vpack.c.bf16 %v6947, %v6947
      %v6980 = vpack.c.bf16 %v6948, %v6948
      %v6981 = vpack.c.bf16 %v6949, %v6949
      %v6982 = vpack.c.bf16 %v6950, %v6950
      %v6983 = vpack.c.bf16 %v6951, %v6951
      %v6984 = vpack.c.bf16 %v6952, %v6952
      %v6985 = vpack.c.bf16 %v6953, %v6953
      %v6986 = vpack.c.bf16 %v6954, %v6954
      %v6987 = vpack.c.bf16 %v6955, %v6955
      %v6988 = vpack.c.bf16 %v6956, %v6956
      %v6989 = vpack.c.bf16 %v6957, %v6957
      %v6990 = vpack.c.bf16 %v6958, %v6958
      %v6991 = vpack.c.bf16 %v6959, %v6959
      %v6992 = vpack.c.bf16 %v6960, %v6960
      %v6993 = vpack.c.bf16 %v6961, %v6961
      %6994 = vst [vmem:[%s366] sm:$0xf] %v6962
      %6995 = vst [vmem:[%s366 + $0x4] sm:$0xf] %v6963
      %6996 = vst [vmem:[%s366 + $0x8] sm:$0xf] %v6964
      %6997 = vst [vmem:[%s366 + $0xc] sm:$0xf] %v6965
      %6998 = vst [vmem:[%s366 + $0x10] sm:$0xf] %v6966
      %6999 = vst [vmem:[%s366 + $0x14] sm:$0xf] %v6967
      %7000 = vst [vmem:[%s366 + $0x18] sm:$0xf] %v6968
      %7001 = vst [vmem:[%s366 + $0x1c] sm:$0xf] %v6969
      %7002 = vst [vmem:[%s366 + $0x20] sm:$0xf] %v6970
      %7003 = vst [vmem:[%s366 + $0x24] sm:$0xf] %v6971
      %7004 = vst [vmem:[%s366 + $0x28] sm:$0xf] %v6972
      %7005 = vst [vmem:[%s366 + $0x2c] sm:$0xf] %v6973
      %7006 = vst [vmem:[%s366 + $0x30] sm:$0xf] %v6974
      %7007 = vst [vmem:[%s366 + $0x34] sm:$0xf] %v6975
      %7008 = vst [vmem:[%s366 + $0x38] sm:$0xf] %v6976
      %7009 = vst [vmem:[%s366 + $0x3c] sm:$0xf] %v6977
      %7010 = vst [vmem:[%s366 + $0x40] sm:$0xf] %v6978
      %7011 = vst [vmem:[%s366 + $0x44] sm:$0xf] %v6979
      %7012 = vst [vmem:[%s366 + $0x48] sm:$0xf] %v6980
      %7013 = vst [vmem:[%s366 + $0x4c] sm:$0xf] %v6981
      %7014 = vst [vmem:[%s366 + $0x50] sm:$0xf] %v6982
      %7015 = vst [vmem:[%s366 + $0x54] sm:$0xf] %v6983
      %7016 = vst [vmem:[%s366 + $0x58] sm:$0xf] %v6984
      %7017 = vst [vmem:[%s366 + $0x5c] sm:$0xf] %v6985
      %7018 = vst [vmem:[%s366 + $0x60] sm:$0xf] %v6986
      %7019 = vst [vmem:[%s366 + $0x64] sm:$0xf] %v6987
      %7020 = vst [vmem:[%s366 + $0x68] sm:$0xf] %v6988
      %7021 = vst [vmem:[%s366 + $0x6c] sm:$0xf] %v6989
      %7022 = vst [vmem:[%s366 + $0x70] sm:$0xf] %v6990
      %7023 = vst [vmem:[%s366 + $0x74] sm:$0xf] %v6991
      %7024 = vst [vmem:[%s366 + $0x78] sm:$0xf] %v6992
      %7025 = vst [vmem:[%s366 + $0x7c] sm:$0xf] %v6993
      %s7026 = smul.u32 4, %s21
      %p7027 = scmp.lt.s32.totalorder %s7026, 7
      %s7028 = scalar_select %p7027, %s7026, 7
      %s7029 = smul.addr %s7028, 8
      %s7030 = smul.addr %s7029, 4
      %s7031 = scalar_lea.vmem %s10, %s7030
      // Predicated region
      $region61: #{bottleneck_forward.1} parent=59 // pred_check
        %p7032 = pneg %p254
      $region62: #{bottleneck_forward.1} parent=59 // pred_check_branch
        %7034 = sbr.rel (%p7032) target = $region64
      $region63: #{bottleneck_forward.1} parent=59 // pred_region
        %s7035 = smul.u32 4, %s21
      $region64: #{bottleneck_forward.1} parent=59 // pred_fallthru
        _
    $region60: #{bottleneck_forward.1} parent=5 // pred_fallthru
      _
    %p7036 = scmp.le.s32.totalorder 2, %s16
    // Predicated region
    $region65: #{bottleneck_forward.1} parent=5 // pred_check
      %p7037 = pneg %p7036
    $region66: #{bottleneck_forward.1} parent=5 // pred_check_branch
      %7039 = sbr.rel (%p7037) target = $region68
    $region67: #{bottleneck_forward.1} parent=5 // pred_region
      %s7040 = ssub.s32 %s16, 2
      // Predicated region
      $region69: #{bottleneck_forward.1} parent=67 // pred_check
        %p7041 = pneg %p260
      $region70: #{bottleneck_forward.1} parent=67 // pred_check_branch
        %7043 = sbr.rel (%p7041) target = $region72
      $region71: #{bottleneck_forward.1} parent=67 // pred_region
        %s7044 = smul.u32 4, %s22
        %p7045 = scmp.lt.s32.totalorder %s7044, 7
        %s7046 = scalar_select %p7045, %s7044, 7
        %s7047 = smul.addr %s7046, 8
        %s7048 = smul.addr %s7047, 4
        %s7049 = scalar_lea.vmem %s10, %s7048
      $region72: #{bottleneck_forward.1} parent=67 // pred_fallthru
        _
    $region68: #{bottleneck_forward.1} parent=5 // pred_fallthru
      _
  $region6: #{bottleneck_forward.1} parent=0 // loop_footer
    %s20 = sadd.s32 1, %s16
  $region7: #{bottleneck_forward.1} parent=0 // loop_footer_branch
    %15 = sbr.rel target = $region3
  $region8: #{bottleneck_forward.1} parent=0 // loop_exit
    _

</llo_original>
